<compile_context>
chip_gen: v5e
topology: v5e:2x2
jax: 0.10.0
libtpu: 0.0.40
codegen_flags: <defaults>
</compile_context>

<pallas_src>
import jax
import jax.numpy as jnp
from jax import lax
from jax.experimental import pallas as pl
from jax.experimental.pallas import tpu as pltpu

EPS = 1e-5
HIDDEN = 256                      # real CPC hidden size (also lane-dense: 2 x 128)
KERNELS = (10, 8, 4, 4, 4)        # CPC gEncoder conv kernel sizes
STRIDES = (5, 4, 2, 2, 2)         # total downsampling = 160
PADS = (3, 2, 1, 1, 1)
DOWNSAMPLING = 160

MXU_DTYPE = jnp.bfloat16          # matmul-operand storage dtype (conv weights)
ACT_DTYPE = jnp.bfloat16          # inter-layer activation storage dtype


def _pick_time_tile(t_out, max_tile=512):
    """Largest tile <= max_tile that divides t_out and keeps sublane alignment.
    A full-extent block is always legal, so small layers simply use t_out."""
    if t_out <= max_tile:
        return t_out
    for cand in range(max_tile - max_tile % 8, 7, -8):
        if t_out % cand == 0:
            return cand
    return t_out  # fallback: single full-extent block


# --------------------------------------------------------------------------
# Pallas kernel 1: fused conv (two shifted matmuls) + bias + ChannelNorm + ReLU
# --------------------------------------------------------------------------
def _half_matmul(x, w):
    """(T, D) @ (D, C) -> f32 (T, C).  Degenerate contractions (layer 1, D = 5)
    run on the VPU as D broadcast-MACs instead of wasting an MXU pass."""
    d = x.shape[1]
    if d <= 8:
        xf = x.astype(jnp.float32)
        wf = w.astype(jnp.float32)
        acc = xf[:, 0:1] * wf[0:1, :]
        for k in range(1, d):
            acc = acc + xf[:, k:k + 1] * wf[k:k + 1, :]
        return acc
    return jnp.dot(x, w, preferred_element_type=jnp.float32)


def _conv_norm_relu_kernel(ga_ref, gb_ref, wa_ref, wb_ref, b_ref,
                           gamma_ref, beta_ref, out_ref):
    # ga/gb: (1, T_TILE, stride*Cin)   wa/wb: (stride*Cin, Cout)
    # b/gamma/beta: (1, Cout)          out: (1, T_TILE, Cout)
    xa = ga_ref[0]                                   # (T_TILE, D)
    xb = gb_ref[0]
    y = _half_matmul(xa, wa_ref[...]) + _half_matmul(xb, wb_ref[...]) + b_ref[...]
    # CPC ChannelNorm: mean/var over channels per (batch, time) row; torch.var is
    # unbiased by default -> divide by (C - 1).
    c = y.shape[1]
    mean = jnp.mean(y, axis=1, keepdims=True)
    var = jnp.sum((y - mean) ** 2, axis=1, keepdims=True) / (c - 1)
    y = (y - mean) * lax.rsqrt(var + EPS)
    y = y * gamma_ref[...] + beta_ref[...]
    out_ref[0] = jnp.maximum(y, 0.0).astype(out_ref.dtype)


def conv_norm_relu(ga, gb, wa, wb, bias, gamma, beta):
    b, t_out, d = ga.shape
    c_out = wa.shape[1]
    t_tile = _pick_time_tile(t_out)
    grid = (b, t_out // t_tile)
    data_map = lambda bi, ti: (bi, ti, 0)
    rep_map = lambda bi, ti: (0, 0)                  # weights stay resident in VMEM
    return pl.pallas_call(
        _conv_norm_relu_kernel,
        out_shape=jax.ShapeDtypeStruct((b, t_out, c_out), ACT_DTYPE),
        grid=grid,
        in_specs=[
            pl.BlockSpec((1, t_tile, d), data_map),
            pl.BlockSpec((1, t_tile, d), data_map),
            pl.BlockSpec((d, c_out), rep_map),
            pl.BlockSpec((d, c_out), rep_map),
            pl.BlockSpec((1, c_out), rep_map),
            pl.BlockSpec((1, c_out), rep_map),
            pl.BlockSpec((1, c_out), rep_map),
        ],
        out_specs=pl.BlockSpec((1, t_tile, c_out), data_map),
        compiler_params=pltpu.CompilerParams(
            dimension_semantics=("parallel", "parallel")),
    )(ga, gb, wa, wb, bias, gamma, beta)


def conv_layer_forward(x, layer, kernel, stride, pad):
    """One CPC encoder layer, channels-last (B, T, Cin) -> (B, T_out, Cout).

    Because K == 2*stride for every CPC layer, the conv is exactly
        y[t] = g[t] @ Wa + g[t+1] @ Wb + bias
    where g is the non-overlapping reshape of the padded input into groups of
    `stride` frames — no K-fold im2col materialization in HBM."""
    b, t, c_in = x.shape
    assert kernel == 2 * stride, "CPC encoder layers all satisfy K == 2*stride"
    t_pad = t + 2 * pad
    q = t_pad // stride                              # stride-groups actually used
    t_out = (t_pad - kernel) // stride + 1           # == q - 1 (or less)
    xp = jnp.pad(x, ((0, 0), (pad, pad), (0, 0)))
    g = xp[:, :q * stride, :].reshape(b, q, stride * c_in)
    g = g.astype(layer["wa"].dtype)
    ga = g[:, :t_out, :]                             # frames [t*s,   t*s+s)
    gb = g[:, 1:t_out + 1, :]                        # frames [t*s+s, t*s+2s)
    return conv_norm_relu(ga, gb, layer["wa"], layer["wb"],
                          layer["b"], layer["gamma"], layer["beta"])


# --------------------------------------------------------------------------
# Pallas kernel 2: single-layer GRU (PyTorch gate order [r, z, n])
# --------------------------------------------------------------------------
def _gru_kernel(x_ref, wih_ref, whh_ref, bih_ref, bhh_ref, out_ref, gi_ref, h_ref):
    # x: (S, Bp, H)   wih/whh: (H, 3H)   bih/bhh: (1, 3H)   out: (S, Bp, H)
    s, bp, hd = x_ref.shape
    # Hoisted input-to-hidden projection: one (S*Bp, H)@(H, 3H) MXU pass instead of
    # S tiny matmuls inside the serial recurrence.
    x_flat = x_ref[...].reshape(s * bp, hd)
    gi = jnp.dot(x_flat, wih_ref[...],
                 preferred_element_type=jnp.float32) + bih_ref[...]
    gi_ref[...] = gi.reshape(s, bp, 3 * hd)
    h_ref[...] = jnp.zeros((bp, hd), jnp.float32)

    def step(t, carry):
        h_prev = h_ref[...]
        gi_t = gi_ref[t]                                          # (Bp, 3H)
        gh = jnp.dot(h_prev, whh_ref[...],
                     preferred_element_type=jnp.float32) + bhh_ref[...]
        # H = 256 -> gate slices are 128-lane aligned (no masked lane selects).
        r = jax.nn.sigmoid(gi_t[:, :hd] + gh[:, :hd])
        z = jax.nn.sigmoid(gi_t[:, hd:2 * hd] + gh[:, hd:2 * hd])
        n = jnp.tanh(gi_t[:, 2 * hd:] + r * gh[:, 2 * hd:])
        h_new = (1.0 - z) * n + z * h_prev
        h_ref[...] = h_new
        out_ref[t] = h_new.astype(out_ref.dtype)                  # full (8, 256) tile
        return carry

    # Short fixed trip-count -> unroll for LLO scheduler visibility; cap the unroll
    # factor so long sequences don't blow up code size.
    lax.fori_loop(0, s, step, 0, unroll=True if s <= 64 else 8)


def gru_forward(x_bsh, wih, whh, bih, bhh):
    b, s, hd = x_bsh.shape
    bp = ((b + 7) // 8) * 8                           # pad batch to full sublanes
    x_sbh = jnp.transpose(x_bsh, (1, 0, 2))           # time-major (S, B, H)
    if bp != b:
        x_sbh = jnp.pad(x_sbh, ((0, 0), (0, bp - b), (0, 0)))
    out = pl.pallas_call(
        _gru_kernel,
        out_shape=jax.ShapeDtypeStruct((s, bp, hd), jnp.float32),
        in_specs=[pl.BlockSpec(memory_space=pltpu.MemorySpace.VMEM)] * 5,
        out_specs=pl.BlockSpec(memory_space=pltpu.MemorySpace.VMEM),
        scratch_shapes=[pltpu.VMEM((s, bp, 3 * hd), jnp.float32),
                        pltpu.VMEM((bp, hd), jnp.float32)],
        compiler_params=pltpu.CompilerParams(vmem_limit_bytes=64 << 20),
    )(x_sbh, wih, whh, bih, bhh)
    return jnp.transpose(out[:, :b, :], (1, 0, 2))    # back to (B, S, H)


# --------------------------------------------------------------------------
# Parameter construction & CPC model forward
# --------------------------------------------------------------------------
def init_params(key, hidden=HIDDEN):
    params = {"convs": []}
    c_in = 1
    for k_sz, stride in zip(KERNELS, STRIDES):
        key, k1, k2 = jax.random.split(key, 3)
        scale = 1.0 / jnp.sqrt(c_in * k_sz)
        w = jax.random.uniform(k1, (hidden, c_in, k_sz), jnp.float32, -scale, scale)
        b = jax.random.uniform(k2, (hidden,), jnp.float32, -scale, scale)
        # Conv1d weight (Cout, Cin, K); split the taps into the two stride-halves and
        # lay each out (k-major, c-minor) x Cout for the group-matmul formulation.
        wa = jnp.transpose(w[:, :, :stride], (2, 1, 0)).reshape(stride * c_in, hidden)
        wb = jnp.transpose(w[:, :, stride:], (2, 1, 0)).reshape(stride * c_in, hidden)
        # bf16 operands only once the contraction dim is MXU-worthy (layer 1 stays f32).
        mm_dtype = MXU_DTYPE if stride * c_in >= 128 else jnp.float32
        params["convs"].append(dict(
            wa=wa.astype(mm_dtype),
            wb=wb.astype(mm_dtype),
            b=b.reshape(1, hidden),
            gamma=jnp.ones((1, hidden), jnp.float32),
            beta=jnp.zeros((1, hidden), jnp.float32),
        ))
        c_in = hidden
    key, k1, k2, k3, k4 = jax.random.split(key, 5)
    scale = 1.0 / jnp.sqrt(hidden)
    params["gru"] = dict(
        # PyTorch GRU stores (3H, H); keep the transposed (H, 3H) for x @ W.
        wih=jnp.transpose(jax.random.uniform(k1, (3 * hidden, hidden),
                                             jnp.float32, -scale, scale)),
        whh=jnp.transpose(jax.random.uniform(k2, (3 * hidden, hidden),
                                             jnp.float32, -scale, scale)),
        bih=jax.random.uniform(k3, (3 * hidden,), jnp.float32,
                               -scale, scale).reshape(1, 3 * hidden),
        bhh=jax.random.uniform(k4, (3 * hidden,), jnp.float32,
                               -scale, scale).reshape(1, 3 * hidden),
    )
    return params


def cpc_forward(params, batch_audio, label):
    """CPCModel.forward: returns (cFeature, encodedData, label)."""
    # (B, 1, T) -> channels-last (B, T, 1); all layers then stay channels-last,
    # which matches the .permute(0, 2, 1) applied to encodedData in CPCModel.
    x = jnp.transpose(batch_audio, (0, 2, 1))
    for layer, (k, s, p) in zip(params["convs"], zip(KERNELS, STRIDES, PADS)):
        x = conv_layer_forward(x, layer, k, s, p)     # (B, T_out, H), bf16
    encoded = x.astype(jnp.float32)                   # (B, S, H)
    g = params["gru"]
    c_feature = gru_forward(encoded, g["wih"], g["whh"], g["bih"], g["bhh"])
    return c_feature, encoded, label


class FeatureModule:
    """JAX/Pallas equivalent of cpc.feature_loader.FeatureModule."""

    def __init__(self, feature_maker_params, get_encoded, collapse=False):
        self.params = feature_maker_params
        self.get_encoded = get_encoded
        self.collapse = collapse

    def getDownsamplingFactor(self):
        return DOWNSAMPLING

    def __call__(self, data):
        batch_audio, label = data
        c_feature, encoded, _ = cpc_forward(self.params, batch_audio, label)
        if self.get_encoded:
            c_feature = encoded
        if self.collapse:
            c_feature = c_feature.reshape(-1, c_feature.shape[2])
        return c_feature


if __name__ == "__main__":
    key = jax.random.PRNGKey(0)
    key, pkey, dkey = jax.random.split(key, 3)

    params = init_params(pkey)
    B, T = 2, 3200                                    # 3200 / 160 = 20 output frames
    batch_audio = jax.random.normal(dkey, (B, 1, T), jnp.float32)
    label = None

    module = FeatureModule(params, get_encoded=False, collapse=False)
    c_feature = jax.block_until_ready(module((batch_audio, label)))
    S = T // DOWNSAMPLING
    assert c_feature.shape == (B, S, HIDDEN), c_feature.shape
    assert bool(jnp.all(jnp.isfinite(c_feature)))

    # also exercise get_encoded + collapse paths
    encoded_collapsed = jax.block_until_ready(
        FeatureModule(params, get_encoded=True, collapse=True)((batch_audio, label)))
    assert encoded_collapsed.shape == (B * S, HIDDEN), encoded_collapsed.shape
    assert bool(jnp.all(jnp.isfinite(encoded_collapsed)))

    print("KERNEL_OK")
</pallas_src>

<mosaic_0001>
module attributes {stable_mosaic.version = 11 : i64} {
  func.func @_conv_norm_relu_kernel(%arg0: i32, %arg1: i32, %arg2: memref<1x320x5xf32, #tpu.memory_space<vmem>>, %arg3: memref<1x320x5xf32, #tpu.memory_space<vmem>>, %arg4: memref<5x256xf32, #tpu.memory_space<vmem>>, %arg5: memref<5x256xf32, #tpu.memory_space<vmem>>, %arg6: memref<1x256xf32, #tpu.memory_space<vmem>>, %arg7: memref<1x256xf32, #tpu.memory_space<vmem>>, %arg8: memref<1x256xf32, #tpu.memory_space<vmem>>, %arg9: memref<1x320x256xbf16, #tpu.memory_space<vmem>>) attributes {dimension_semantics = [#tpu.dimension_semantics<parallel>, #tpu.dimension_semantics<parallel>], iteration_bounds = array<i64: 2, 2>, scalar_prefetch = 0 : i64, scratch_operands = 0 : i64, tpu.core_type = #tpu.core_type<tc>, window_params = [{transform_indices = @transform_0, window_bounds = array<i64: 1, 320, 5>}, {transform_indices = @transform_1, window_bounds = array<i64: 1, 320, 5>}, {pipeline_mode = #tpu.pipeline_mode<synchronous>, transform_indices = @transform_2, window_bounds = array<i64: 5, 256>}, {pipeline_mode = #tpu.pipeline_mode<synchronous>, transform_indices = @transform_3, window_bounds = array<i64: 5, 256>}, {pipeline_mode = #tpu.pipeline_mode<synchronous>, transform_indices = @transform_4, window_bounds = array<i64: 1, 256>}, {pipeline_mode = #tpu.pipeline_mode<synchronous>, transform_indices = @transform_5, window_bounds = array<i64: 1, 256>}, {pipeline_mode = #tpu.pipeline_mode<synchronous>, transform_indices = @transform_6, window_bounds = array<i64: 1, 256>}, {transform_indices = @transform_7, window_bounds = array<i64: 1, 320, 256>}]} {
    %c0 = arith.constant 0 : index
    %c0_0 = arith.constant 0 : index
    %c0_1 = arith.constant 0 : index
    %0 = vector.load %arg2[%c0, %c0_0, %c0_1] : memref<1x320x5xf32, #tpu.memory_space<vmem>>, vector<1x320x5xf32>
    %1 = vector.shape_cast %0 : vector<1x320x5xf32> to vector<320x5xf32>
    %c0_2 = arith.constant 0 : index
    %c0_3 = arith.constant 0 : index
    %c0_4 = arith.constant 0 : index
    %2 = vector.load %arg3[%c0_2, %c0_3, %c0_4] : memref<1x320x5xf32, #tpu.memory_space<vmem>>, vector<1x320x5xf32>
    %3 = vector.shape_cast %2 : vector<1x320x5xf32> to vector<320x5xf32>
    %c0_5 = arith.constant 0 : index
    %c0_6 = arith.constant 0 : index
    %4 = vector.load %arg4[%c0_5, %c0_6] : memref<5x256xf32, #tpu.memory_space<vmem>>, vector<5x256xf32>
    %5 = vector.extract_strided_slice %1 {offsets = [0, 0], sizes = [320, 1], strides = [1, 1]} : vector<320x5xf32> to vector<320x1xf32>
    %6 = vector.extract_strided_slice %4 {offsets = [0, 0], sizes = [1, 256], strides = [1, 1]} : vector<5x256xf32> to vector<1x256xf32>
    %7 = vector.broadcast %5 : vector<320x1xf32> to vector<320x256xf32>
    %8 = vector.broadcast %6 : vector<1x256xf32> to vector<320x256xf32>
    %9 = arith.mulf %7, %8 : vector<320x256xf32>
    %10 = vector.extract_strided_slice %1 {offsets = [0, 1], sizes = [320, 1], strides = [1, 1]} : vector<320x5xf32> to vector<320x1xf32>
    %11 = vector.extract_strided_slice %4 {offsets = [1, 0], sizes = [1, 256], strides = [1, 1]} : vector<5x256xf32> to vector<1x256xf32>
    %12 = vector.broadcast %10 : vector<320x1xf32> to vector<320x256xf32>
    %13 = vector.broadcast %11 : vector<1x256xf32> to vector<320x256xf32>
    %14 = arith.mulf %12, %13 : vector<320x256xf32>
    %15 = arith.addf %9, %14 : vector<320x256xf32>
    %16 = vector.extract_strided_slice %1 {offsets = [0, 2], sizes = [320, 1], strides = [1, 1]} : vector<320x5xf32> to vector<320x1xf32>
    %17 = vector.extract_strided_slice %4 {offsets = [2, 0], sizes = [1, 256], strides = [1, 1]} : vector<5x256xf32> to vector<1x256xf32>
    %18 = vector.broadcast %16 : vector<320x1xf32> to vector<320x256xf32>
    %19 = vector.broadcast %17 : vector<1x256xf32> to vector<320x256xf32>
    %20 = arith.mulf %18, %19 : vector<320x256xf32>
    %21 = arith.addf %15, %20 : vector<320x256xf32>
    %22 = vector.extract_strided_slice %1 {offsets = [0, 3], sizes = [320, 1], strides = [1, 1]} : vector<320x5xf32> to vector<320x1xf32>
    %23 = vector.extract_strided_slice %4 {offsets = [3, 0], sizes = [1, 256], strides = [1, 1]} : vector<5x256xf32> to vector<1x256xf32>
    %24 = vector.broadcast %22 : vector<320x1xf32> to vector<320x256xf32>
    %25 = vector.broadcast %23 : vector<1x256xf32> to vector<320x256xf32>
    %26 = arith.mulf %24, %25 : vector<320x256xf32>
    %27 = arith.addf %21, %26 : vector<320x256xf32>
    %28 = vector.extract_strided_slice %1 {offsets = [0, 4], sizes = [320, 1], strides = [1, 1]} : vector<320x5xf32> to vector<320x1xf32>
    %29 = vector.extract_strided_slice %4 {offsets = [4, 0], sizes = [1, 256], strides = [1, 1]} : vector<5x256xf32> to vector<1x256xf32>
    %30 = vector.broadcast %28 : vector<320x1xf32> to vector<320x256xf32>
    %31 = vector.broadcast %29 : vector<1x256xf32> to vector<320x256xf32>
    %32 = arith.mulf %30, %31 : vector<320x256xf32>
    %33 = arith.addf %27, %32 : vector<320x256xf32>
    %c0_7 = arith.constant 0 : index
    %c0_8 = arith.constant 0 : index
    %34 = vector.load %arg5[%c0_7, %c0_8] : memref<5x256xf32, #tpu.memory_space<vmem>>, vector<5x256xf32>
    %35 = vector.extract_strided_slice %3 {offsets = [0, 0], sizes = [320, 1], strides = [1, 1]} : vector<320x5xf32> to vector<320x1xf32>
    %36 = vector.extract_strided_slice %34 {offsets = [0, 0], sizes = [1, 256], strides = [1, 1]} : vector<5x256xf32> to vector<1x256xf32>
    %37 = vector.broadcast %35 : vector<320x1xf32> to vector<320x256xf32>
    %38 = vector.broadcast %36 : vector<1x256xf32> to vector<320x256xf32>
    %39 = arith.mulf %37, %38 : vector<320x256xf32>
    %40 = vector.extract_strided_slice %3 {offsets = [0, 1], sizes = [320, 1], strides = [1, 1]} : vector<320x5xf32> to vector<320x1xf32>
    %41 = vector.extract_strided_slice %34 {offsets = [1, 0], sizes = [1, 256], strides = [1, 1]} : vector<5x256xf32> to vector<1x256xf32>
    %42 = vector.broadcast %40 : vector<320x1xf32> to vector<320x256xf32>
    %43 = vector.broadcast %41 : vector<1x256xf32> to vector<320x256xf32>
    %44 = arith.mulf %42, %43 : vector<320x256xf32>
    %45 = arith.addf %39, %44 : vector<320x256xf32>
    %46 = vector.extract_strided_slice %3 {offsets = [0, 2], sizes = [320, 1], strides = [1, 1]} : vector<320x5xf32> to vector<320x1xf32>
    %47 = vector.extract_strided_slice %34 {offsets = [2, 0], sizes = [1, 256], strides = [1, 1]} : vector<5x256xf32> to vector<1x256xf32>
    %48 = vector.broadcast %46 : vector<320x1xf32> to vector<320x256xf32>
    %49 = vector.broadcast %47 : vector<1x256xf32> to vector<320x256xf32>
    %50 = arith.mulf %48, %49 : vector<320x256xf32>
    %51 = arith.addf %45, %50 : vector<320x256xf32>
    %52 = vector.extract_strided_slice %3 {offsets = [0, 3], sizes = [320, 1], strides = [1, 1]} : vector<320x5xf32> to vector<320x1xf32>
    %53 = vector.extract_strided_slice %34 {offsets = [3, 0], sizes = [1, 256], strides = [1, 1]} : vector<5x256xf32> to vector<1x256xf32>
    %54 = vector.broadcast %52 : vector<320x1xf32> to vector<320x256xf32>
    %55 = vector.broadcast %53 : vector<1x256xf32> to vector<320x256xf32>
    %56 = arith.mulf %54, %55 : vector<320x256xf32>
    %57 = arith.addf %51, %56 : vector<320x256xf32>
    %58 = vector.extract_strided_slice %3 {offsets = [0, 4], sizes = [320, 1], strides = [1, 1]} : vector<320x5xf32> to vector<320x1xf32>
    %59 = vector.extract_strided_slice %34 {offsets = [4, 0], sizes = [1, 256], strides = [1, 1]} : vector<5x256xf32> to vector<1x256xf32>
    %60 = vector.broadcast %58 : vector<320x1xf32> to vector<320x256xf32>
    %61 = vector.broadcast %59 : vector<1x256xf32> to vector<320x256xf32>
    %62 = arith.mulf %60, %61 : vector<320x256xf32>
    %63 = arith.addf %57, %62 : vector<320x256xf32>
    %64 = arith.addf %33, %63 : vector<320x256xf32>
    %c0_9 = arith.constant 0 : index
    %c0_10 = arith.constant 0 : index
    %65 = vector.load %arg6[%c0_9, %c0_10] : memref<1x256xf32, #tpu.memory_space<vmem>>, vector<1x256xf32>
    %66 = vector.broadcast %65 : vector<1x256xf32> to vector<320x256xf32>
    %67 = arith.addf %64, %66 : vector<320x256xf32>
    %cst = arith.constant dense<0.000000e+00> : vector<320xf32>
    %68 = vector.multi_reduction <add>, %67, %cst [1] : vector<320x256xf32> to vector<320xf32>
    %69 = vector.shape_cast %68 : vector<320xf32> to vector<320x1xf32>
    %cst_11 = arith.constant 2.560000e+02 : f32
    %70 = vector.broadcast %cst_11 : f32 to vector<320x1xf32>
    %71 = arith.divf %69, %70 : vector<320x1xf32>
    %72 = vector.broadcast %71 : vector<320x1xf32> to vector<320x256xf32>
    %73 = arith.subf %67, %72 : vector<320x256xf32>
    %74 = arith.mulf %73, %73 : vector<320x256xf32>
    %cst_12 = arith.constant dense<0.000000e+00> : vector<320xf32>
    %75 = vector.multi_reduction <add>, %74, %cst_12 [1] : vector<320x256xf32> to vector<320xf32>
    %76 = vector.shape_cast %75 : vector<320xf32> to vector<320x1xf32>
    %cst_13 = arith.constant 2.550000e+02 : f32
    %77 = vector.broadcast %cst_13 : f32 to vector<320x1xf32>
    %78 = arith.divf %76, %77 : vector<320x1xf32>
    %79 = vector.broadcast %71 : vector<320x1xf32> to vector<320x256xf32>
    %80 = arith.subf %67, %79 : vector<320x256xf32>
    %cst_14 = arith.constant 9.99999974E-6 : f32
    %81 = vector.broadcast %cst_14 : f32 to vector<320x1xf32>
    %82 = arith.addf %78, %81 : vector<320x1xf32>
    %83 = math.rsqrt %82 : vector<320x1xf32>
    %84 = vector.broadcast %83 : vector<320x1xf32> to vector<320x256xf32>
    %85 = arith.mulf %80, %84 : vector<320x256xf32>
    %c0_15 = arith.constant 0 : index
    %c0_16 = arith.constant 0 : index
    %86 = vector.load %arg7[%c0_15, %c0_16] : memref<1x256xf32, #tpu.memory_space<vmem>>, vector<1x256xf32>
    %87 = vector.broadcast %86 : vector<1x256xf32> to vector<320x256xf32>
    %88 = arith.mulf %85, %87 : vector<320x256xf32>
    %c0_17 = arith.constant 0 : index
    %c0_18 = arith.constant 0 : index
    %89 = vector.load %arg8[%c0_17, %c0_18] : memref<1x256xf32, #tpu.memory_space<vmem>>, vector<1x256xf32>
    %90 = vector.broadcast %89 : vector<1x256xf32> to vector<320x256xf32>
    %91 = arith.addf %88, %90 : vector<320x256xf32>
    %cst_19 = arith.constant 0.000000e+00 : f32
    %92 = vector.broadcast %cst_19 : f32 to vector<320x256xf32>
    %93 = arith.maximumf %91, %92 : vector<320x256xf32>
    %94 = arith.truncf %93 : vector<320x256xf32> to vector<320x256xbf16>
    %c0_20 = arith.constant 0 : index
    %c0_21 = arith.constant 0 : index
    %c0_22 = arith.constant 0 : index
    %95 = vector.load %arg9[%c0_20, %c0_21, %c0_22] : memref<1x320x256xbf16, #tpu.memory_space<vmem>>, vector<1x320x256xbf16>
    %96 = vector.shape_cast %95 : vector<1x320x256xbf16> to vector<320x256xbf16>
    %97 = vector.shape_cast %94 : vector<320x256xbf16> to vector<1x320x256xbf16>
    tpu.vector_store %arg9[%c0_20, %c0_21, %c0_22], %97 {strides = array<i32>} : memref<1x320x256xbf16, #tpu.memory_space<vmem>>, vector<1x320x256xbf16>,
    return
  }
  func.func @transform_0(%arg0: i32, %arg1: i32) -> (i32, i32, i32) {
    %c0_i32 = arith.constant 0 : i32
    %c0_i32_0 = arith.constant 0 : i32
    return %arg0, %arg1, %c0_i32 : i32, i32, i32
  }
  func.func @transform_1(%arg0: i32, %arg1: i32) -> (i32, i32, i32) {
    %c0_i32 = arith.constant 0 : i32
    %c0_i32_0 = arith.constant 0 : i32
    return %arg0, %arg1, %c0_i32 : i32, i32, i32
  }
  func.func @transform_2(%arg0: i32, %arg1: i32) -> (i32, i32) {
    %c0_i32 = arith.constant 0 : i32
    %c0_i32_0 = arith.constant 0 : i32
    %c0_i32_1 = arith.constant 0 : i32
    return %c0_i32, %c0_i32_0 : i32, i32
  }
  func.func @transform_3(%arg0: i32, %arg1: i32) -> (i32, i32) {
    %c0_i32 = arith.constant 0 : i32
    %c0_i32_0 = arith.constant 0 : i32
    %c0_i32_1 = arith.constant 0 : i32
    return %c0_i32, %c0_i32_0 : i32, i32
  }
  func.func @transform_4(%arg0: i32, %arg1: i32) -> (i32, i32) {
    %c0_i32 = arith.constant 0 : i32
    %c0_i32_0 = arith.constant 0 : i32
    %c0_i32_1 = arith.constant 0 : i32
    return %c0_i32, %c0_i32_0 : i32, i32
  }
  func.func @transform_5(%arg0: i32, %arg1: i32) -> (i32, i32) {
    %c0_i32 = arith.constant 0 : i32
    %c0_i32_0 = arith.constant 0 : i32
    %c0_i32_1 = arith.constant 0 : i32
    return %c0_i32, %c0_i32_0 : i32, i32
  }
  func.func @transform_6(%arg0: i32, %arg1: i32) -> (i32, i32) {
    %c0_i32 = arith.constant 0 : i32
    %c0_i32_0 = arith.constant 0 : i32
    %c0_i32_1 = arith.constant 0 : i32
    return %c0_i32, %c0_i32_0 : i32, i32
  }
  func.func @transform_7(%arg0: i32, %arg1: i32) -> (i32, i32, i32) {
    %c0_i32 = arith.constant 0 : i32
    %c0_i32_0 = arith.constant 0 : i32
    return %arg0, %arg1, %c0_i32 : i32, i32, i32
  }
}

</mosaic_0001>

<llo_original>
// kernel: tpu_custom_call.1
$region0: #{tpu_custom_call.1}
  #allocation0 [shape = 'u32[]', space=smem, size = 0x4, offset = 0x4, fixed_abs, tag = 'smem constant byte address 0x4 - core index']
  #allocation1 [shape = 'u32[72,128]{1,0:T(1,128)}', space=vmem, size = 0x9000, scoped, tag = 'internal scratch']
  %s0 = inlined_call_operand.vmem [shape: f32[2,640,5], index: 0, kind: input, shape index: {}]
  %s1 = inlined_call_operand.vmem [shape: f32[2,640,5], index: 1, kind: input, shape index: {}]
  %s2 = inlined_call_operand.vmem [shape: f32[5,256], index: 2, kind: input, shape index: {}]
  %s3 = inlined_call_operand.vmem [shape: f32[5,256], index: 3, kind: input, shape index: {}]
  %s4 = inlined_call_operand.vmem [shape: f32[1,256], index: 4, kind: input, shape index: {}]
  %s5 = inlined_call_operand.vmem [shape: f32[1,256], index: 5, kind: input, shape index: {}]
  %s6 = inlined_call_operand.vmem [shape: f32[1,256], index: 6, kind: input, shape index: {}]
  %s7 = inlined_call_operand.hbm [shape: bf16[2,640,256], index: 7, kind: output, shape index: {}]
  %s8 = sld [smem:[#allocation0]]
  $region61: #{tpu_custom_call.1} parent=0
    _
  %s10 = ssub.s32 1, %s8
  %s11 = scalar_select 0, %s10, %s8
  $region1: #{tpu_custom_call.1} parent=0
    #allocation2 [shape = 'u8[327680]{0}', space=vmem, size = 0x50000, scoped, tag = 'output window, operand 0']
    #allocation3 [shape = 's32[2]{0}', space=sflag, size = 0x8, scoped, tag = 'scoped memory for tpu_custom_call.1']
    %12 = vsyncpa [#allocation3], 0
    %s13 = scalar_lea.sflag [#allocation3], 1
    %14 = vsyncpa %s13, 0
    loop: start=0, step=1, limit=6
    $region2: #{tpu_custom_call.1} parent=1 // loop_pre_header
      _
    $region3: #{tpu_custom_call.1} parent=1 // loop_header
      %s16 = sphi 0, %s20
      %p17 = scmp.ge.s32.totalorder %s16, 6
      %s23 = sphi 0, %s35
      %s24 = sphi 0, %s31
      %s25 = sphi 0, %s23
      %s26 = sphi 0, %s24
      %s27 = sphi 0, %s25
      %s28 = sphi 0, %s26
      %s40 = sphi 0, %s42
      %s43 = sphi 0, %s40
      %s44 = sphi 0, %s43
      %s60 = sphi 0, %s44
      %s68 = sphi 0, %s70
      %s71 = sphi 0, %s68
      %s72 = sphi 0, %s71
      %s88 = sphi 0, %s72
      %s92 = sphi 0, %s92
      %s94 = sphi 0, %s92
      %s95 = sphi 0, %s94
      %s109 = sphi 0, %s95
      %s113 = sphi 0, %s113
      %s115 = sphi 0, %s113
      %s116 = sphi 0, %s115
      %s130 = sphi 0, %s116
      %s134 = sphi 0, %s134
      %s136 = sphi 0, %s134
      %s137 = sphi 0, %s136
      %s151 = sphi 0, %s137
      %s155 = sphi 0, %s155
      %s157 = sphi 0, %s155
      %s158 = sphi 0, %s157
      %s172 = sphi 0, %s158
      %s176 = sphi 0, %s176
      %s178 = sphi 0, %s176
      %s179 = sphi 0, %s178
      %s193 = sphi 0, %s179
      %s201 = sphi 0, %s203
      %s204 = sphi 0, %s201
      %s205 = sphi 0, %s204
      %s221 = sphi 0, %s205
    $region4: #{tpu_custom_call.1} parent=1 // loop_header_branch
      %19 = sbr.rel (%p17) target = $region8
    $region5: #{tpu_custom_call.1} parent=1 // loop_body
      %s21 = ssub.s32 %s16, 1
      %s22 = ssub.s32 %s16, 2
      %s29 = sadd.s32 1, %s24
      %p30 = scmp.ge.s32.totalorder %s29, 2
      %s31 = scalar_select %p30, 0, %s29
      %s32 = sadd.s32 1, %s23
      %s33 = scalar_select %p30, %s32, %s23
      %p34 = scmp.ge.s32.totalorder %s33, 2
      %s35 = scalar_select %p34, 0, %s33
      %s36 = ssub.s32 %s23, %s35
      %s37 = ssub.s32 %s24, %s31
      %s38 = sor.u32 %s36, %s37
      %p39 = scmp.eq.s32.totalorder %s38, 0
      %s41 = sadd.s32 %s40, 1
      %s42 = scalar_select %p39, %s40, %s41
      %p45 = pneg %p39
      %p46 = scmp.eq.s32.totalorder %s16, 3
      %p47 = por %p45, %p46
      %p48 = scmp.ne.s32.totalorder %s40, %s43
      %p49 = scmp.eq.s32.totalorder %s16, 0
      %p50 = por %p48, %p49
      %p51 = scmp.ne.s32.totalorder %s40, %s43
      %p52 = scmp.eq.s32.totalorder %s21, 3
      %p53 = por %p51, %p52
      %p54 = scmp.ne.s32.totalorder %s43, %s44
      %p55 = scmp.eq.s32.totalorder %s21, 0
      %p56 = por %p54, %p55
      %p57 = scmp.ne.s32.totalorder %s43, %s44
      %p58 = scmp.eq.s32.totalorder %s22, 3
      %p59 = por %p57, %p58
      %p61 = scmp.ne.s32.totalorder %s44, %s60
      %p62 = scmp.eq.s32.totalorder %s22, 0
      %p63 = por %p61, %p62
      %s64 = ssub.s32 %s23, %s35
      %s65 = ssub.s32 %s24, %s31
      %s66 = sor.u32 %s64, %s65
      %p67 = scmp.eq.s32.totalorder %s66, 0
      %s69 = sadd.s32 %s68, 1
      %s70 = scalar_select %p67, %s68, %s69
      %p73 = pneg %p67
      %p74 = scmp.eq.s32.totalorder %s16, 3
      %p75 = por %p73, %p74
      %p76 = scmp.ne.s32.totalorder %s68, %s71
      %p77 = scmp.eq.s32.totalorder %s16, 0
      %p78 = por %p76, %p77
      %p79 = scmp.ne.s32.totalorder %s68, %s71
      %p80 = scmp.eq.s32.totalorder %s21, 3
      %p81 = por %p79, %p80
      %p82 = scmp.ne.s32.totalorder %s71, %s72
      %p83 = scmp.eq.s32.totalorder %s21, 0
      %p84 = por %p82, %p83
      %p85 = scmp.ne.s32.totalorder %s71, %s72
      %p86 = scmp.eq.s32.totalorder %s22, 3
      %p87 = por %p85, %p86
      %p89 = scmp.ne.s32.totalorder %s72, %s88
      %p90 = scmp.eq.s32.totalorder %s22, 0
      %p91 = por %p89, %p90
      %s93 = sadd.s32 %s92, 1
      %p96 = scmp.eq.s32.totalorder %s16, 3
      %p97 = scmp.ne.s32.totalorder %s92, %s94
      %p98 = scmp.eq.s32.totalorder %s16, 0
      %p99 = por %p97, %p98
      %p100 = scmp.ne.s32.totalorder %s92, %s94
      %p101 = scmp.eq.s32.totalorder %s21, 3
      %p102 = por %p100, %p101
      %p103 = scmp.ne.s32.totalorder %s94, %s95
      %p104 = scmp.eq.s32.totalorder %s21, 0
      %p105 = por %p103, %p104
      %p106 = scmp.ne.s32.totalorder %s94, %s95
      %p107 = scmp.eq.s32.totalorder %s22, 3
      %p108 = por %p106, %p107
      %p110 = scmp.ne.s32.totalorder %s95, %s109
      %p111 = scmp.eq.s32.totalorder %s22, 0
      %p112 = por %p110, %p111
      %s114 = sadd.s32 %s113, 1
      %p117 = scmp.eq.s32.totalorder %s16, 3
      %p118 = scmp.ne.s32.totalorder %s113, %s115
      %p119 = scmp.eq.s32.totalorder %s16, 0
      %p120 = por %p118, %p119
      %p121 = scmp.ne.s32.totalorder %s113, %s115
      %p122 = scmp.eq.s32.totalorder %s21, 3
      %p123 = por %p121, %p122
      %p124 = scmp.ne.s32.totalorder %s115, %s116
      %p125 = scmp.eq.s32.totalorder %s21, 0
      %p126 = por %p124, %p125
      %p127 = scmp.ne.s32.totalorder %s115, %s116
      %p128 = scmp.eq.s32.totalorder %s22, 3
      %p129 = por %p127, %p128
      %p131 = scmp.ne.s32.totalorder %s116, %s130
      %p132 = scmp.eq.s32.totalorder %s22, 0
      %p133 = por %p131, %p132
      %s135 = sadd.s32 %s134, 1
      %p138 = scmp.eq.s32.totalorder %s16, 3
      %p139 = scmp.ne.s32.totalorder %s134, %s136
      %p140 = scmp.eq.s32.totalorder %s16, 0
      %p141 = por %p139, %p140
      %p142 = scmp.ne.s32.totalorder %s134, %s136
      %p143 = scmp.eq.s32.totalorder %s21, 3
      %p144 = por %p142, %p143
      %p145 = scmp.ne.s32.totalorder %s136, %s137
      %p146 = scmp.eq.s32.totalorder %s21, 0
      %p147 = por %p145, %p146
      %p148 = scmp.ne.s32.totalorder %s136, %s137
      %p149 = scmp.eq.s32.totalorder %s22, 3
      %p150 = por %p148, %p149
      %p152 = scmp.ne.s32.totalorder %s137, %s151
      %p153 = scmp.eq.s32.totalorder %s22, 0
      %p154 = por %p152, %p153
      %s156 = sadd.s32 %s155, 1
      %p159 = scmp.eq.s32.totalorder %s16, 3
      %p160 = scmp.ne.s32.totalorder %s155, %s157
      %p161 = scmp.eq.s32.totalorder %s16, 0
      %p162 = por %p160, %p161
      %p163 = scmp.ne.s32.totalorder %s155, %s157
      %p164 = scmp.eq.s32.totalorder %s21, 3
      %p165 = por %p163, %p164
      %p166 = scmp.ne.s32.totalorder %s157, %s158
      %p167 = scmp.eq.s32.totalorder %s21, 0
      %p168 = por %p166, %p167
      %p169 = scmp.ne.s32.totalorder %s157, %s158
      %p170 = scmp.eq.s32.totalorder %s22, 3
      %p171 = por %p169, %p170
      %p173 = scmp.ne.s32.totalorder %s158, %s172
      %p174 = scmp.eq.s32.totalorder %s22, 0
      %p175 = por %p173, %p174
      %s177 = sadd.s32 %s176, 1
      %p180 = scmp.eq.s32.totalorder %s16, 3
      %p181 = scmp.ne.s32.totalorder %s176, %s178
      %p182 = scmp.eq.s32.totalorder %s16, 0
      %p183 = por %p181, %p182
      %p184 = scmp.ne.s32.totalorder %s176, %s178
      %p185 = scmp.eq.s32.totalorder %s21, 3
      %p186 = por %p184, %p185
      %p187 = scmp.ne.s32.totalorder %s178, %s179
      %p188 = scmp.eq.s32.totalorder %s21, 0
      %p189 = por %p187, %p188
      %p190 = scmp.ne.s32.totalorder %s178, %s179
      %p191 = scmp.eq.s32.totalorder %s22, 3
      %p192 = por %p190, %p191
      %p194 = scmp.ne.s32.totalorder %s179, %s193
      %p195 = scmp.eq.s32.totalorder %s22, 0
      %p196 = por %p194, %p195
      %s197 = ssub.s32 %s23, %s35
      %s198 = ssub.s32 %s24, %s31
      %s199 = sor.u32 %s197, %s198
      %p200 = scmp.eq.s32.totalorder %s199, 0
      %s202 = sadd.s32 %s201, 1
      %s203 = scalar_select %p200, %s201, %s202
      %p206 = pneg %p200
      %p207 = scmp.eq.s32.totalorder %s16, 3
      %p208 = por %p206, %p207
      %p209 = scmp.ne.s32.totalorder %s201, %s204
      %p210 = scmp.eq.s32.totalorder %s16, 0
      %p211 = por %p209, %p210
      %p212 = scmp.ne.s32.totalorder %s201, %s204
      %p213 = scmp.eq.s32.totalorder %s21, 3
      %p214 = por %p212, %p213
      %p215 = scmp.ne.s32.totalorder %s204, %s205
      %p216 = scmp.eq.s32.totalorder %s21, 0
      %p217 = por %p215, %p216
      %p218 = scmp.ne.s32.totalorder %s204, %s205
      %p219 = scmp.eq.s32.totalorder %s22, 3
      %p220 = por %p218, %p219
      %p222 = scmp.ne.s32.totalorder %s205, %s221
      %p223 = scmp.eq.s32.totalorder %s22, 0
      %p224 = por %p222, %p223
      %p225 = scmp.le.s32.totalorder 1, %s16
      %p226 = scmp.lt.s32.totalorder %s16, 5
      %p227 = pnand %p225, %p226
      %p228 = pneg %p227
      // Predicated region
      $region9: #{tpu_custom_call.1} parent=5 // pred_check
        _
      $region10: #{tpu_custom_call.1} parent=5 // pred_check_branch
        %230 = sbr.rel (%p227) target = $region12
      $region11: #{tpu_custom_call.1} parent=5 // pred_region
        %s231 = ssub.s32 %s16, 1
        // Predicated region
        $region13: #{tpu_custom_call.1} parent=11 // pred_check
          %p232 = pneg %p105
        $region14: #{tpu_custom_call.1} parent=11 // pred_check_branch
          %234 = sbr.rel (%p232) target = $region16
        $region15: #{tpu_custom_call.1} parent=11 // pred_region
          _
        $region16: #{tpu_custom_call.1} parent=11 // pred_fallthru
          _
        // Predicated region
        $region17: #{tpu_custom_call.1} parent=11 // pred_check
          %p235 = pneg %p126
        $region18: #{tpu_custom_call.1} parent=11 // pred_check_branch
          %237 = sbr.rel (%p235) target = $region20
        $region19: #{tpu_custom_call.1} parent=11 // pred_region
          _
        $region20: #{tpu_custom_call.1} parent=11 // pred_fallthru
          _
        // Predicated region
        $region21: #{tpu_custom_call.1} parent=11 // pred_check
          %p238 = pneg %p147
        $region22: #{tpu_custom_call.1} parent=11 // pred_check_branch
          %240 = sbr.rel (%p238) target = $region24
        $region23: #{tpu_custom_call.1} parent=11 // pred_region
          _
        $region24: #{tpu_custom_call.1} parent=11 // pred_fallthru
          _
        // Predicated region
        $region25: #{tpu_custom_call.1} parent=11 // pred_check
          %p241 = pneg %p168
        $region26: #{tpu_custom_call.1} parent=11 // pred_check_branch
          %243 = sbr.rel (%p241) target = $region28
        $region27: #{tpu_custom_call.1} parent=11 // pred_region
          _
        $region28: #{tpu_custom_call.1} parent=11 // pred_fallthru
          _
        // Predicated region
        $region29: #{tpu_custom_call.1} parent=11 // pred_check
          %p244 = pneg %p189
        $region30: #{tpu_custom_call.1} parent=11 // pred_check_branch
          %246 = sbr.rel (%p244) target = $region32
        $region31: #{tpu_custom_call.1} parent=11 // pred_region
          _
        $region32: #{tpu_custom_call.1} parent=11 // pred_fallthru
          _
      $region12: #{tpu_custom_call.1} parent=5 // pred_fallthru
        _
      %p247 = scmp.lt.s32.totalorder %s16, 4
      // Predicated region
      $region33: #{tpu_custom_call.1} parent=5 // pred_check
        %p248 = pneg %p247
      $region34: #{tpu_custom_call.1} parent=5 // pred_check_branch
        %250 = sbr.rel (%p248) target = $region36
      $region35: #{tpu_custom_call.1} parent=5 // pred_region
        // Predicated region
        $region37: #{tpu_custom_call.1} parent=35 // pred_check
          %p251 = pneg %p50
        $region38: #{tpu_custom_call.1} parent=35 // pred_check_branch
          %253 = sbr.rel (%p251) target = $region40
        $region39: #{tpu_custom_call.1} parent=35 // pred_region
          %s254 = smul.u32 40, %s24
          %p255 = scmp.lt.s32.totalorder %s23, 1
          %s256 = scalar_select %p255, %s23, 1
          %p257 = scmp.lt.s32.totalorder %s254, 79
          %s258 = scalar_select %p257, %s254, 79
          %s259 = smul.addr %s256, 80
          %s260 = sadd.s32 %s258, %s259
          %s261 = smul.addr %s260, 8
          %s262 = scalar_lea.vmem %s0, %s261
          %s263 = smul.u32 40, %s24
        $region40: #{tpu_custom_call.1} parent=35 // pred_fallthru
          _
        // Predicated region
        $region41: #{tpu_custom_call.1} parent=35 // pred_check
          %p264 = pneg %p78
        $region42: #{tpu_custom_call.1} parent=35 // pred_check_branch
          %266 = sbr.rel (%p264) target = $region44
        $region43: #{tpu_custom_call.1} parent=35 // pred_region
          %s267 = smul.u32 40, %s24
          %p268 = scmp.lt.s32.totalorder %s23, 1
          %s269 = scalar_select %p268, %s23, 1
          %p270 = scmp.lt.s32.totalorder %s267, 79
          %s271 = scalar_select %p270, %s267, 79
          %s272 = smul.addr %s269, 80
          %s273 = sadd.s32 %s271, %s272
          %s274 = smul.addr %s273, 8
          %s275 = scalar_lea.vmem %s1, %s274
          %s276 = smul.u32 40, %s24
        $region44: #{tpu_custom_call.1} parent=35 // pred_fallthru
          _
      $region36: #{tpu_custom_call.1} parent=5 // pred_fallthru
        _
      %p277 = scmp.le.s32.totalorder 1, %s16
      %p278 = scmp.lt.s32.totalorder %s16, 5
      %p279 = pnand %p277, %p278
      %p280 = pneg %p279
      // Predicated region
      $region45: #{tpu_custom_call.1} parent=5 // pred_check
        _
      $region46: #{tpu_custom_call.1} parent=5 // pred_check_branch
        %282 = sbr.rel (%p279) target = $region48
      $region47: #{tpu_custom_call.1} parent=5 // pred_region
        %s283 = ssub.s32 %s16, 1
        %s284 = smul.u32 40, %s26
        %p285 = scmp.lt.s32.totalorder %s25, 1
        %s286 = scalar_select %p285, %s25, 1
        %p287 = scmp.lt.s32.totalorder %s284, 79
        %s288 = scalar_select %p287, %s284, 79
        %s289 = smul.addr %s286, 80
        %s290 = sadd.s32 %s288, %s289
        %s291 = smul.addr %s290, 8
        %s292 = scalar_lea.vmem %s0, %s291
        %p293 = pneg %p56
        %p294 = pneg %p53
        %s295 = smul.u32 40, %s26
        %p296 = scmp.lt.s32.totalorder %s25, 1
        %s297 = scalar_select %p296, %s25, 1
        %p298 = scmp.lt.s32.totalorder %s295, 79
        %s299 = scalar_select %p298, %s295, 79
        %s300 = smul.addr %s297, 80
        %s301 = sadd.s32 %s299, %s300
        %s302 = smul.addr %s301, 8
        %s303 = scalar_lea.vmem %s1, %s302
        %p304 = pneg %p84
        %p305 = pneg %p81
        %p306 = pneg %p105
        %p307 = pneg %p102
        %p308 = pneg %p126
        %p309 = pneg %p123
        %p310 = pneg %p147
        %p311 = pneg %p144
        %p312 = pneg %p168
        %p313 = pneg %p165
        %p314 = pneg %p189
        %p315 = pneg %p186
        %p316 = pneg %p217
        %p317 = pneg %p214
        %s318 = sand.u32 %s204, 1
        %s319 = scalar_lea.sflag [#allocation3], %s318
        %s320 = sand.u32 %s204, 1
        %s321 = smul.addr %s320, 320
        %s322 = scalar_lea.vmem [#allocation2], %s321
        %s323 = smul.u32 40, %s26
        %p324 = scmp.lt.s32.totalorder %s25, 1
        %s325 = scalar_select %p324, %s25, 1
        %p326 = scmp.lt.s32.totalorder %s323, 79
        %s327 = scalar_select %p326, %s323, 79
        %s328 = smul.addr %s325, 80
        %s329 = sadd.s32 %s327, %s328
        %s330 = smul.addr %s329, 8
        %s331 = scalar_lea.vmem %s0, %s330
        %s332 = smul.u32 40, %s26
        %s333 = smul.u32 40, %s26
        %p334 = scmp.lt.s32.totalorder %s25, 1
        %s335 = scalar_select %p334, %s25, 1
        %p336 = scmp.lt.s32.totalorder %s333, 79
        %s337 = scalar_select %p336, %s333, 79
        %s338 = smul.addr %s335, 80
        %s339 = sadd.s32 %s337, %s338
        %s340 = smul.addr %s339, 8
        %s341 = scalar_lea.vmem %s1, %s340
        %s342 = smul.u32 40, %s26
        %s343 = smul.u32 40, %s26
        %v344 = vld [vmem:[%s331] sm:$0xff]
        %v345 = vld [vmem:[%s331 + $0x8] sm:$0xff]
        %v346 = vld [vmem:[%s331 + $0x10] sm:$0xff]
        %v347 = vld [vmem:[%s331 + $0x18] sm:$0xff]
        %v348 = vld [vmem:[%s331 + $0x20] sm:$0xff]
        %v349 = vld [vmem:[%s331 + $0x28] sm:$0xff]
        %v350 = vld [vmem:[%s331 + $0x30] sm:$0xff]
        %v351 = vld [vmem:[%s331 + $0x38] sm:$0xff]
        %v352 = vld [vmem:[%s331 + $0x40] sm:$0xff]
        %v353 = vld [vmem:[%s331 + $0x48] sm:$0xff]
        %v354 = vld [vmem:[%s331 + $0x50] sm:$0xff]
        %v355 = vld [vmem:[%s331 + $0x58] sm:$0xff]
        %v356 = vld [vmem:[%s331 + $0x60] sm:$0xff]
        %v357 = vld [vmem:[%s331 + $0x68] sm:$0xff]
        %v358 = vld [vmem:[%s331 + $0x70] sm:$0xff]
        %v359 = vld [vmem:[%s331 + $0x78] sm:$0xff]
        %v360 = vld [vmem:[%s331 + $0x80] sm:$0xff]
        %v361 = vld [vmem:[%s331 + $0x88] sm:$0xff]
        %v362 = vld [vmem:[%s331 + $0x90] sm:$0xff]
        %v363 = vld [vmem:[%s331 + $0x98] sm:$0xff]
        %v364 = vld [vmem:[%s331 + $0xa0] sm:$0xff]
        %v365 = vld [vmem:[%s331 + $0xa8] sm:$0xff]
        %v366 = vld [vmem:[%s331 + $0xb0] sm:$0xff]
        %v367 = vld [vmem:[%s331 + $0xb8] sm:$0xff]
        %v368 = vld [vmem:[%s331 + $0xc0] sm:$0xff]
        %v369 = vld [vmem:[%s331 + $0xc8] sm:$0xff]
        %v370 = vld [vmem:[%s331 + $0xd0] sm:$0xff]
        %v371 = vld [vmem:[%s331 + $0xd8] sm:$0xff]
        %v372 = vld [vmem:[%s331 + $0xe0] sm:$0xff]
        %v373 = vld [vmem:[%s331 + $0xe8] sm:$0xff]
        %v374 = vld [vmem:[%s331 + $0xf0] sm:$0xff]
        %v375 = vld [vmem:[%s331 + $0xf8] sm:$0xff]
        %v376 = vld [vmem:[%s331 + $0x100] sm:$0xff]
        %v377 = vld [vmem:[%s331 + $0x108] sm:$0xff]
        %v378 = vld [vmem:[%s331 + $0x110] sm:$0xff]
        %v379 = vld [vmem:[%s331 + $0x118] sm:$0xff]
        %v380 = vld [vmem:[%s331 + $0x120] sm:$0xff]
        %v381 = vld [vmem:[%s331 + $0x128] sm:$0xff]
        %v382 = vld [vmem:[%s331 + $0x130] sm:$0xff]
        %v383 = vld [vmem:[%s331 + $0x138] sm:$0xff]
        %v384 = vld [vmem:[%s341] sm:$0xff]
        %v385 = vld [vmem:[%s341 + $0x8] sm:$0xff]
        %v386 = vld [vmem:[%s341 + $0x10] sm:$0xff]
        %v387 = vld [vmem:[%s341 + $0x18] sm:$0xff]
        %v388 = vld [vmem:[%s341 + $0x20] sm:$0xff]
        %v389 = vld [vmem:[%s341 + $0x28] sm:$0xff]
        %v390 = vld [vmem:[%s341 + $0x30] sm:$0xff]
        %v391 = vld [vmem:[%s341 + $0x38] sm:$0xff]
        %v392 = vld [vmem:[%s341 + $0x40] sm:$0xff]
        %v393 = vld [vmem:[%s341 + $0x48] sm:$0xff]
        %v394 = vld [vmem:[%s341 + $0x50] sm:$0xff]
        %v395 = vld [vmem:[%s341 + $0x58] sm:$0xff]
        %v396 = vld [vmem:[%s341 + $0x60] sm:$0xff]
        %v397 = vld [vmem:[%s341 + $0x68] sm:$0xff]
        %v398 = vld [vmem:[%s341 + $0x70] sm:$0xff]
        %v399 = vld [vmem:[%s341 + $0x78] sm:$0xff]
        %v400 = vld [vmem:[%s341 + $0x80] sm:$0xff]
        %v401 = vld [vmem:[%s341 + $0x88] sm:$0xff]
        %v402 = vld [vmem:[%s341 + $0x90] sm:$0xff]
        %v403 = vld [vmem:[%s341 + $0x98] sm:$0xff]
        %v404 = vld [vmem:[%s341 + $0xa0] sm:$0xff]
        %v405 = vld [vmem:[%s341 + $0xa8] sm:$0xff]
        %v406 = vld [vmem:[%s341 + $0xb0] sm:$0xff]
        %v407 = vld [vmem:[%s341 + $0xb8] sm:$0xff]
        %v408 = vld [vmem:[%s341 + $0xc0] sm:$0xff]
        %v409 = vld [vmem:[%s341 + $0xc8] sm:$0xff]
        %v410 = vld [vmem:[%s341 + $0xd0] sm:$0xff]
        %v411 = vld [vmem:[%s341 + $0xd8] sm:$0xff]
        %v412 = vld [vmem:[%s341 + $0xe0] sm:$0xff]
        %v413 = vld [vmem:[%s341 + $0xe8] sm:$0xff]
        %v414 = vld [vmem:[%s341 + $0xf0] sm:$0xff]
        %v415 = vld [vmem:[%s341 + $0xf8] sm:$0xff]
        %v416 = vld [vmem:[%s341 + $0x100] sm:$0xff]
        %v417 = vld [vmem:[%s341 + $0x108] sm:$0xff]
        %v418 = vld [vmem:[%s341 + $0x110] sm:$0xff]
        %v419 = vld [vmem:[%s341 + $0x118] sm:$0xff]
        %v420 = vld [vmem:[%s341 + $0x120] sm:$0xff]
        %v421 = vld [vmem:[%s341 + $0x128] sm:$0xff]
        %v422 = vld [vmem:[%s341 + $0x130] sm:$0xff]
        %v423 = vld [vmem:[%s341 + $0x138] sm:$0xff]
        %v424 = vld [vmem:[%s2] sm:$0x1f]
        %v425 = vld [vmem:[%s2 + $0x8] sm:$0x1f]
        %427 = vset.pattern.permute.xlu0 0
        %428 = vperm.xlu0 %427, %v344
        %v429 = vpop.permute.xlu0 %428
        %432 = vset.pattern.permute.xlu0 0
        %433 = vperm.xlu0 %432, %v345
        %v434 = vpop.permute.xlu0 %433
        %437 = vset.pattern.permute.xlu0 0
        %438 = vperm.xlu0 %437, %v346
        %v439 = vpop.permute.xlu0 %438
        %442 = vset.pattern.permute.xlu0 0
        %443 = vperm.xlu0 %442, %v347
        %v444 = vpop.permute.xlu0 %443
        %447 = vset.pattern.permute.xlu0 0
        %448 = vperm.xlu0 %447, %v348
        %v449 = vpop.permute.xlu0 %448
        %452 = vset.pattern.permute.xlu0 0
        %453 = vperm.xlu0 %452, %v349
        %v454 = vpop.permute.xlu0 %453
        %457 = vset.pattern.permute.xlu0 0
        %458 = vperm.xlu0 %457, %v350
        %v459 = vpop.permute.xlu0 %458
        %462 = vset.pattern.permute.xlu0 0
        %463 = vperm.xlu0 %462, %v351
        %v464 = vpop.permute.xlu0 %463
        %467 = vset.pattern.permute.xlu0 0
        %468 = vperm.xlu0 %467, %v352
        %v469 = vpop.permute.xlu0 %468
        %472 = vset.pattern.permute.xlu0 0
        %473 = vperm.xlu0 %472, %v353
        %v474 = vpop.permute.xlu0 %473
        %477 = vset.pattern.permute.xlu0 0
        %478 = vperm.xlu0 %477, %v354
        %v479 = vpop.permute.xlu0 %478
        %482 = vset.pattern.permute.xlu0 0
        %483 = vperm.xlu0 %482, %v355
        %v484 = vpop.permute.xlu0 %483
        %487 = vset.pattern.permute.xlu0 0
        %488 = vperm.xlu0 %487, %v356
        %v489 = vpop.permute.xlu0 %488
        %492 = vset.pattern.permute.xlu0 0
        %493 = vperm.xlu0 %492, %v357
        %v494 = vpop.permute.xlu0 %493
        %497 = vset.pattern.permute.xlu0 0
        %498 = vperm.xlu0 %497, %v358
        %v499 = vpop.permute.xlu0 %498
        %502 = vset.pattern.permute.xlu0 0
        %503 = vperm.xlu0 %502, %v359
        %v504 = vpop.permute.xlu0 %503
        %507 = vset.pattern.permute.xlu0 0
        %508 = vperm.xlu0 %507, %v360
        %v509 = vpop.permute.xlu0 %508
        %512 = vset.pattern.permute.xlu0 0
        %513 = vperm.xlu0 %512, %v361
        %v514 = vpop.permute.xlu0 %513
        %517 = vset.pattern.permute.xlu0 0
        %518 = vperm.xlu0 %517, %v362
        %v519 = vpop.permute.xlu0 %518
        %522 = vset.pattern.permute.xlu0 0
        %523 = vperm.xlu0 %522, %v363
        %v524 = vpop.permute.xlu0 %523
        %527 = vset.pattern.permute.xlu0 0
        %528 = vperm.xlu0 %527, %v364
        %v529 = vpop.permute.xlu0 %528
        %532 = vset.pattern.permute.xlu0 0
        %533 = vperm.xlu0 %532, %v365
        %v534 = vpop.permute.xlu0 %533
        %537 = vset.pattern.permute.xlu0 0
        %538 = vperm.xlu0 %537, %v366
        %v539 = vpop.permute.xlu0 %538
        %542 = vset.pattern.permute.xlu0 0
        %543 = vperm.xlu0 %542, %v367
        %v544 = vpop.permute.xlu0 %543
        %547 = vset.pattern.permute.xlu0 0
        %548 = vperm.xlu0 %547, %v368
        %v549 = vpop.permute.xlu0 %548
        %552 = vset.pattern.permute.xlu0 0
        %553 = vperm.xlu0 %552, %v369
        %v554 = vpop.permute.xlu0 %553
        %557 = vset.pattern.permute.xlu0 0
        %558 = vperm.xlu0 %557, %v370
        %v559 = vpop.permute.xlu0 %558
        %562 = vset.pattern.permute.xlu0 0
        %563 = vperm.xlu0 %562, %v371
        %v564 = vpop.permute.xlu0 %563
        %567 = vset.pattern.permute.xlu0 0
        %568 = vperm.xlu0 %567, %v372
        %v569 = vpop.permute.xlu0 %568
        %572 = vset.pattern.permute.xlu0 0
        %573 = vperm.xlu0 %572, %v373
        %v574 = vpop.permute.xlu0 %573
        %577 = vset.pattern.permute.xlu0 0
        %578 = vperm.xlu0 %577, %v374
        %v579 = vpop.permute.xlu0 %578
        %582 = vset.pattern.permute.xlu0 0
        %583 = vperm.xlu0 %582, %v375
        %v584 = vpop.permute.xlu0 %583
        %587 = vset.pattern.permute.xlu0 0
        %588 = vperm.xlu0 %587, %v376
        %v589 = vpop.permute.xlu0 %588
        %592 = vset.pattern.permute.xlu0 0
        %593 = vperm.xlu0 %592, %v377
        %v594 = vpop.permute.xlu0 %593
        %597 = vset.pattern.permute.xlu0 0
        %598 = vperm.xlu0 %597, %v378
        %v599 = vpop.permute.xlu0 %598
        %602 = vset.pattern.permute.xlu0 0
        %603 = vperm.xlu0 %602, %v379
        %v604 = vpop.permute.xlu0 %603
        %607 = vset.pattern.permute.xlu0 0
        %608 = vperm.xlu0 %607, %v380
        %v609 = vpop.permute.xlu0 %608
        %612 = vset.pattern.permute.xlu0 0
        %613 = vperm.xlu0 %612, %v381
        %v614 = vpop.permute.xlu0 %613
        %617 = vset.pattern.permute.xlu0 0
        %618 = vperm.xlu0 %617, %v382
        %v619 = vpop.permute.xlu0 %618
        %622 = vset.pattern.permute.xlu0 0
        %623 = vperm.xlu0 %622, %v383
        %v624 = vpop.permute.xlu0 %623
        %v626 = vperm.slane %v424, 0
        %v627 = vperm.slane %v425, 0
        %v628 = vmul.f32 %v429, %v626
        %v629 = vmul.f32 %v429, %v627
        %v630 = vmul.f32 %v434, %v626
        %v631 = vmul.f32 %v434, %v627
        %v632 = vmul.f32 %v439, %v626
        %v633 = vmul.f32 %v439, %v627
        %v634 = vmul.f32 %v444, %v626
        %v635 = vmul.f32 %v444, %v627
        %v636 = vmul.f32 %v449, %v626
        %v637 = vmul.f32 %v449, %v627
        %v638 = vmul.f32 %v454, %v626
        %v639 = vmul.f32 %v454, %v627
        %v640 = vmul.f32 %v459, %v626
        %v641 = vmul.f32 %v459, %v627
        %v642 = vmul.f32 %v464, %v626
        %v643 = vmul.f32 %v464, %v627
        %v644 = vmul.f32 %v469, %v626
        %v645 = vmul.f32 %v469, %v627
        %v646 = vmul.f32 %v474, %v626
        %v647 = vmul.f32 %v474, %v627
        %v648 = vmul.f32 %v479, %v626
        %v649 = vmul.f32 %v479, %v627
        %v650 = vmul.f32 %v484, %v626
        %v651 = vmul.f32 %v484, %v627
        %v652 = vmul.f32 %v489, %v626
        %v653 = vmul.f32 %v489, %v627
        %v654 = vmul.f32 %v494, %v626
        %v655 = vmul.f32 %v494, %v627
        %v656 = vmul.f32 %v499, %v626
        %v657 = vmul.f32 %v499, %v627
        %v658 = vmul.f32 %v504, %v626
        %v659 = vmul.f32 %v504, %v627
        %v660 = vmul.f32 %v509, %v626
        %v661 = vmul.f32 %v509, %v627
        %v662 = vmul.f32 %v514, %v626
        %v663 = vmul.f32 %v514, %v627
        %v664 = vmul.f32 %v519, %v626
        %v665 = vmul.f32 %v519, %v627
        %v666 = vmul.f32 %v524, %v626
        %v667 = vmul.f32 %v524, %v627
        %v668 = vmul.f32 %v529, %v626
        %v669 = vmul.f32 %v529, %v627
        %v670 = vmul.f32 %v534, %v626
        %v671 = vmul.f32 %v534, %v627
        %v672 = vmul.f32 %v539, %v626
        %v673 = vmul.f32 %v539, %v627
        %v674 = vmul.f32 %v544, %v626
        %v675 = vmul.f32 %v544, %v627
        %v676 = vmul.f32 %v549, %v626
        %v677 = vmul.f32 %v549, %v627
        %v678 = vmul.f32 %v554, %v626
        %v679 = vmul.f32 %v554, %v627
        %v680 = vmul.f32 %v559, %v626
        %v681 = vmul.f32 %v559, %v627
        %v682 = vmul.f32 %v564, %v626
        %v683 = vmul.f32 %v564, %v627
        %v684 = vmul.f32 %v569, %v626
        %v685 = vmul.f32 %v569, %v627
        %v686 = vmul.f32 %v574, %v626
        %v687 = vmul.f32 %v574, %v627
        %v688 = vmul.f32 %v579, %v626
        %v689 = vmul.f32 %v579, %v627
        %v690 = vmul.f32 %v584, %v626
        %v691 = vmul.f32 %v584, %v627
        %v692 = vmul.f32 %v589, %v626
        %v693 = vmul.f32 %v589, %v627
        %v694 = vmul.f32 %v594, %v626
        %v695 = vmul.f32 %v594, %v627
        %v696 = vmul.f32 %v599, %v626
        %v697 = vmul.f32 %v599, %v627
        %v698 = vmul.f32 %v604, %v626
        %v699 = vmul.f32 %v604, %v627
        %v700 = vmul.f32 %v609, %v626
        %v701 = vmul.f32 %v609, %v627
        %v702 = vmul.f32 %v614, %v626
        %v703 = vmul.f32 %v614, %v627
        %v704 = vmul.f32 %v619, %v626
        %v705 = vmul.f32 %v619, %v627
        %v706 = vmul.f32 %v624, %v626
        %v707 = vmul.f32 %v624, %v627
        %708 = vset.pattern.permute.xlu0 1
        %709 = vperm.xlu0 %708, %v344
        %v710 = vpop.permute.xlu0 %709
        %712 = vset.pattern.permute.xlu0 1
        %713 = vperm.xlu0 %712, %v345
        %v714 = vpop.permute.xlu0 %713
        %716 = vset.pattern.permute.xlu0 1
        %717 = vperm.xlu0 %716, %v346
        %v718 = vpop.permute.xlu0 %717
        %720 = vset.pattern.permute.xlu0 1
        %721 = vperm.xlu0 %720, %v347
        %v722 = vpop.permute.xlu0 %721
        %724 = vset.pattern.permute.xlu0 1
        %725 = vperm.xlu0 %724, %v348
        %v726 = vpop.permute.xlu0 %725
        %728 = vset.pattern.permute.xlu0 1
        %729 = vperm.xlu0 %728, %v349
        %v730 = vpop.permute.xlu0 %729
        %732 = vset.pattern.permute.xlu0 1
        %733 = vperm.xlu0 %732, %v350
        %v734 = vpop.permute.xlu0 %733
        %736 = vset.pattern.permute.xlu0 1
        %737 = vperm.xlu0 %736, %v351
        %v738 = vpop.permute.xlu0 %737
        %740 = vset.pattern.permute.xlu0 1
        %741 = vperm.xlu0 %740, %v352
        %v742 = vpop.permute.xlu0 %741
        %744 = vset.pattern.permute.xlu0 1
        %745 = vperm.xlu0 %744, %v353
        %v746 = vpop.permute.xlu0 %745
        %748 = vset.pattern.permute.xlu0 1
        %749 = vperm.xlu0 %748, %v354
        %v750 = vpop.permute.xlu0 %749
        %752 = vset.pattern.permute.xlu0 1
        %753 = vperm.xlu0 %752, %v355
        %v754 = vpop.permute.xlu0 %753
        %756 = vset.pattern.permute.xlu0 1
        %757 = vperm.xlu0 %756, %v356
        %v758 = vpop.permute.xlu0 %757
        %760 = vset.pattern.permute.xlu0 1
        %761 = vperm.xlu0 %760, %v357
        %v762 = vpop.permute.xlu0 %761
        %764 = vset.pattern.permute.xlu0 1
        %765 = vperm.xlu0 %764, %v358
        %v766 = vpop.permute.xlu0 %765
        %768 = vset.pattern.permute.xlu0 1
        %769 = vperm.xlu0 %768, %v359
        %v770 = vpop.permute.xlu0 %769
        %772 = vset.pattern.permute.xlu0 1
        %773 = vperm.xlu0 %772, %v360
        %v774 = vpop.permute.xlu0 %773
        %776 = vset.pattern.permute.xlu0 1
        %777 = vperm.xlu0 %776, %v361
        %v778 = vpop.permute.xlu0 %777
        %780 = vset.pattern.permute.xlu0 1
        %781 = vperm.xlu0 %780, %v362
        %v782 = vpop.permute.xlu0 %781
        %784 = vset.pattern.permute.xlu0 1
        %785 = vperm.xlu0 %784, %v363
        %v786 = vpop.permute.xlu0 %785
        %788 = vset.pattern.permute.xlu0 1
        %789 = vperm.xlu0 %788, %v364
        %v790 = vpop.permute.xlu0 %789
        %792 = vset.pattern.permute.xlu0 1
        %793 = vperm.xlu0 %792, %v365
        %v794 = vpop.permute.xlu0 %793
        %796 = vset.pattern.permute.xlu0 1
        %797 = vperm.xlu0 %796, %v366
        %v798 = vpop.permute.xlu0 %797
        %800 = vset.pattern.permute.xlu0 1
        %801 = vperm.xlu0 %800, %v367
        %v802 = vpop.permute.xlu0 %801
        %804 = vset.pattern.permute.xlu0 1
        %805 = vperm.xlu0 %804, %v368
        %v806 = vpop.permute.xlu0 %805
        %808 = vset.pattern.permute.xlu0 1
        %809 = vperm.xlu0 %808, %v369
        %v810 = vpop.permute.xlu0 %809
        %812 = vset.pattern.permute.xlu0 1
        %813 = vperm.xlu0 %812, %v370
        %v814 = vpop.permute.xlu0 %813
        %816 = vset.pattern.permute.xlu0 1
        %817 = vperm.xlu0 %816, %v371
        %v818 = vpop.permute.xlu0 %817
        %820 = vset.pattern.permute.xlu0 1
        %821 = vperm.xlu0 %820, %v372
        %v822 = vpop.permute.xlu0 %821
        %824 = vset.pattern.permute.xlu0 1
        %825 = vperm.xlu0 %824, %v373
        %v826 = vpop.permute.xlu0 %825
        %828 = vset.pattern.permute.xlu0 1
        %829 = vperm.xlu0 %828, %v374
        %v830 = vpop.permute.xlu0 %829
        %832 = vset.pattern.permute.xlu0 1
        %833 = vperm.xlu0 %832, %v375
        %v834 = vpop.permute.xlu0 %833
        %836 = vset.pattern.permute.xlu0 1
        %837 = vperm.xlu0 %836, %v376
        %v838 = vpop.permute.xlu0 %837
        %840 = vset.pattern.permute.xlu0 1
        %841 = vperm.xlu0 %840, %v377
        %v842 = vpop.permute.xlu0 %841
        %844 = vset.pattern.permute.xlu0 1
        %845 = vperm.xlu0 %844, %v378
        %v846 = vpop.permute.xlu0 %845
        %848 = vset.pattern.permute.xlu0 1
        %849 = vperm.xlu0 %848, %v379
        %v850 = vpop.permute.xlu0 %849
        %852 = vset.pattern.permute.xlu0 1
        %853 = vperm.xlu0 %852, %v380
        %v854 = vpop.permute.xlu0 %853
        %856 = vset.pattern.permute.xlu0 1
        %857 = vperm.xlu0 %856, %v381
        %v858 = vpop.permute.xlu0 %857
        %860 = vset.pattern.permute.xlu0 1
        %861 = vperm.xlu0 %860, %v382
        %v862 = vpop.permute.xlu0 %861
        %864 = vset.pattern.permute.xlu0 1
        %865 = vperm.xlu0 %864, %v383
        %v866 = vpop.permute.xlu0 %865
        %v868 = vperm.slane %v424, 1
        %v869 = vperm.slane %v425, 1
        %v870 = vmul.f32 %v710, %v868
        %v871 = vmul.f32 %v710, %v869
        %v872 = vmul.f32 %v714, %v868
        %v873 = vmul.f32 %v714, %v869
        %v874 = vmul.f32 %v718, %v868
        %v875 = vmul.f32 %v718, %v869
        %v876 = vmul.f32 %v722, %v868
        %v877 = vmul.f32 %v722, %v869
        %v878 = vmul.f32 %v726, %v868
        %v879 = vmul.f32 %v726, %v869
        %v880 = vmul.f32 %v730, %v868
        %v881 = vmul.f32 %v730, %v869
        %v882 = vmul.f32 %v734, %v868
        %v883 = vmul.f32 %v734, %v869
        %v884 = vmul.f32 %v738, %v868
        %v885 = vmul.f32 %v738, %v869
        %v886 = vmul.f32 %v742, %v868
        %v887 = vmul.f32 %v742, %v869
        %v888 = vmul.f32 %v746, %v868
        %v889 = vmul.f32 %v746, %v869
        %v890 = vmul.f32 %v750, %v868
        %v891 = vmul.f32 %v750, %v869
        %v892 = vmul.f32 %v754, %v868
        %v893 = vmul.f32 %v754, %v869
        %v894 = vmul.f32 %v758, %v868
        %v895 = vmul.f32 %v758, %v869
        %v896 = vmul.f32 %v762, %v868
        %v897 = vmul.f32 %v762, %v869
        %v898 = vmul.f32 %v766, %v868
        %v899 = vmul.f32 %v766, %v869
        %v900 = vmul.f32 %v770, %v868
        %v901 = vmul.f32 %v770, %v869
        %v902 = vmul.f32 %v774, %v868
        %v903 = vmul.f32 %v774, %v869
        %v904 = vmul.f32 %v778, %v868
        %v905 = vmul.f32 %v778, %v869
        %v906 = vmul.f32 %v782, %v868
        %v907 = vmul.f32 %v782, %v869
        %v908 = vmul.f32 %v786, %v868
        %v909 = vmul.f32 %v786, %v869
        %v910 = vmul.f32 %v790, %v868
        %v911 = vmul.f32 %v790, %v869
        %v912 = vmul.f32 %v794, %v868
        %v913 = vmul.f32 %v794, %v869
        %v914 = vmul.f32 %v798, %v868
        %v915 = vmul.f32 %v798, %v869
        %v916 = vmul.f32 %v802, %v868
        %v917 = vmul.f32 %v802, %v869
        %v918 = vmul.f32 %v806, %v868
        %v919 = vmul.f32 %v806, %v869
        %v920 = vmul.f32 %v810, %v868
        %v921 = vmul.f32 %v810, %v869
        %v922 = vmul.f32 %v814, %v868
        %v923 = vmul.f32 %v814, %v869
        %v924 = vmul.f32 %v818, %v868
        %v925 = vmul.f32 %v818, %v869
        %v926 = vmul.f32 %v822, %v868
        %v927 = vmul.f32 %v822, %v869
        %v928 = vmul.f32 %v826, %v868
        %v929 = vmul.f32 %v826, %v869
        %v930 = vmul.f32 %v830, %v868
        %v931 = vmul.f32 %v830, %v869
        %v932 = vmul.f32 %v834, %v868
        %v933 = vmul.f32 %v834, %v869
        %v934 = vmul.f32 %v838, %v868
        %v935 = vmul.f32 %v838, %v869
        %v936 = vmul.f32 %v842, %v868
        %v937 = vmul.f32 %v842, %v869
        %v938 = vmul.f32 %v846, %v868
        %v939 = vmul.f32 %v846, %v869
        %v940 = vmul.f32 %v850, %v868
        %v941 = vmul.f32 %v850, %v869
        %v942 = vmul.f32 %v854, %v868
        %v943 = vmul.f32 %v854, %v869
        %v944 = vmul.f32 %v858, %v868
        %v945 = vmul.f32 %v858, %v869
        %v946 = vmul.f32 %v862, %v868
        %v947 = vmul.f32 %v862, %v869
        %v948 = vmul.f32 %v866, %v868
        %v949 = vmul.f32 %v866, %v869
        %v950 = vadd.f32 %v628, %v870
        %v951 = vadd.f32 %v629, %v871
        %v952 = vadd.f32 %v630, %v872
        %v953 = vadd.f32 %v631, %v873
        %v954 = vadd.f32 %v632, %v874
        %v955 = vadd.f32 %v633, %v875
        %v956 = vadd.f32 %v634, %v876
        %v957 = vadd.f32 %v635, %v877
        %v958 = vadd.f32 %v636, %v878
        %v959 = vadd.f32 %v637, %v879
        %v960 = vadd.f32 %v638, %v880
        %v961 = vadd.f32 %v639, %v881
        %v962 = vadd.f32 %v640, %v882
        %v963 = vadd.f32 %v641, %v883
        %v964 = vadd.f32 %v642, %v884
        %v965 = vadd.f32 %v643, %v885
        %v966 = vadd.f32 %v644, %v886
        %v967 = vadd.f32 %v645, %v887
        %v968 = vadd.f32 %v646, %v888
        %v969 = vadd.f32 %v647, %v889
        %v970 = vadd.f32 %v648, %v890
        %v971 = vadd.f32 %v649, %v891
        %v972 = vadd.f32 %v650, %v892
        %v973 = vadd.f32 %v651, %v893
        %v974 = vadd.f32 %v652, %v894
        %v975 = vadd.f32 %v653, %v895
        %v976 = vadd.f32 %v654, %v896
        %v977 = vadd.f32 %v655, %v897
        %v978 = vadd.f32 %v656, %v898
        %v979 = vadd.f32 %v657, %v899
        %v980 = vadd.f32 %v658, %v900
        %v981 = vadd.f32 %v659, %v901
        %v982 = vadd.f32 %v660, %v902
        %v983 = vadd.f32 %v661, %v903
        %v984 = vadd.f32 %v662, %v904
        %v985 = vadd.f32 %v663, %v905
        %v986 = vadd.f32 %v664, %v906
        %v987 = vadd.f32 %v665, %v907
        %v988 = vadd.f32 %v666, %v908
        %v989 = vadd.f32 %v667, %v909
        %v990 = vadd.f32 %v668, %v910
        %v991 = vadd.f32 %v669, %v911
        %v992 = vadd.f32 %v670, %v912
        %v993 = vadd.f32 %v671, %v913
        %v994 = vadd.f32 %v672, %v914
        %v995 = vadd.f32 %v673, %v915
        %v996 = vadd.f32 %v674, %v916
        %v997 = vadd.f32 %v675, %v917
        %v998 = vadd.f32 %v676, %v918
        %v999 = vadd.f32 %v677, %v919
        %v1000 = vadd.f32 %v678, %v920
        %v1001 = vadd.f32 %v679, %v921
        %v1002 = vadd.f32 %v680, %v922
        %v1003 = vadd.f32 %v681, %v923
        %v1004 = vadd.f32 %v682, %v924
        %v1005 = vadd.f32 %v683, %v925
        %v1006 = vadd.f32 %v684, %v926
        %v1007 = vadd.f32 %v685, %v927
        %v1008 = vadd.f32 %v686, %v928
        %v1009 = vadd.f32 %v687, %v929
        %v1010 = vadd.f32 %v688, %v930
        %v1011 = vadd.f32 %v689, %v931
        %v1012 = vadd.f32 %v690, %v932
        %v1013 = vadd.f32 %v691, %v933
        %v1014 = vadd.f32 %v692, %v934
        %v1015 = vadd.f32 %v693, %v935
        %v1016 = vadd.f32 %v694, %v936
        %v1017 = vadd.f32 %v695, %v937
        %v1018 = vadd.f32 %v696, %v938
        %v1019 = vadd.f32 %v697, %v939
        %v1020 = vadd.f32 %v698, %v940
        %v1021 = vadd.f32 %v699, %v941
        %v1022 = vadd.f32 %v700, %v942
        %v1023 = vadd.f32 %v701, %v943
        %v1024 = vadd.f32 %v702, %v944
        %v1025 = vadd.f32 %v703, %v945
        %v1026 = vadd.f32 %v704, %v946
        %v1027 = vadd.f32 %v705, %v947
        %v1028 = vadd.f32 %v706, %v948
        %v1029 = vadd.f32 %v707, %v949
        %1030 = vset.pattern.permute.xlu0 2
        %1031 = vperm.xlu0 %1030, %v344
        %v1032 = vpop.permute.xlu0 %1031
        %1034 = vset.pattern.permute.xlu0 2
        %1035 = vperm.xlu0 %1034, %v345
        %v1036 = vpop.permute.xlu0 %1035
        %1038 = vset.pattern.permute.xlu0 2
        %1039 = vperm.xlu0 %1038, %v346
        %v1040 = vpop.permute.xlu0 %1039
        %1042 = vset.pattern.permute.xlu0 2
        %1043 = vperm.xlu0 %1042, %v347
        %v1044 = vpop.permute.xlu0 %1043
        %1046 = vset.pattern.permute.xlu0 2
        %1047 = vperm.xlu0 %1046, %v348
        %v1048 = vpop.permute.xlu0 %1047
        %1050 = vset.pattern.permute.xlu0 2
        %1051 = vperm.xlu0 %1050, %v349
        %v1052 = vpop.permute.xlu0 %1051
        %1054 = vset.pattern.permute.xlu0 2
        %1055 = vperm.xlu0 %1054, %v350
        %v1056 = vpop.permute.xlu0 %1055
        %1058 = vset.pattern.permute.xlu0 2
        %1059 = vperm.xlu0 %1058, %v351
        %v1060 = vpop.permute.xlu0 %1059
        %1062 = vset.pattern.permute.xlu0 2
        %1063 = vperm.xlu0 %1062, %v352
        %v1064 = vpop.permute.xlu0 %1063
        %1066 = vset.pattern.permute.xlu0 2
        %1067 = vperm.xlu0 %1066, %v353
        %v1068 = vpop.permute.xlu0 %1067
        %1070 = vset.pattern.permute.xlu0 2
        %1071 = vperm.xlu0 %1070, %v354
        %v1072 = vpop.permute.xlu0 %1071
        %1074 = vset.pattern.permute.xlu0 2
        %1075 = vperm.xlu0 %1074, %v355
        %v1076 = vpop.permute.xlu0 %1075
        %1078 = vset.pattern.permute.xlu0 2
        %1079 = vperm.xlu0 %1078, %v356
        %v1080 = vpop.permute.xlu0 %1079
        %1082 = vset.pattern.permute.xlu0 2
        %1083 = vperm.xlu0 %1082, %v357
        %v1084 = vpop.permute.xlu0 %1083
        %1086 = vset.pattern.permute.xlu0 2
        %1087 = vperm.xlu0 %1086, %v358
        %v1088 = vpop.permute.xlu0 %1087
        %1090 = vset.pattern.permute.xlu0 2
        %1091 = vperm.xlu0 %1090, %v359
        %v1092 = vpop.permute.xlu0 %1091
        %1094 = vset.pattern.permute.xlu0 2
        %1095 = vperm.xlu0 %1094, %v360
        %v1096 = vpop.permute.xlu0 %1095
        %1098 = vset.pattern.permute.xlu0 2
        %1099 = vperm.xlu0 %1098, %v361
        %v1100 = vpop.permute.xlu0 %1099
        %1102 = vset.pattern.permute.xlu0 2
        %1103 = vperm.xlu0 %1102, %v362
        %v1104 = vpop.permute.xlu0 %1103
        %1106 = vset.pattern.permute.xlu0 2
        %1107 = vperm.xlu0 %1106, %v363
        %v1108 = vpop.permute.xlu0 %1107
        %1110 = vset.pattern.permute.xlu0 2
        %1111 = vperm.xlu0 %1110, %v364
        %v1112 = vpop.permute.xlu0 %1111
        %1114 = vset.pattern.permute.xlu0 2
        %1115 = vperm.xlu0 %1114, %v365
        %v1116 = vpop.permute.xlu0 %1115
        %1118 = vset.pattern.permute.xlu0 2
        %1119 = vperm.xlu0 %1118, %v366
        %v1120 = vpop.permute.xlu0 %1119
        %1122 = vset.pattern.permute.xlu0 2
        %1123 = vperm.xlu0 %1122, %v367
        %v1124 = vpop.permute.xlu0 %1123
        %1126 = vset.pattern.permute.xlu0 2
        %1127 = vperm.xlu0 %1126, %v368
        %v1128 = vpop.permute.xlu0 %1127
        %1130 = vset.pattern.permute.xlu0 2
        %1131 = vperm.xlu0 %1130, %v369
        %v1132 = vpop.permute.xlu0 %1131
        %1134 = vset.pattern.permute.xlu0 2
        %1135 = vperm.xlu0 %1134, %v370
        %v1136 = vpop.permute.xlu0 %1135
        %1138 = vset.pattern.permute.xlu0 2
        %1139 = vperm.xlu0 %1138, %v371
        %v1140 = vpop.permute.xlu0 %1139
        %1142 = vset.pattern.permute.xlu0 2
        %1143 = vperm.xlu0 %1142, %v372
        %v1144 = vpop.permute.xlu0 %1143
        %1146 = vset.pattern.permute.xlu0 2
        %1147 = vperm.xlu0 %1146, %v373
        %v1148 = vpop.permute.xlu0 %1147
        %1150 = vset.pattern.permute.xlu0 2
        %1151 = vperm.xlu0 %1150, %v374
        %v1152 = vpop.permute.xlu0 %1151
        %1154 = vset.pattern.permute.xlu0 2
        %1155 = vperm.xlu0 %1154, %v375
        %v1156 = vpop.permute.xlu0 %1155
        %1158 = vset.pattern.permute.xlu0 2
        %1159 = vperm.xlu0 %1158, %v376
        %v1160 = vpop.permute.xlu0 %1159
        %1162 = vset.pattern.permute.xlu0 2
        %1163 = vperm.xlu0 %1162, %v377
        %v1164 = vpop.permute.xlu0 %1163
        %1166 = vset.pattern.permute.xlu0 2
        %1167 = vperm.xlu0 %1166, %v378
        %v1168 = vpop.permute.xlu0 %1167
        %1170 = vset.pattern.permute.xlu0 2
        %1171 = vperm.xlu0 %1170, %v379
        %v1172 = vpop.permute.xlu0 %1171
        %1174 = vset.pattern.permute.xlu0 2
        %1175 = vperm.xlu0 %1174, %v380
        %v1176 = vpop.permute.xlu0 %1175
        %1178 = vset.pattern.permute.xlu0 2
        %1179 = vperm.xlu0 %1178, %v381
        %v1180 = vpop.permute.xlu0 %1179
        %1182 = vset.pattern.permute.xlu0 2
        %1183 = vperm.xlu0 %1182, %v382
        %v1184 = vpop.permute.xlu0 %1183
        %1186 = vset.pattern.permute.xlu0 2
        %1187 = vperm.xlu0 %1186, %v383
        %v1188 = vpop.permute.xlu0 %1187
        %v1190 = vperm.slane %v424, 2
        %v1191 = vperm.slane %v425, 2
        %v1192 = vmul.f32 %v1032, %v1190
        %v1193 = vmul.f32 %v1032, %v1191
        %v1194 = vmul.f32 %v1036, %v1190
        %v1195 = vmul.f32 %v1036, %v1191
        %v1196 = vmul.f32 %v1040, %v1190
        %v1197 = vmul.f32 %v1040, %v1191
        %v1198 = vmul.f32 %v1044, %v1190
        %v1199 = vmul.f32 %v1044, %v1191
        %v1200 = vmul.f32 %v1048, %v1190
        %v1201 = vmul.f32 %v1048, %v1191
        %v1202 = vmul.f32 %v1052, %v1190
        %v1203 = vmul.f32 %v1052, %v1191
        %v1204 = vmul.f32 %v1056, %v1190
        %v1205 = vmul.f32 %v1056, %v1191
        %v1206 = vmul.f32 %v1060, %v1190
        %v1207 = vmul.f32 %v1060, %v1191
        %v1208 = vmul.f32 %v1064, %v1190
        %v1209 = vmul.f32 %v1064, %v1191
        %v1210 = vmul.f32 %v1068, %v1190
        %v1211 = vmul.f32 %v1068, %v1191
        %v1212 = vmul.f32 %v1072, %v1190
        %v1213 = vmul.f32 %v1072, %v1191
        %v1214 = vmul.f32 %v1076, %v1190
        %v1215 = vmul.f32 %v1076, %v1191
        %v1216 = vmul.f32 %v1080, %v1190
        %v1217 = vmul.f32 %v1080, %v1191
        %v1218 = vmul.f32 %v1084, %v1190
        %v1219 = vmul.f32 %v1084, %v1191
        %v1220 = vmul.f32 %v1088, %v1190
        %v1221 = vmul.f32 %v1088, %v1191
        %v1222 = vmul.f32 %v1092, %v1190
        %v1223 = vmul.f32 %v1092, %v1191
        %v1224 = vmul.f32 %v1096, %v1190
        %v1225 = vmul.f32 %v1096, %v1191
        %v1226 = vmul.f32 %v1100, %v1190
        %v1227 = vmul.f32 %v1100, %v1191
        %v1228 = vmul.f32 %v1104, %v1190
        %v1229 = vmul.f32 %v1104, %v1191
        %v1230 = vmul.f32 %v1108, %v1190
        %v1231 = vmul.f32 %v1108, %v1191
        %v1232 = vmul.f32 %v1112, %v1190
        %v1233 = vmul.f32 %v1112, %v1191
        %v1234 = vmul.f32 %v1116, %v1190
        %v1235 = vmul.f32 %v1116, %v1191
        %v1236 = vmul.f32 %v1120, %v1190
        %v1237 = vmul.f32 %v1120, %v1191
        %v1238 = vmul.f32 %v1124, %v1190
        %v1239 = vmul.f32 %v1124, %v1191
        %v1240 = vmul.f32 %v1128, %v1190
        %v1241 = vmul.f32 %v1128, %v1191
        %v1242 = vmul.f32 %v1132, %v1190
        %v1243 = vmul.f32 %v1132, %v1191
        %v1244 = vmul.f32 %v1136, %v1190
        %v1245 = vmul.f32 %v1136, %v1191
        %v1246 = vmul.f32 %v1140, %v1190
        %v1247 = vmul.f32 %v1140, %v1191
        %v1248 = vmul.f32 %v1144, %v1190
        %v1249 = vmul.f32 %v1144, %v1191
        %v1250 = vmul.f32 %v1148, %v1190
        %v1251 = vmul.f32 %v1148, %v1191
        %v1252 = vmul.f32 %v1152, %v1190
        %v1253 = vmul.f32 %v1152, %v1191
        %v1254 = vmul.f32 %v1156, %v1190
        %v1255 = vmul.f32 %v1156, %v1191
        %v1256 = vmul.f32 %v1160, %v1190
        %v1257 = vmul.f32 %v1160, %v1191
        %v1258 = vmul.f32 %v1164, %v1190
        %v1259 = vmul.f32 %v1164, %v1191
        %v1260 = vmul.f32 %v1168, %v1190
        %v1261 = vmul.f32 %v1168, %v1191
        %v1262 = vmul.f32 %v1172, %v1190
        %v1263 = vmul.f32 %v1172, %v1191
        %v1264 = vmul.f32 %v1176, %v1190
        %v1265 = vmul.f32 %v1176, %v1191
        %v1266 = vmul.f32 %v1180, %v1190
        %v1267 = vmul.f32 %v1180, %v1191
        %v1268 = vmul.f32 %v1184, %v1190
        %v1269 = vmul.f32 %v1184, %v1191
        %v1270 = vmul.f32 %v1188, %v1190
        %v1271 = vmul.f32 %v1188, %v1191
        %v1272 = vadd.f32 %v950, %v1192
        %v1273 = vadd.f32 %v951, %v1193
        %v1274 = vadd.f32 %v952, %v1194
        %v1275 = vadd.f32 %v953, %v1195
        %v1276 = vadd.f32 %v954, %v1196
        %v1277 = vadd.f32 %v955, %v1197
        %v1278 = vadd.f32 %v956, %v1198
        %v1279 = vadd.f32 %v957, %v1199
        %v1280 = vadd.f32 %v958, %v1200
        %v1281 = vadd.f32 %v959, %v1201
        %v1282 = vadd.f32 %v960, %v1202
        %v1283 = vadd.f32 %v961, %v1203
        %v1284 = vadd.f32 %v962, %v1204
        %v1285 = vadd.f32 %v963, %v1205
        %v1286 = vadd.f32 %v964, %v1206
        %v1287 = vadd.f32 %v965, %v1207
        %v1288 = vadd.f32 %v966, %v1208
        %v1289 = vadd.f32 %v967, %v1209
        %v1290 = vadd.f32 %v968, %v1210
        %v1291 = vadd.f32 %v969, %v1211
        %v1292 = vadd.f32 %v970, %v1212
        %v1293 = vadd.f32 %v971, %v1213
        %v1294 = vadd.f32 %v972, %v1214
        %v1295 = vadd.f32 %v973, %v1215
        %v1296 = vadd.f32 %v974, %v1216
        %v1297 = vadd.f32 %v975, %v1217
        %v1298 = vadd.f32 %v976, %v1218
        %v1299 = vadd.f32 %v977, %v1219
        %v1300 = vadd.f32 %v978, %v1220
        %v1301 = vadd.f32 %v979, %v1221
        %v1302 = vadd.f32 %v980, %v1222
        %v1303 = vadd.f32 %v981, %v1223
        %v1304 = vadd.f32 %v982, %v1224
        %v1305 = vadd.f32 %v983, %v1225
        %v1306 = vadd.f32 %v984, %v1226
        %v1307 = vadd.f32 %v985, %v1227
        %v1308 = vadd.f32 %v986, %v1228
        %v1309 = vadd.f32 %v987, %v1229
        %v1310 = vadd.f32 %v988, %v1230
        %v1311 = vadd.f32 %v989, %v1231
        %v1312 = vadd.f32 %v990, %v1232
        %v1313 = vadd.f32 %v991, %v1233
        %v1314 = vadd.f32 %v992, %v1234
        %v1315 = vadd.f32 %v993, %v1235
        %v1316 = vadd.f32 %v994, %v1236
        %v1317 = vadd.f32 %v995, %v1237
        %v1318 = vadd.f32 %v996, %v1238
        %v1319 = vadd.f32 %v997, %v1239
        %v1320 = vadd.f32 %v998, %v1240
        %v1321 = vadd.f32 %v999, %v1241
        %v1322 = vadd.f32 %v1000, %v1242
        %v1323 = vadd.f32 %v1001, %v1243
        %v1324 = vadd.f32 %v1002, %v1244
        %v1325 = vadd.f32 %v1003, %v1245
        %v1326 = vadd.f32 %v1004, %v1246
        %v1327 = vadd.f32 %v1005, %v1247
        %v1328 = vadd.f32 %v1006, %v1248
        %v1329 = vadd.f32 %v1007, %v1249
        %v1330 = vadd.f32 %v1008, %v1250
        %v1331 = vadd.f32 %v1009, %v1251
        %v1332 = vadd.f32 %v1010, %v1252
        %v1333 = vadd.f32 %v1011, %v1253
        %v1334 = vadd.f32 %v1012, %v1254
        %v1335 = vadd.f32 %v1013, %v1255
        %v1336 = vadd.f32 %v1014, %v1256
        %v1337 = vadd.f32 %v1015, %v1257
        %v1338 = vadd.f32 %v1016, %v1258
        %v1339 = vadd.f32 %v1017, %v1259
        %v1340 = vadd.f32 %v1018, %v1260
        %v1341 = vadd.f32 %v1019, %v1261
        %v1342 = vadd.f32 %v1020, %v1262
        %v1343 = vadd.f32 %v1021, %v1263
        %v1344 = vadd.f32 %v1022, %v1264
        %v1345 = vadd.f32 %v1023, %v1265
        %v1346 = vadd.f32 %v1024, %v1266
        %v1347 = vadd.f32 %v1025, %v1267
        %v1348 = vadd.f32 %v1026, %v1268
        %v1349 = vadd.f32 %v1027, %v1269
        %v1350 = vadd.f32 %v1028, %v1270
        %v1351 = vadd.f32 %v1029, %v1271
        %1352 = vset.pattern.permute.xlu0 3
        %1353 = vperm.xlu0 %1352, %v344
        %v1354 = vpop.permute.xlu0 %1353
        %1356 = vset.pattern.permute.xlu0 3
        %1357 = vperm.xlu0 %1356, %v345
        %v1358 = vpop.permute.xlu0 %1357
        %1360 = vset.pattern.permute.xlu0 3
        %1361 = vperm.xlu0 %1360, %v346
        %v1362 = vpop.permute.xlu0 %1361
        %1364 = vset.pattern.permute.xlu0 3
        %1365 = vperm.xlu0 %1364, %v347
        %v1366 = vpop.permute.xlu0 %1365
        %1368 = vset.pattern.permute.xlu0 3
        %1369 = vperm.xlu0 %1368, %v348
        %v1370 = vpop.permute.xlu0 %1369
        %1372 = vset.pattern.permute.xlu0 3
        %1373 = vperm.xlu0 %1372, %v349
        %v1374 = vpop.permute.xlu0 %1373
        %1376 = vset.pattern.permute.xlu0 3
        %1377 = vperm.xlu0 %1376, %v350
        %v1378 = vpop.permute.xlu0 %1377
        %1380 = vset.pattern.permute.xlu0 3
        %1381 = vperm.xlu0 %1380, %v351
        %v1382 = vpop.permute.xlu0 %1381
        %1384 = vset.pattern.permute.xlu0 3
        %1385 = vperm.xlu0 %1384, %v352
        %v1386 = vpop.permute.xlu0 %1385
        %1388 = vset.pattern.permute.xlu0 3
        %1389 = vperm.xlu0 %1388, %v353
        %v1390 = vpop.permute.xlu0 %1389
        %1392 = vset.pattern.permute.xlu0 3
        %1393 = vperm.xlu0 %1392, %v354
        %v1394 = vpop.permute.xlu0 %1393
        %1396 = vset.pattern.permute.xlu0 3
        %1397 = vperm.xlu0 %1396, %v355
        %v1398 = vpop.permute.xlu0 %1397
        %1400 = vset.pattern.permute.xlu0 3
        %1401 = vperm.xlu0 %1400, %v356
        %v1402 = vpop.permute.xlu0 %1401
        %1404 = vset.pattern.permute.xlu0 3
        %1405 = vperm.xlu0 %1404, %v357
        %v1406 = vpop.permute.xlu0 %1405
        %1408 = vset.pattern.permute.xlu0 3
        %1409 = vperm.xlu0 %1408, %v358
        %v1410 = vpop.permute.xlu0 %1409
        %1412 = vset.pattern.permute.xlu0 3
        %1413 = vperm.xlu0 %1412, %v359
        %v1414 = vpop.permute.xlu0 %1413
        %1416 = vset.pattern.permute.xlu0 3
        %1417 = vperm.xlu0 %1416, %v360
        %v1418 = vpop.permute.xlu0 %1417
        %1420 = vset.pattern.permute.xlu0 3
        %1421 = vperm.xlu0 %1420, %v361
        %v1422 = vpop.permute.xlu0 %1421
        %1424 = vset.pattern.permute.xlu0 3
        %1425 = vperm.xlu0 %1424, %v362
        %v1426 = vpop.permute.xlu0 %1425
        %1428 = vset.pattern.permute.xlu0 3
        %1429 = vperm.xlu0 %1428, %v363
        %v1430 = vpop.permute.xlu0 %1429
        %1432 = vset.pattern.permute.xlu0 3
        %1433 = vperm.xlu0 %1432, %v364
        %v1434 = vpop.permute.xlu0 %1433
        %1436 = vset.pattern.permute.xlu0 3
        %1437 = vperm.xlu0 %1436, %v365
        %v1438 = vpop.permute.xlu0 %1437
        %1440 = vset.pattern.permute.xlu0 3
        %1441 = vperm.xlu0 %1440, %v366
        %v1442 = vpop.permute.xlu0 %1441
        %1444 = vset.pattern.permute.xlu0 3
        %1445 = vperm.xlu0 %1444, %v367
        %v1446 = vpop.permute.xlu0 %1445
        %1448 = vset.pattern.permute.xlu0 3
        %1449 = vperm.xlu0 %1448, %v368
        %v1450 = vpop.permute.xlu0 %1449
        %1452 = vset.pattern.permute.xlu0 3
        %1453 = vperm.xlu0 %1452, %v369
        %v1454 = vpop.permute.xlu0 %1453
        %1456 = vset.pattern.permute.xlu0 3
        %1457 = vperm.xlu0 %1456, %v370
        %v1458 = vpop.permute.xlu0 %1457
        %1460 = vset.pattern.permute.xlu0 3
        %1461 = vperm.xlu0 %1460, %v371
        %v1462 = vpop.permute.xlu0 %1461
        %1464 = vset.pattern.permute.xlu0 3
        %1465 = vperm.xlu0 %1464, %v372
        %v1466 = vpop.permute.xlu0 %1465
        %1468 = vset.pattern.permute.xlu0 3
        %1469 = vperm.xlu0 %1468, %v373
        %v1470 = vpop.permute.xlu0 %1469
        %1472 = vset.pattern.permute.xlu0 3
        %1473 = vperm.xlu0 %1472, %v374
        %v1474 = vpop.permute.xlu0 %1473
        %1476 = vset.pattern.permute.xlu0 3
        %1477 = vperm.xlu0 %1476, %v375
        %v1478 = vpop.permute.xlu0 %1477
        %1480 = vset.pattern.permute.xlu0 3
        %1481 = vperm.xlu0 %1480, %v376
        %v1482 = vpop.permute.xlu0 %1481
        %1484 = vset.pattern.permute.xlu0 3
        %1485 = vperm.xlu0 %1484, %v377
        %v1486 = vpop.permute.xlu0 %1485
        %1488 = vset.pattern.permute.xlu0 3
        %1489 = vperm.xlu0 %1488, %v378
        %v1490 = vpop.permute.xlu0 %1489
        %1492 = vset.pattern.permute.xlu0 3
        %1493 = vperm.xlu0 %1492, %v379
        %v1494 = vpop.permute.xlu0 %1493
        %1496 = vset.pattern.permute.xlu0 3
        %1497 = vperm.xlu0 %1496, %v380
        %v1498 = vpop.permute.xlu0 %1497
        %1500 = vset.pattern.permute.xlu0 3
        %1501 = vperm.xlu0 %1500, %v381
        %v1502 = vpop.permute.xlu0 %1501
        %1504 = vset.pattern.permute.xlu0 3
        %1505 = vperm.xlu0 %1504, %v382
        %v1506 = vpop.permute.xlu0 %1505
        %1508 = vset.pattern.permute.xlu0 3
        %1509 = vperm.xlu0 %1508, %v383
        %v1510 = vpop.permute.xlu0 %1509
        %v1512 = vperm.slane %v424, 3
        %v1513 = vperm.slane %v425, 3
        %v1514 = vmul.f32 %v1354, %v1512
        %v1515 = vmul.f32 %v1354, %v1513
        %v1516 = vmul.f32 %v1358, %v1512
        %v1517 = vmul.f32 %v1358, %v1513
        %v1518 = vmul.f32 %v1362, %v1512
        %v1519 = vmul.f32 %v1362, %v1513
        %v1520 = vmul.f32 %v1366, %v1512
        %v1521 = vmul.f32 %v1366, %v1513
        %v1522 = vmul.f32 %v1370, %v1512
        %v1523 = vmul.f32 %v1370, %v1513
        %v1524 = vmul.f32 %v1374, %v1512
        %v1525 = vmul.f32 %v1374, %v1513
        %v1526 = vmul.f32 %v1378, %v1512
        %v1527 = vmul.f32 %v1378, %v1513
        %v1528 = vmul.f32 %v1382, %v1512
        %v1529 = vmul.f32 %v1382, %v1513
        %v1530 = vmul.f32 %v1386, %v1512
        %v1531 = vmul.f32 %v1386, %v1513
        %v1532 = vmul.f32 %v1390, %v1512
        %v1533 = vmul.f32 %v1390, %v1513
        %v1534 = vmul.f32 %v1394, %v1512
        %v1535 = vmul.f32 %v1394, %v1513
        %v1536 = vmul.f32 %v1398, %v1512
        %v1537 = vmul.f32 %v1398, %v1513
        %v1538 = vmul.f32 %v1402, %v1512
        %v1539 = vmul.f32 %v1402, %v1513
        %v1540 = vmul.f32 %v1406, %v1512
        %v1541 = vmul.f32 %v1406, %v1513
        %v1542 = vmul.f32 %v1410, %v1512
        %v1543 = vmul.f32 %v1410, %v1513
        %v1544 = vmul.f32 %v1414, %v1512
        %v1545 = vmul.f32 %v1414, %v1513
        %v1546 = vmul.f32 %v1418, %v1512
        %v1547 = vmul.f32 %v1418, %v1513
        %v1548 = vmul.f32 %v1422, %v1512
        %v1549 = vmul.f32 %v1422, %v1513
        %v1550 = vmul.f32 %v1426, %v1512
        %v1551 = vmul.f32 %v1426, %v1513
        %v1552 = vmul.f32 %v1430, %v1512
        %v1553 = vmul.f32 %v1430, %v1513
        %v1554 = vmul.f32 %v1434, %v1512
        %v1555 = vmul.f32 %v1434, %v1513
        %v1556 = vmul.f32 %v1438, %v1512
        %v1557 = vmul.f32 %v1438, %v1513
        %v1558 = vmul.f32 %v1442, %v1512
        %v1559 = vmul.f32 %v1442, %v1513
        %v1560 = vmul.f32 %v1446, %v1512
        %v1561 = vmul.f32 %v1446, %v1513
        %v1562 = vmul.f32 %v1450, %v1512
        %v1563 = vmul.f32 %v1450, %v1513
        %v1564 = vmul.f32 %v1454, %v1512
        %v1565 = vmul.f32 %v1454, %v1513
        %v1566 = vmul.f32 %v1458, %v1512
        %v1567 = vmul.f32 %v1458, %v1513
        %v1568 = vmul.f32 %v1462, %v1512
        %v1569 = vmul.f32 %v1462, %v1513
        %v1570 = vmul.f32 %v1466, %v1512
        %v1571 = vmul.f32 %v1466, %v1513
        %v1572 = vmul.f32 %v1470, %v1512
        %v1573 = vmul.f32 %v1470, %v1513
        %v1574 = vmul.f32 %v1474, %v1512
        %v1575 = vmul.f32 %v1474, %v1513
        %v1576 = vmul.f32 %v1478, %v1512
        %v1577 = vmul.f32 %v1478, %v1513
        %v1578 = vmul.f32 %v1482, %v1512
        %v1579 = vmul.f32 %v1482, %v1513
        %v1580 = vmul.f32 %v1486, %v1512
        %v1581 = vmul.f32 %v1486, %v1513
        %v1582 = vmul.f32 %v1490, %v1512
        %v1583 = vmul.f32 %v1490, %v1513
        %v1584 = vmul.f32 %v1494, %v1512
        %v1585 = vmul.f32 %v1494, %v1513
        %v1586 = vmul.f32 %v1498, %v1512
        %v1587 = vmul.f32 %v1498, %v1513
        %v1588 = vmul.f32 %v1502, %v1512
        %v1589 = vmul.f32 %v1502, %v1513
        %v1590 = vmul.f32 %v1506, %v1512
        %v1591 = vmul.f32 %v1506, %v1513
        %v1592 = vmul.f32 %v1510, %v1512
        %v1593 = vmul.f32 %v1510, %v1513
        %v1594 = vadd.f32 %v1272, %v1514
        %v1595 = vadd.f32 %v1273, %v1515
        %v1596 = vadd.f32 %v1274, %v1516
        %v1597 = vadd.f32 %v1275, %v1517
        %v1598 = vadd.f32 %v1276, %v1518
        %v1599 = vadd.f32 %v1277, %v1519
        %v1600 = vadd.f32 %v1278, %v1520
        %v1601 = vadd.f32 %v1279, %v1521
        %v1602 = vadd.f32 %v1280, %v1522
        %v1603 = vadd.f32 %v1281, %v1523
        %v1604 = vadd.f32 %v1282, %v1524
        %v1605 = vadd.f32 %v1283, %v1525
        %v1606 = vadd.f32 %v1284, %v1526
        %v1607 = vadd.f32 %v1285, %v1527
        %v1608 = vadd.f32 %v1286, %v1528
        %v1609 = vadd.f32 %v1287, %v1529
        %v1610 = vadd.f32 %v1288, %v1530
        %v1611 = vadd.f32 %v1289, %v1531
        %v1612 = vadd.f32 %v1290, %v1532
        %v1613 = vadd.f32 %v1291, %v1533
        %v1614 = vadd.f32 %v1292, %v1534
        %v1615 = vadd.f32 %v1293, %v1535
        %v1616 = vadd.f32 %v1294, %v1536
        %v1617 = vadd.f32 %v1295, %v1537
        %v1618 = vadd.f32 %v1296, %v1538
        %v1619 = vadd.f32 %v1297, %v1539
        %v1620 = vadd.f32 %v1298, %v1540
        %v1621 = vadd.f32 %v1299, %v1541
        %v1622 = vadd.f32 %v1300, %v1542
        %v1623 = vadd.f32 %v1301, %v1543
        %v1624 = vadd.f32 %v1302, %v1544
        %v1625 = vadd.f32 %v1303, %v1545
        %v1626 = vadd.f32 %v1304, %v1546
        %v1627 = vadd.f32 %v1305, %v1547
        %v1628 = vadd.f32 %v1306, %v1548
        %v1629 = vadd.f32 %v1307, %v1549
        %v1630 = vadd.f32 %v1308, %v1550
        %v1631 = vadd.f32 %v1309, %v1551
        %v1632 = vadd.f32 %v1310, %v1552
        %v1633 = vadd.f32 %v1311, %v1553
        %v1634 = vadd.f32 %v1312, %v1554
        %v1635 = vadd.f32 %v1313, %v1555
        %v1636 = vadd.f32 %v1314, %v1556
        %v1637 = vadd.f32 %v1315, %v1557
        %v1638 = vadd.f32 %v1316, %v1558
        %v1639 = vadd.f32 %v1317, %v1559
        %v1640 = vadd.f32 %v1318, %v1560
        %v1641 = vadd.f32 %v1319, %v1561
        %v1642 = vadd.f32 %v1320, %v1562
        %v1643 = vadd.f32 %v1321, %v1563
        %v1644 = vadd.f32 %v1322, %v1564
        %v1645 = vadd.f32 %v1323, %v1565
        %v1646 = vadd.f32 %v1324, %v1566
        %v1647 = vadd.f32 %v1325, %v1567
        %v1648 = vadd.f32 %v1326, %v1568
        %v1649 = vadd.f32 %v1327, %v1569
        %v1650 = vadd.f32 %v1328, %v1570
        %v1651 = vadd.f32 %v1329, %v1571
        %v1652 = vadd.f32 %v1330, %v1572
        %v1653 = vadd.f32 %v1331, %v1573
        %v1654 = vadd.f32 %v1332, %v1574
        %v1655 = vadd.f32 %v1333, %v1575
        %v1656 = vadd.f32 %v1334, %v1576
        %v1657 = vadd.f32 %v1335, %v1577
        %v1658 = vadd.f32 %v1336, %v1578
        %v1659 = vadd.f32 %v1337, %v1579
        %v1660 = vadd.f32 %v1338, %v1580
        %v1661 = vadd.f32 %v1339, %v1581
        %v1662 = vadd.f32 %v1340, %v1582
        %v1663 = vadd.f32 %v1341, %v1583
        %v1664 = vadd.f32 %v1342, %v1584
        %v1665 = vadd.f32 %v1343, %v1585
        %v1666 = vadd.f32 %v1344, %v1586
        %v1667 = vadd.f32 %v1345, %v1587
        %v1668 = vadd.f32 %v1346, %v1588
        %v1669 = vadd.f32 %v1347, %v1589
        %v1670 = vadd.f32 %v1348, %v1590
        %v1671 = vadd.f32 %v1349, %v1591
        %v1672 = vadd.f32 %v1350, %v1592
        %v1673 = vadd.f32 %v1351, %v1593
        %1674 = vset.pattern.permute.xlu0 4
        %1675 = vperm.xlu0 %1674, %v344
        %v1676 = vpop.permute.xlu0 %1675
        %1678 = vset.pattern.permute.xlu0 4
        %1679 = vperm.xlu0 %1678, %v345
        %v1680 = vpop.permute.xlu0 %1679
        %1682 = vset.pattern.permute.xlu0 4
        %1683 = vperm.xlu0 %1682, %v346
        %v1684 = vpop.permute.xlu0 %1683
        %1686 = vset.pattern.permute.xlu0 4
        %1687 = vperm.xlu0 %1686, %v347
        %v1688 = vpop.permute.xlu0 %1687
        %1690 = vset.pattern.permute.xlu0 4
        %1691 = vperm.xlu0 %1690, %v348
        %v1692 = vpop.permute.xlu0 %1691
        %1694 = vset.pattern.permute.xlu0 4
        %1695 = vperm.xlu0 %1694, %v349
        %v1696 = vpop.permute.xlu0 %1695
        %1698 = vset.pattern.permute.xlu0 4
        %1699 = vperm.xlu0 %1698, %v350
        %v1700 = vpop.permute.xlu0 %1699
        %1702 = vset.pattern.permute.xlu0 4
        %1703 = vperm.xlu0 %1702, %v351
        %v1704 = vpop.permute.xlu0 %1703
        %1706 = vset.pattern.permute.xlu0 4
        %1707 = vperm.xlu0 %1706, %v352
        %v1708 = vpop.permute.xlu0 %1707
        %1710 = vset.pattern.permute.xlu0 4
        %1711 = vperm.xlu0 %1710, %v353
        %v1712 = vpop.permute.xlu0 %1711
        %1714 = vset.pattern.permute.xlu0 4
        %1715 = vperm.xlu0 %1714, %v354
        %v1716 = vpop.permute.xlu0 %1715
        %1718 = vset.pattern.permute.xlu0 4
        %1719 = vperm.xlu0 %1718, %v355
        %v1720 = vpop.permute.xlu0 %1719
        %1722 = vset.pattern.permute.xlu0 4
        %1723 = vperm.xlu0 %1722, %v356
        %v1724 = vpop.permute.xlu0 %1723
        %1726 = vset.pattern.permute.xlu0 4
        %1727 = vperm.xlu0 %1726, %v357
        %v1728 = vpop.permute.xlu0 %1727
        %1730 = vset.pattern.permute.xlu0 4
        %1731 = vperm.xlu0 %1730, %v358
        %v1732 = vpop.permute.xlu0 %1731
        %1734 = vset.pattern.permute.xlu0 4
        %1735 = vperm.xlu0 %1734, %v359
        %v1736 = vpop.permute.xlu0 %1735
        %1738 = vset.pattern.permute.xlu0 4
        %1739 = vperm.xlu0 %1738, %v360
        %v1740 = vpop.permute.xlu0 %1739
        %1742 = vset.pattern.permute.xlu0 4
        %1743 = vperm.xlu0 %1742, %v361
        %v1744 = vpop.permute.xlu0 %1743
        %1746 = vset.pattern.permute.xlu0 4
        %1747 = vperm.xlu0 %1746, %v362
        %v1748 = vpop.permute.xlu0 %1747
        %1750 = vset.pattern.permute.xlu0 4
        %1751 = vperm.xlu0 %1750, %v363
        %v1752 = vpop.permute.xlu0 %1751
        %1754 = vset.pattern.permute.xlu0 4
        %1755 = vperm.xlu0 %1754, %v364
        %v1756 = vpop.permute.xlu0 %1755
        %1758 = vset.pattern.permute.xlu0 4
        %1759 = vperm.xlu0 %1758, %v365
        %v1760 = vpop.permute.xlu0 %1759
        %1762 = vset.pattern.permute.xlu0 4
        %1763 = vperm.xlu0 %1762, %v366
        %v1764 = vpop.permute.xlu0 %1763
        %1766 = vset.pattern.permute.xlu0 4
        %1767 = vperm.xlu0 %1766, %v367
        %v1768 = vpop.permute.xlu0 %1767
        %1770 = vset.pattern.permute.xlu0 4
        %1771 = vperm.xlu0 %1770, %v368
        %v1772 = vpop.permute.xlu0 %1771
        %1774 = vset.pattern.permute.xlu0 4
        %1775 = vperm.xlu0 %1774, %v369
        %v1776 = vpop.permute.xlu0 %1775
        %1778 = vset.pattern.permute.xlu0 4
        %1779 = vperm.xlu0 %1778, %v370
        %v1780 = vpop.permute.xlu0 %1779
        %1782 = vset.pattern.permute.xlu0 4
        %1783 = vperm.xlu0 %1782, %v371
        %v1784 = vpop.permute.xlu0 %1783
        %1786 = vset.pattern.permute.xlu0 4
        %1787 = vperm.xlu0 %1786, %v372
        %v1788 = vpop.permute.xlu0 %1787
        %1790 = vset.pattern.permute.xlu0 4
        %1791 = vperm.xlu0 %1790, %v373
        %v1792 = vpop.permute.xlu0 %1791
        %1794 = vset.pattern.permute.xlu0 4
        %1795 = vperm.xlu0 %1794, %v374
        %v1796 = vpop.permute.xlu0 %1795
        %1798 = vset.pattern.permute.xlu0 4
        %1799 = vperm.xlu0 %1798, %v375
        %v1800 = vpop.permute.xlu0 %1799
        %1802 = vset.pattern.permute.xlu0 4
        %1803 = vperm.xlu0 %1802, %v376
        %v1804 = vpop.permute.xlu0 %1803
        %1806 = vset.pattern.permute.xlu0 4
        %1807 = vperm.xlu0 %1806, %v377
        %v1808 = vpop.permute.xlu0 %1807
        %1810 = vset.pattern.permute.xlu0 4
        %1811 = vperm.xlu0 %1810, %v378
        %v1812 = vpop.permute.xlu0 %1811
        %1814 = vset.pattern.permute.xlu0 4
        %1815 = vperm.xlu0 %1814, %v379
        %v1816 = vpop.permute.xlu0 %1815
        %1818 = vset.pattern.permute.xlu0 4
        %1819 = vperm.xlu0 %1818, %v380
        %v1820 = vpop.permute.xlu0 %1819
        %1822 = vset.pattern.permute.xlu0 4
        %1823 = vperm.xlu0 %1822, %v381
        %v1824 = vpop.permute.xlu0 %1823
        %1826 = vset.pattern.permute.xlu0 4
        %1827 = vperm.xlu0 %1826, %v382
        %v1828 = vpop.permute.xlu0 %1827
        %1830 = vset.pattern.permute.xlu0 4
        %1831 = vperm.xlu0 %1830, %v383
        %v1832 = vpop.permute.xlu0 %1831
        %v1834 = vperm.slane %v424, 4
        %v1835 = vperm.slane %v425, 4
        %v1836 = vmul.f32 %v1676, %v1834
        %v1837 = vmul.f32 %v1676, %v1835
        %v1838 = vmul.f32 %v1680, %v1834
        %v1839 = vmul.f32 %v1680, %v1835
        %v1840 = vmul.f32 %v1684, %v1834
        %v1841 = vmul.f32 %v1684, %v1835
        %v1842 = vmul.f32 %v1688, %v1834
        %v1843 = vmul.f32 %v1688, %v1835
        %v1844 = vmul.f32 %v1692, %v1834
        %v1845 = vmul.f32 %v1692, %v1835
        %v1846 = vmul.f32 %v1696, %v1834
        %v1847 = vmul.f32 %v1696, %v1835
        %v1848 = vmul.f32 %v1700, %v1834
        %v1849 = vmul.f32 %v1700, %v1835
        %v1850 = vmul.f32 %v1704, %v1834
        %v1851 = vmul.f32 %v1704, %v1835
        %v1852 = vmul.f32 %v1708, %v1834
        %v1853 = vmul.f32 %v1708, %v1835
        %v1854 = vmul.f32 %v1712, %v1834
        %v1855 = vmul.f32 %v1712, %v1835
        %v1856 = vmul.f32 %v1716, %v1834
        %v1857 = vmul.f32 %v1716, %v1835
        %v1858 = vmul.f32 %v1720, %v1834
        %v1859 = vmul.f32 %v1720, %v1835
        %v1860 = vmul.f32 %v1724, %v1834
        %v1861 = vmul.f32 %v1724, %v1835
        %v1862 = vmul.f32 %v1728, %v1834
        %v1863 = vmul.f32 %v1728, %v1835
        %v1864 = vmul.f32 %v1732, %v1834
        %v1865 = vmul.f32 %v1732, %v1835
        %v1866 = vmul.f32 %v1736, %v1834
        %v1867 = vmul.f32 %v1736, %v1835
        %v1868 = vmul.f32 %v1740, %v1834
        %v1869 = vmul.f32 %v1740, %v1835
        %v1870 = vmul.f32 %v1744, %v1834
        %v1871 = vmul.f32 %v1744, %v1835
        %v1872 = vmul.f32 %v1748, %v1834
        %v1873 = vmul.f32 %v1748, %v1835
        %v1874 = vmul.f32 %v1752, %v1834
        %v1875 = vmul.f32 %v1752, %v1835
        %v1876 = vmul.f32 %v1756, %v1834
        %v1877 = vmul.f32 %v1756, %v1835
        %v1878 = vmul.f32 %v1760, %v1834
        %v1879 = vmul.f32 %v1760, %v1835
        %v1880 = vmul.f32 %v1764, %v1834
        %v1881 = vmul.f32 %v1764, %v1835
        %v1882 = vmul.f32 %v1768, %v1834
        %v1883 = vmul.f32 %v1768, %v1835
        %v1884 = vmul.f32 %v1772, %v1834
        %v1885 = vmul.f32 %v1772, %v1835
        %v1886 = vmul.f32 %v1776, %v1834
        %v1887 = vmul.f32 %v1776, %v1835
        %v1888 = vmul.f32 %v1780, %v1834
        %v1889 = vmul.f32 %v1780, %v1835
        %v1890 = vmul.f32 %v1784, %v1834
        %v1891 = vmul.f32 %v1784, %v1835
        %v1892 = vmul.f32 %v1788, %v1834
        %v1893 = vmul.f32 %v1788, %v1835
        %v1894 = vmul.f32 %v1792, %v1834
        %v1895 = vmul.f32 %v1792, %v1835
        %v1896 = vmul.f32 %v1796, %v1834
        %v1897 = vmul.f32 %v1796, %v1835
        %v1898 = vmul.f32 %v1800, %v1834
        %v1899 = vmul.f32 %v1800, %v1835
        %v1900 = vmul.f32 %v1804, %v1834
        %v1901 = vmul.f32 %v1804, %v1835
        %v1902 = vmul.f32 %v1808, %v1834
        %v1903 = vmul.f32 %v1808, %v1835
        %v1904 = vmul.f32 %v1812, %v1834
        %v1905 = vmul.f32 %v1812, %v1835
        %v1906 = vmul.f32 %v1816, %v1834
        %v1907 = vmul.f32 %v1816, %v1835
        %v1908 = vmul.f32 %v1820, %v1834
        %v1909 = vmul.f32 %v1820, %v1835
        %v1910 = vmul.f32 %v1824, %v1834
        %v1911 = vmul.f32 %v1824, %v1835
        %v1912 = vmul.f32 %v1828, %v1834
        %v1913 = vmul.f32 %v1828, %v1835
        %v1914 = vmul.f32 %v1832, %v1834
        %v1915 = vmul.f32 %v1832, %v1835
        %v1916 = vadd.f32 %v1594, %v1836
        %v1917 = vadd.f32 %v1595, %v1837
        %v1918 = vadd.f32 %v1596, %v1838
        %v1919 = vadd.f32 %v1597, %v1839
        %v1920 = vadd.f32 %v1598, %v1840
        %v1921 = vadd.f32 %v1599, %v1841
        %v1922 = vadd.f32 %v1600, %v1842
        %v1923 = vadd.f32 %v1601, %v1843
        %v1924 = vadd.f32 %v1602, %v1844
        %v1925 = vadd.f32 %v1603, %v1845
        %v1926 = vadd.f32 %v1604, %v1846
        %v1927 = vadd.f32 %v1605, %v1847
        %v1928 = vadd.f32 %v1606, %v1848
        %v1929 = vadd.f32 %v1607, %v1849
        %v1930 = vadd.f32 %v1608, %v1850
        %v1931 = vadd.f32 %v1609, %v1851
        %v1932 = vadd.f32 %v1610, %v1852
        %v1933 = vadd.f32 %v1611, %v1853
        %v1934 = vadd.f32 %v1612, %v1854
        %v1935 = vadd.f32 %v1613, %v1855
        %v1936 = vadd.f32 %v1614, %v1856
        %v1937 = vadd.f32 %v1615, %v1857
        %v1938 = vadd.f32 %v1616, %v1858
        %v1939 = vadd.f32 %v1617, %v1859
        %v1940 = vadd.f32 %v1618, %v1860
        %v1941 = vadd.f32 %v1619, %v1861
        %v1942 = vadd.f32 %v1620, %v1862
        %v1943 = vadd.f32 %v1621, %v1863
        %v1944 = vadd.f32 %v1622, %v1864
        %v1945 = vadd.f32 %v1623, %v1865
        %v1946 = vadd.f32 %v1624, %v1866
        %v1947 = vadd.f32 %v1625, %v1867
        %v1948 = vadd.f32 %v1626, %v1868
        %v1949 = vadd.f32 %v1627, %v1869
        %v1950 = vadd.f32 %v1628, %v1870
        %v1951 = vadd.f32 %v1629, %v1871
        %v1952 = vadd.f32 %v1630, %v1872
        %v1953 = vadd.f32 %v1631, %v1873
        %v1954 = vadd.f32 %v1632, %v1874
        %v1955 = vadd.f32 %v1633, %v1875
        %v1956 = vadd.f32 %v1634, %v1876
        %v1957 = vadd.f32 %v1635, %v1877
        %v1958 = vadd.f32 %v1636, %v1878
        %v1959 = vadd.f32 %v1637, %v1879
        %v1960 = vadd.f32 %v1638, %v1880
        %v1961 = vadd.f32 %v1639, %v1881
        %v1962 = vadd.f32 %v1640, %v1882
        %v1963 = vadd.f32 %v1641, %v1883
        %v1964 = vadd.f32 %v1642, %v1884
        %v1965 = vadd.f32 %v1643, %v1885
        %v1966 = vadd.f32 %v1644, %v1886
        %v1967 = vadd.f32 %v1645, %v1887
        %v1968 = vadd.f32 %v1646, %v1888
        %v1969 = vadd.f32 %v1647, %v1889
        %v1970 = vadd.f32 %v1648, %v1890
        %v1971 = vadd.f32 %v1649, %v1891
        %v1972 = vadd.f32 %v1650, %v1892
        %v1973 = vadd.f32 %v1651, %v1893
        %v1974 = vadd.f32 %v1652, %v1894
        %v1975 = vadd.f32 %v1653, %v1895
        %v1976 = vadd.f32 %v1654, %v1896
        %v1977 = vadd.f32 %v1655, %v1897
        %v1978 = vadd.f32 %v1656, %v1898
        %v1979 = vadd.f32 %v1657, %v1899
        %v1980 = vadd.f32 %v1658, %v1900
        %v1981 = vadd.f32 %v1659, %v1901
        %v1982 = vadd.f32 %v1660, %v1902
        %v1983 = vadd.f32 %v1661, %v1903
        %v1984 = vadd.f32 %v1662, %v1904
        %v1985 = vadd.f32 %v1663, %v1905
        %v1986 = vadd.f32 %v1664, %v1906
        %v1987 = vadd.f32 %v1665, %v1907
        %v1988 = vadd.f32 %v1666, %v1908
        %v1989 = vadd.f32 %v1667, %v1909
        %v1990 = vadd.f32 %v1668, %v1910
        %v1991 = vadd.f32 %v1669, %v1911
        %v1992 = vadd.f32 %v1670, %v1912
        %v1993 = vadd.f32 %v1671, %v1913
        %v1994 = vadd.f32 %v1672, %v1914
        %v1995 = vadd.f32 %v1673, %v1915
        %v1996 = vld [vmem:[%s3] sm:$0x1f]
        %v1997 = vld [vmem:[%s3 + $0x8] sm:$0x1f]
        %1999 = vset.pattern.permute.xlu0 0
        %2000 = vperm.xlu0 %1999, %v384
        %v2001 = vpop.permute.xlu0 %2000
        %2004 = vset.pattern.permute.xlu0 0
        %2005 = vperm.xlu0 %2004, %v385
        %v2006 = vpop.permute.xlu0 %2005
        %2009 = vset.pattern.permute.xlu0 0
        %2010 = vperm.xlu0 %2009, %v386
        %v2011 = vpop.permute.xlu0 %2010
        %2014 = vset.pattern.permute.xlu0 0
        %2015 = vperm.xlu0 %2014, %v387
        %v2016 = vpop.permute.xlu0 %2015
        %2019 = vset.pattern.permute.xlu0 0
        %2020 = vperm.xlu0 %2019, %v388
        %v2021 = vpop.permute.xlu0 %2020
        %2024 = vset.pattern.permute.xlu0 0
        %2025 = vperm.xlu0 %2024, %v389
        %v2026 = vpop.permute.xlu0 %2025
        %2029 = vset.pattern.permute.xlu0 0
        %2030 = vperm.xlu0 %2029, %v390
        %v2031 = vpop.permute.xlu0 %2030
        %2034 = vset.pattern.permute.xlu0 0
        %2035 = vperm.xlu0 %2034, %v391
        %v2036 = vpop.permute.xlu0 %2035
        %2039 = vset.pattern.permute.xlu0 0
        %2040 = vperm.xlu0 %2039, %v392
        %v2041 = vpop.permute.xlu0 %2040
        %2044 = vset.pattern.permute.xlu0 0
        %2045 = vperm.xlu0 %2044, %v393
        %v2046 = vpop.permute.xlu0 %2045
        %2049 = vset.pattern.permute.xlu0 0
        %2050 = vperm.xlu0 %2049, %v394
        %v2051 = vpop.permute.xlu0 %2050
        %2054 = vset.pattern.permute.xlu0 0
        %2055 = vperm.xlu0 %2054, %v395
        %v2056 = vpop.permute.xlu0 %2055
        %2059 = vset.pattern.permute.xlu0 0
        %2060 = vperm.xlu0 %2059, %v396
        %v2061 = vpop.permute.xlu0 %2060
        %2064 = vset.pattern.permute.xlu0 0
        %2065 = vperm.xlu0 %2064, %v397
        %v2066 = vpop.permute.xlu0 %2065
        %2069 = vset.pattern.permute.xlu0 0
        %2070 = vperm.xlu0 %2069, %v398
        %v2071 = vpop.permute.xlu0 %2070
        %2074 = vset.pattern.permute.xlu0 0
        %2075 = vperm.xlu0 %2074, %v399
        %v2076 = vpop.permute.xlu0 %2075
        %2079 = vset.pattern.permute.xlu0 0
        %2080 = vperm.xlu0 %2079, %v400
        %v2081 = vpop.permute.xlu0 %2080
        %2084 = vset.pattern.permute.xlu0 0
        %2085 = vperm.xlu0 %2084, %v401
        %v2086 = vpop.permute.xlu0 %2085
        %2089 = vset.pattern.permute.xlu0 0
        %2090 = vperm.xlu0 %2089, %v402
        %v2091 = vpop.permute.xlu0 %2090
        %2094 = vset.pattern.permute.xlu0 0
        %2095 = vperm.xlu0 %2094, %v403
        %v2096 = vpop.permute.xlu0 %2095
        %2099 = vset.pattern.permute.xlu0 0
        %2100 = vperm.xlu0 %2099, %v404
        %v2101 = vpop.permute.xlu0 %2100
        %2104 = vset.pattern.permute.xlu0 0
        %2105 = vperm.xlu0 %2104, %v405
        %v2106 = vpop.permute.xlu0 %2105
        %2109 = vset.pattern.permute.xlu0 0
        %2110 = vperm.xlu0 %2109, %v406
        %v2111 = vpop.permute.xlu0 %2110
        %2114 = vset.pattern.permute.xlu0 0
        %2115 = vperm.xlu0 %2114, %v407
        %v2116 = vpop.permute.xlu0 %2115
        %2119 = vset.pattern.permute.xlu0 0
        %2120 = vperm.xlu0 %2119, %v408
        %v2121 = vpop.permute.xlu0 %2120
        %2124 = vset.pattern.permute.xlu0 0
        %2125 = vperm.xlu0 %2124, %v409
        %v2126 = vpop.permute.xlu0 %2125
        %2129 = vset.pattern.permute.xlu0 0
        %2130 = vperm.xlu0 %2129, %v410
        %v2131 = vpop.permute.xlu0 %2130
        %2134 = vset.pattern.permute.xlu0 0
        %2135 = vperm.xlu0 %2134, %v411
        %v2136 = vpop.permute.xlu0 %2135
        %2139 = vset.pattern.permute.xlu0 0
        %2140 = vperm.xlu0 %2139, %v412
        %v2141 = vpop.permute.xlu0 %2140
        %2144 = vset.pattern.permute.xlu0 0
        %2145 = vperm.xlu0 %2144, %v413
        %v2146 = vpop.permute.xlu0 %2145
        %2149 = vset.pattern.permute.xlu0 0
        %2150 = vperm.xlu0 %2149, %v414
        %v2151 = vpop.permute.xlu0 %2150
        %2154 = vset.pattern.permute.xlu0 0
        %2155 = vperm.xlu0 %2154, %v415
        %v2156 = vpop.permute.xlu0 %2155
        %2159 = vset.pattern.permute.xlu0 0
        %2160 = vperm.xlu0 %2159, %v416
        %v2161 = vpop.permute.xlu0 %2160
        %2164 = vset.pattern.permute.xlu0 0
        %2165 = vperm.xlu0 %2164, %v417
        %v2166 = vpop.permute.xlu0 %2165
        %2169 = vset.pattern.permute.xlu0 0
        %2170 = vperm.xlu0 %2169, %v418
        %v2171 = vpop.permute.xlu0 %2170
        %2174 = vset.pattern.permute.xlu0 0
        %2175 = vperm.xlu0 %2174, %v419
        %v2176 = vpop.permute.xlu0 %2175
        %2179 = vset.pattern.permute.xlu0 0
        %2180 = vperm.xlu0 %2179, %v420
        %v2181 = vpop.permute.xlu0 %2180
        %2184 = vset.pattern.permute.xlu0 0
        %2185 = vperm.xlu0 %2184, %v421
        %v2186 = vpop.permute.xlu0 %2185
        %2189 = vset.pattern.permute.xlu0 0
        %2190 = vperm.xlu0 %2189, %v422
        %v2191 = vpop.permute.xlu0 %2190
        %2194 = vset.pattern.permute.xlu0 0
        %2195 = vperm.xlu0 %2194, %v423
        %v2196 = vpop.permute.xlu0 %2195
        %v2198 = vperm.slane %v1996, 0
        %v2199 = vperm.slane %v1997, 0
        %v2200 = vmul.f32 %v2001, %v2198
        %v2201 = vmul.f32 %v2001, %v2199
        %v2202 = vmul.f32 %v2006, %v2198
        %v2203 = vmul.f32 %v2006, %v2199
        %v2204 = vmul.f32 %v2011, %v2198
        %v2205 = vmul.f32 %v2011, %v2199
        %v2206 = vmul.f32 %v2016, %v2198
        %v2207 = vmul.f32 %v2016, %v2199
        %v2208 = vmul.f32 %v2021, %v2198
        %v2209 = vmul.f32 %v2021, %v2199
        %v2210 = vmul.f32 %v2026, %v2198
        %v2211 = vmul.f32 %v2026, %v2199
        %v2212 = vmul.f32 %v2031, %v2198
        %v2213 = vmul.f32 %v2031, %v2199
        %v2214 = vmul.f32 %v2036, %v2198
        %v2215 = vmul.f32 %v2036, %v2199
        %v2216 = vmul.f32 %v2041, %v2198
        %v2217 = vmul.f32 %v2041, %v2199
        %v2218 = vmul.f32 %v2046, %v2198
        %v2219 = vmul.f32 %v2046, %v2199
        %v2220 = vmul.f32 %v2051, %v2198
        %v2221 = vmul.f32 %v2051, %v2199
        %v2222 = vmul.f32 %v2056, %v2198
        %v2223 = vmul.f32 %v2056, %v2199
        %v2224 = vmul.f32 %v2061, %v2198
        %v2225 = vmul.f32 %v2061, %v2199
        %v2226 = vmul.f32 %v2066, %v2198
        %v2227 = vmul.f32 %v2066, %v2199
        %v2228 = vmul.f32 %v2071, %v2198
        %v2229 = vmul.f32 %v2071, %v2199
        %v2230 = vmul.f32 %v2076, %v2198
        %v2231 = vmul.f32 %v2076, %v2199
        %v2232 = vmul.f32 %v2081, %v2198
        %v2233 = vmul.f32 %v2081, %v2199
        %v2234 = vmul.f32 %v2086, %v2198
        %v2235 = vmul.f32 %v2086, %v2199
        %v2236 = vmul.f32 %v2091, %v2198
        %v2237 = vmul.f32 %v2091, %v2199
        %v2238 = vmul.f32 %v2096, %v2198
        %v2239 = vmul.f32 %v2096, %v2199
        %v2240 = vmul.f32 %v2101, %v2198
        %v2241 = vmul.f32 %v2101, %v2199
        %v2242 = vmul.f32 %v2106, %v2198
        %v2243 = vmul.f32 %v2106, %v2199
        %v2244 = vmul.f32 %v2111, %v2198
        %v2245 = vmul.f32 %v2111, %v2199
        %v2246 = vmul.f32 %v2116, %v2198
        %v2247 = vmul.f32 %v2116, %v2199
        %v2248 = vmul.f32 %v2121, %v2198
        %v2249 = vmul.f32 %v2121, %v2199
        %v2250 = vmul.f32 %v2126, %v2198
        %v2251 = vmul.f32 %v2126, %v2199
        %v2252 = vmul.f32 %v2131, %v2198
        %v2253 = vmul.f32 %v2131, %v2199
        %v2254 = vmul.f32 %v2136, %v2198
        %v2255 = vmul.f32 %v2136, %v2199
        %v2256 = vmul.f32 %v2141, %v2198
        %v2257 = vmul.f32 %v2141, %v2199
        %v2258 = vmul.f32 %v2146, %v2198
        %v2259 = vmul.f32 %v2146, %v2199
        %v2260 = vmul.f32 %v2151, %v2198
        %v2261 = vmul.f32 %v2151, %v2199
        %v2262 = vmul.f32 %v2156, %v2198
        %v2263 = vmul.f32 %v2156, %v2199
        %v2264 = vmul.f32 %v2161, %v2198
        %v2265 = vmul.f32 %v2161, %v2199
        %v2266 = vmul.f32 %v2166, %v2198
        %v2267 = vmul.f32 %v2166, %v2199
        %v2268 = vmul.f32 %v2171, %v2198
        %v2269 = vmul.f32 %v2171, %v2199
        %v2270 = vmul.f32 %v2176, %v2198
        %v2271 = vmul.f32 %v2176, %v2199
        %v2272 = vmul.f32 %v2181, %v2198
        %v2273 = vmul.f32 %v2181, %v2199
        %v2274 = vmul.f32 %v2186, %v2198
        %v2275 = vmul.f32 %v2186, %v2199
        %v2276 = vmul.f32 %v2191, %v2198
        %v2277 = vmul.f32 %v2191, %v2199
        %v2278 = vmul.f32 %v2196, %v2198
        %v2279 = vmul.f32 %v2196, %v2199
        %2280 = vset.pattern.permute.xlu0 1
        %2281 = vperm.xlu0 %2280, %v384
        %v2282 = vpop.permute.xlu0 %2281
        %2284 = vset.pattern.permute.xlu0 1
        %2285 = vperm.xlu0 %2284, %v385
        %v2286 = vpop.permute.xlu0 %2285
        %2288 = vset.pattern.permute.xlu0 1
        %2289 = vperm.xlu0 %2288, %v386
        %v2290 = vpop.permute.xlu0 %2289
        %2292 = vset.pattern.permute.xlu0 1
        %2293 = vperm.xlu0 %2292, %v387
        %v2294 = vpop.permute.xlu0 %2293
        %2296 = vset.pattern.permute.xlu0 1
        %2297 = vperm.xlu0 %2296, %v388
        %v2298 = vpop.permute.xlu0 %2297
        %2300 = vset.pattern.permute.xlu0 1
        %2301 = vperm.xlu0 %2300, %v389
        %v2302 = vpop.permute.xlu0 %2301
        %2304 = vset.pattern.permute.xlu0 1
        %2305 = vperm.xlu0 %2304, %v390
        %v2306 = vpop.permute.xlu0 %2305
        %2308 = vset.pattern.permute.xlu0 1
        %2309 = vperm.xlu0 %2308, %v391
        %v2310 = vpop.permute.xlu0 %2309
        %2312 = vset.pattern.permute.xlu0 1
        %2313 = vperm.xlu0 %2312, %v392
        %v2314 = vpop.permute.xlu0 %2313
        %2316 = vset.pattern.permute.xlu0 1
        %2317 = vperm.xlu0 %2316, %v393
        %v2318 = vpop.permute.xlu0 %2317
        %2320 = vset.pattern.permute.xlu0 1
        %2321 = vperm.xlu0 %2320, %v394
        %v2322 = vpop.permute.xlu0 %2321
        %2324 = vset.pattern.permute.xlu0 1
        %2325 = vperm.xlu0 %2324, %v395
        %v2326 = vpop.permute.xlu0 %2325
        %2328 = vset.pattern.permute.xlu0 1
        %2329 = vperm.xlu0 %2328, %v396
        %v2330 = vpop.permute.xlu0 %2329
        %2332 = vset.pattern.permute.xlu0 1
        %2333 = vperm.xlu0 %2332, %v397
        %v2334 = vpop.permute.xlu0 %2333
        %2336 = vset.pattern.permute.xlu0 1
        %2337 = vperm.xlu0 %2336, %v398
        %v2338 = vpop.permute.xlu0 %2337
        %2340 = vset.pattern.permute.xlu0 1
        %2341 = vperm.xlu0 %2340, %v399
        %v2342 = vpop.permute.xlu0 %2341
        %2344 = vset.pattern.permute.xlu0 1
        %2345 = vperm.xlu0 %2344, %v400
        %v2346 = vpop.permute.xlu0 %2345
        %2348 = vset.pattern.permute.xlu0 1
        %2349 = vperm.xlu0 %2348, %v401
        %v2350 = vpop.permute.xlu0 %2349
        %2352 = vset.pattern.permute.xlu0 1
        %2353 = vperm.xlu0 %2352, %v402
        %v2354 = vpop.permute.xlu0 %2353
        %2356 = vset.pattern.permute.xlu0 1
        %2357 = vperm.xlu0 %2356, %v403
        %v2358 = vpop.permute.xlu0 %2357
        %2360 = vset.pattern.permute.xlu0 1
        %2361 = vperm.xlu0 %2360, %v404
        %v2362 = vpop.permute.xlu0 %2361
        %2364 = vset.pattern.permute.xlu0 1
        %2365 = vperm.xlu0 %2364, %v405
        %v2366 = vpop.permute.xlu0 %2365
        %2368 = vset.pattern.permute.xlu0 1
        %2369 = vperm.xlu0 %2368, %v406
        %v2370 = vpop.permute.xlu0 %2369
        %2372 = vset.pattern.permute.xlu0 1
        %2373 = vperm.xlu0 %2372, %v407
        %v2374 = vpop.permute.xlu0 %2373
        %2376 = vset.pattern.permute.xlu0 1
        %2377 = vperm.xlu0 %2376, %v408
        %v2378 = vpop.permute.xlu0 %2377
        %2380 = vset.pattern.permute.xlu0 1
        %2381 = vperm.xlu0 %2380, %v409
        %v2382 = vpop.permute.xlu0 %2381
        %2384 = vset.pattern.permute.xlu0 1
        %2385 = vperm.xlu0 %2384, %v410
        %v2386 = vpop.permute.xlu0 %2385
        %2388 = vset.pattern.permute.xlu0 1
        %2389 = vperm.xlu0 %2388, %v411
        %v2390 = vpop.permute.xlu0 %2389
        %2392 = vset.pattern.permute.xlu0 1
        %2393 = vperm.xlu0 %2392, %v412
        %v2394 = vpop.permute.xlu0 %2393
        %2396 = vset.pattern.permute.xlu0 1
        %2397 = vperm.xlu0 %2396, %v413
        %v2398 = vpop.permute.xlu0 %2397
        %2400 = vset.pattern.permute.xlu0 1
        %2401 = vperm.xlu0 %2400, %v414
        %v2402 = vpop.permute.xlu0 %2401
        %2404 = vset.pattern.permute.xlu0 1
        %2405 = vperm.xlu0 %2404, %v415
        %v2406 = vpop.permute.xlu0 %2405
        %2408 = vset.pattern.permute.xlu0 1
        %2409 = vperm.xlu0 %2408, %v416
        %v2410 = vpop.permute.xlu0 %2409
        %2412 = vset.pattern.permute.xlu0 1
        %2413 = vperm.xlu0 %2412, %v417
        %v2414 = vpop.permute.xlu0 %2413
        %2416 = vset.pattern.permute.xlu0 1
        %2417 = vperm.xlu0 %2416, %v418
        %v2418 = vpop.permute.xlu0 %2417
        %2420 = vset.pattern.permute.xlu0 1
        %2421 = vperm.xlu0 %2420, %v419
        %v2422 = vpop.permute.xlu0 %2421
        %2424 = vset.pattern.permute.xlu0 1
        %2425 = vperm.xlu0 %2424, %v420
        %v2426 = vpop.permute.xlu0 %2425
        %2428 = vset.pattern.permute.xlu0 1
        %2429 = vperm.xlu0 %2428, %v421
        %v2430 = vpop.permute.xlu0 %2429
        %2432 = vset.pattern.permute.xlu0 1
        %2433 = vperm.xlu0 %2432, %v422
        %v2434 = vpop.permute.xlu0 %2433
        %2436 = vset.pattern.permute.xlu0 1
        %2437 = vperm.xlu0 %2436, %v423
        %v2438 = vpop.permute.xlu0 %2437
        %v2440 = vperm.slane %v1996, 1
        %v2441 = vperm.slane %v1997, 1
        %v2442 = vmul.f32 %v2282, %v2440
        %v2443 = vmul.f32 %v2282, %v2441
        %v2444 = vmul.f32 %v2286, %v2440
        %v2445 = vmul.f32 %v2286, %v2441
        %v2446 = vmul.f32 %v2290, %v2440
        %v2447 = vmul.f32 %v2290, %v2441
        %v2448 = vmul.f32 %v2294, %v2440
        %v2449 = vmul.f32 %v2294, %v2441
        %v2450 = vmul.f32 %v2298, %v2440
        %v2451 = vmul.f32 %v2298, %v2441
        %v2452 = vmul.f32 %v2302, %v2440
        %v2453 = vmul.f32 %v2302, %v2441
        %v2454 = vmul.f32 %v2306, %v2440
        %v2455 = vmul.f32 %v2306, %v2441
        %v2456 = vmul.f32 %v2310, %v2440
        %v2457 = vmul.f32 %v2310, %v2441
        %v2458 = vmul.f32 %v2314, %v2440
        %v2459 = vmul.f32 %v2314, %v2441
        %v2460 = vmul.f32 %v2318, %v2440
        %v2461 = vmul.f32 %v2318, %v2441
        %v2462 = vmul.f32 %v2322, %v2440
        %v2463 = vmul.f32 %v2322, %v2441
        %v2464 = vmul.f32 %v2326, %v2440
        %v2465 = vmul.f32 %v2326, %v2441
        %v2466 = vmul.f32 %v2330, %v2440
        %v2467 = vmul.f32 %v2330, %v2441
        %v2468 = vmul.f32 %v2334, %v2440
        %v2469 = vmul.f32 %v2334, %v2441
        %v2470 = vmul.f32 %v2338, %v2440
        %v2471 = vmul.f32 %v2338, %v2441
        %v2472 = vmul.f32 %v2342, %v2440
        %v2473 = vmul.f32 %v2342, %v2441
        %v2474 = vmul.f32 %v2346, %v2440
        %v2475 = vmul.f32 %v2346, %v2441
        %v2476 = vmul.f32 %v2350, %v2440
        %v2477 = vmul.f32 %v2350, %v2441
        %v2478 = vmul.f32 %v2354, %v2440
        %v2479 = vmul.f32 %v2354, %v2441
        %v2480 = vmul.f32 %v2358, %v2440
        %v2481 = vmul.f32 %v2358, %v2441
        %v2482 = vmul.f32 %v2362, %v2440
        %v2483 = vmul.f32 %v2362, %v2441
        %v2484 = vmul.f32 %v2366, %v2440
        %v2485 = vmul.f32 %v2366, %v2441
        %v2486 = vmul.f32 %v2370, %v2440
        %v2487 = vmul.f32 %v2370, %v2441
        %v2488 = vmul.f32 %v2374, %v2440
        %v2489 = vmul.f32 %v2374, %v2441
        %v2490 = vmul.f32 %v2378, %v2440
        %v2491 = vmul.f32 %v2378, %v2441
        %v2492 = vmul.f32 %v2382, %v2440
        %v2493 = vmul.f32 %v2382, %v2441
        %v2494 = vmul.f32 %v2386, %v2440
        %v2495 = vmul.f32 %v2386, %v2441
        %v2496 = vmul.f32 %v2390, %v2440
        %v2497 = vmul.f32 %v2390, %v2441
        %v2498 = vmul.f32 %v2394, %v2440
        %v2499 = vmul.f32 %v2394, %v2441
        %v2500 = vmul.f32 %v2398, %v2440
        %v2501 = vmul.f32 %v2398, %v2441
        %v2502 = vmul.f32 %v2402, %v2440
        %v2503 = vmul.f32 %v2402, %v2441
        %v2504 = vmul.f32 %v2406, %v2440
        %v2505 = vmul.f32 %v2406, %v2441
        %v2506 = vmul.f32 %v2410, %v2440
        %v2507 = vmul.f32 %v2410, %v2441
        %v2508 = vmul.f32 %v2414, %v2440
        %v2509 = vmul.f32 %v2414, %v2441
        %v2510 = vmul.f32 %v2418, %v2440
        %v2511 = vmul.f32 %v2418, %v2441
        %v2512 = vmul.f32 %v2422, %v2440
        %v2513 = vmul.f32 %v2422, %v2441
        %v2514 = vmul.f32 %v2426, %v2440
        %v2515 = vmul.f32 %v2426, %v2441
        %v2516 = vmul.f32 %v2430, %v2440
        %v2517 = vmul.f32 %v2430, %v2441
        %v2518 = vmul.f32 %v2434, %v2440
        %v2519 = vmul.f32 %v2434, %v2441
        %v2520 = vmul.f32 %v2438, %v2440
        %v2521 = vmul.f32 %v2438, %v2441
        %v2522 = vadd.f32 %v2200, %v2442
        %v2523 = vadd.f32 %v2201, %v2443
        %v2524 = vadd.f32 %v2202, %v2444
        %v2525 = vadd.f32 %v2203, %v2445
        %v2526 = vadd.f32 %v2204, %v2446
        %v2527 = vadd.f32 %v2205, %v2447
        %v2528 = vadd.f32 %v2206, %v2448
        %v2529 = vadd.f32 %v2207, %v2449
        %v2530 = vadd.f32 %v2208, %v2450
        %v2531 = vadd.f32 %v2209, %v2451
        %v2532 = vadd.f32 %v2210, %v2452
        %v2533 = vadd.f32 %v2211, %v2453
        %v2534 = vadd.f32 %v2212, %v2454
        %v2535 = vadd.f32 %v2213, %v2455
        %v2536 = vadd.f32 %v2214, %v2456
        %v2537 = vadd.f32 %v2215, %v2457
        %v2538 = vadd.f32 %v2216, %v2458
        %v2539 = vadd.f32 %v2217, %v2459
        %v2540 = vadd.f32 %v2218, %v2460
        %v2541 = vadd.f32 %v2219, %v2461
        %v2542 = vadd.f32 %v2220, %v2462
        %v2543 = vadd.f32 %v2221, %v2463
        %v2544 = vadd.f32 %v2222, %v2464
        %v2545 = vadd.f32 %v2223, %v2465
        %v2546 = vadd.f32 %v2224, %v2466
        %v2547 = vadd.f32 %v2225, %v2467
        %v2548 = vadd.f32 %v2226, %v2468
        %v2549 = vadd.f32 %v2227, %v2469
        %v2550 = vadd.f32 %v2228, %v2470
        %v2551 = vadd.f32 %v2229, %v2471
        %v2552 = vadd.f32 %v2230, %v2472
        %v2553 = vadd.f32 %v2231, %v2473
        %v2554 = vadd.f32 %v2232, %v2474
        %v2555 = vadd.f32 %v2233, %v2475
        %v2556 = vadd.f32 %v2234, %v2476
        %v2557 = vadd.f32 %v2235, %v2477
        %v2558 = vadd.f32 %v2236, %v2478
        %v2559 = vadd.f32 %v2237, %v2479
        %v2560 = vadd.f32 %v2238, %v2480
        %v2561 = vadd.f32 %v2239, %v2481
        %v2562 = vadd.f32 %v2240, %v2482
        %v2563 = vadd.f32 %v2241, %v2483
        %v2564 = vadd.f32 %v2242, %v2484
        %v2565 = vadd.f32 %v2243, %v2485
        %v2566 = vadd.f32 %v2244, %v2486
        %v2567 = vadd.f32 %v2245, %v2487
        %v2568 = vadd.f32 %v2246, %v2488
        %v2569 = vadd.f32 %v2247, %v2489
        %v2570 = vadd.f32 %v2248, %v2490
        %v2571 = vadd.f32 %v2249, %v2491
        %v2572 = vadd.f32 %v2250, %v2492
        %v2573 = vadd.f32 %v2251, %v2493
        %v2574 = vadd.f32 %v2252, %v2494
        %v2575 = vadd.f32 %v2253, %v2495
        %v2576 = vadd.f32 %v2254, %v2496
        %v2577 = vadd.f32 %v2255, %v2497
        %v2578 = vadd.f32 %v2256, %v2498
        %v2579 = vadd.f32 %v2257, %v2499
        %v2580 = vadd.f32 %v2258, %v2500
        %v2581 = vadd.f32 %v2259, %v2501
        %v2582 = vadd.f32 %v2260, %v2502
        %v2583 = vadd.f32 %v2261, %v2503
        %v2584 = vadd.f32 %v2262, %v2504
        %v2585 = vadd.f32 %v2263, %v2505
        %v2586 = vadd.f32 %v2264, %v2506
        %v2587 = vadd.f32 %v2265, %v2507
        %v2588 = vadd.f32 %v2266, %v2508
        %v2589 = vadd.f32 %v2267, %v2509
        %v2590 = vadd.f32 %v2268, %v2510
        %v2591 = vadd.f32 %v2269, %v2511
        %v2592 = vadd.f32 %v2270, %v2512
        %v2593 = vadd.f32 %v2271, %v2513
        %v2594 = vadd.f32 %v2272, %v2514
        %v2595 = vadd.f32 %v2273, %v2515
        %v2596 = vadd.f32 %v2274, %v2516
        %v2597 = vadd.f32 %v2275, %v2517
        %v2598 = vadd.f32 %v2276, %v2518
        %v2599 = vadd.f32 %v2277, %v2519
        %v2600 = vadd.f32 %v2278, %v2520
        %v2601 = vadd.f32 %v2279, %v2521
        %2602 = vset.pattern.permute.xlu0 2
        %2603 = vperm.xlu0 %2602, %v384
        %v2604 = vpop.permute.xlu0 %2603
        %2606 = vset.pattern.permute.xlu0 2
        %2607 = vperm.xlu0 %2606, %v385
        %v2608 = vpop.permute.xlu0 %2607
        %2610 = vset.pattern.permute.xlu0 2
        %2611 = vperm.xlu0 %2610, %v386
        %v2612 = vpop.permute.xlu0 %2611
        %2614 = vset.pattern.permute.xlu0 2
        %2615 = vperm.xlu0 %2614, %v387
        %v2616 = vpop.permute.xlu0 %2615
        %2618 = vset.pattern.permute.xlu0 2
        %2619 = vperm.xlu0 %2618, %v388
        %v2620 = vpop.permute.xlu0 %2619
        %2622 = vset.pattern.permute.xlu0 2
        %2623 = vperm.xlu0 %2622, %v389
        %v2624 = vpop.permute.xlu0 %2623
        %2626 = vset.pattern.permute.xlu0 2
        %2627 = vperm.xlu0 %2626, %v390
        %v2628 = vpop.permute.xlu0 %2627
        %2630 = vset.pattern.permute.xlu0 2
        %2631 = vperm.xlu0 %2630, %v391
        %v2632 = vpop.permute.xlu0 %2631
        %2634 = vset.pattern.permute.xlu0 2
        %2635 = vperm.xlu0 %2634, %v392
        %v2636 = vpop.permute.xlu0 %2635
        %2638 = vset.pattern.permute.xlu0 2
        %2639 = vperm.xlu0 %2638, %v393
        %v2640 = vpop.permute.xlu0 %2639
        %2642 = vset.pattern.permute.xlu0 2
        %2643 = vperm.xlu0 %2642, %v394
        %v2644 = vpop.permute.xlu0 %2643
        %2646 = vset.pattern.permute.xlu0 2
        %2647 = vperm.xlu0 %2646, %v395
        %v2648 = vpop.permute.xlu0 %2647
        %2650 = vset.pattern.permute.xlu0 2
        %2651 = vperm.xlu0 %2650, %v396
        %v2652 = vpop.permute.xlu0 %2651
        %2654 = vset.pattern.permute.xlu0 2
        %2655 = vperm.xlu0 %2654, %v397
        %v2656 = vpop.permute.xlu0 %2655
        %2658 = vset.pattern.permute.xlu0 2
        %2659 = vperm.xlu0 %2658, %v398
        %v2660 = vpop.permute.xlu0 %2659
        %2662 = vset.pattern.permute.xlu0 2
        %2663 = vperm.xlu0 %2662, %v399
        %v2664 = vpop.permute.xlu0 %2663
        %2666 = vset.pattern.permute.xlu0 2
        %2667 = vperm.xlu0 %2666, %v400
        %v2668 = vpop.permute.xlu0 %2667
        %2670 = vset.pattern.permute.xlu0 2
        %2671 = vperm.xlu0 %2670, %v401
        %v2672 = vpop.permute.xlu0 %2671
        %2674 = vset.pattern.permute.xlu0 2
        %2675 = vperm.xlu0 %2674, %v402
        %v2676 = vpop.permute.xlu0 %2675
        %2678 = vset.pattern.permute.xlu0 2
        %2679 = vperm.xlu0 %2678, %v403
        %v2680 = vpop.permute.xlu0 %2679
        %2682 = vset.pattern.permute.xlu0 2
        %2683 = vperm.xlu0 %2682, %v404
        %v2684 = vpop.permute.xlu0 %2683
        %2686 = vset.pattern.permute.xlu0 2
        %2687 = vperm.xlu0 %2686, %v405
        %v2688 = vpop.permute.xlu0 %2687
        %2690 = vset.pattern.permute.xlu0 2
        %2691 = vperm.xlu0 %2690, %v406
        %v2692 = vpop.permute.xlu0 %2691
        %2694 = vset.pattern.permute.xlu0 2
        %2695 = vperm.xlu0 %2694, %v407
        %v2696 = vpop.permute.xlu0 %2695
        %2698 = vset.pattern.permute.xlu0 2
        %2699 = vperm.xlu0 %2698, %v408
        %v2700 = vpop.permute.xlu0 %2699
        %2702 = vset.pattern.permute.xlu0 2
        %2703 = vperm.xlu0 %2702, %v409
        %v2704 = vpop.permute.xlu0 %2703
        %2706 = vset.pattern.permute.xlu0 2
        %2707 = vperm.xlu0 %2706, %v410
        %v2708 = vpop.permute.xlu0 %2707
        %2710 = vset.pattern.permute.xlu0 2
        %2711 = vperm.xlu0 %2710, %v411
        %v2712 = vpop.permute.xlu0 %2711
        %2714 = vset.pattern.permute.xlu0 2
        %2715 = vperm.xlu0 %2714, %v412
        %v2716 = vpop.permute.xlu0 %2715
        %2718 = vset.pattern.permute.xlu0 2
        %2719 = vperm.xlu0 %2718, %v413
        %v2720 = vpop.permute.xlu0 %2719
        %2722 = vset.pattern.permute.xlu0 2
        %2723 = vperm.xlu0 %2722, %v414
        %v2724 = vpop.permute.xlu0 %2723
        %2726 = vset.pattern.permute.xlu0 2
        %2727 = vperm.xlu0 %2726, %v415
        %v2728 = vpop.permute.xlu0 %2727
        %2730 = vset.pattern.permute.xlu0 2
        %2731 = vperm.xlu0 %2730, %v416
        %v2732 = vpop.permute.xlu0 %2731
        %2734 = vset.pattern.permute.xlu0 2
        %2735 = vperm.xlu0 %2734, %v417
        %v2736 = vpop.permute.xlu0 %2735
        %2738 = vset.pattern.permute.xlu0 2
        %2739 = vperm.xlu0 %2738, %v418
        %v2740 = vpop.permute.xlu0 %2739
        %2742 = vset.pattern.permute.xlu0 2
        %2743 = vperm.xlu0 %2742, %v419
        %v2744 = vpop.permute.xlu0 %2743
        %2746 = vset.pattern.permute.xlu0 2
        %2747 = vperm.xlu0 %2746, %v420
        %v2748 = vpop.permute.xlu0 %2747
        %2750 = vset.pattern.permute.xlu0 2
        %2751 = vperm.xlu0 %2750, %v421
        %v2752 = vpop.permute.xlu0 %2751
        %2754 = vset.pattern.permute.xlu0 2
        %2755 = vperm.xlu0 %2754, %v422
        %v2756 = vpop.permute.xlu0 %2755
        %2758 = vset.pattern.permute.xlu0 2
        %2759 = vperm.xlu0 %2758, %v423
        %v2760 = vpop.permute.xlu0 %2759
        %v2762 = vperm.slane %v1996, 2
        %v2763 = vperm.slane %v1997, 2
        %v2764 = vmul.f32 %v2604, %v2762
        %v2765 = vmul.f32 %v2604, %v2763
        %v2766 = vmul.f32 %v2608, %v2762
        %v2767 = vmul.f32 %v2608, %v2763
        %v2768 = vmul.f32 %v2612, %v2762
        %v2769 = vmul.f32 %v2612, %v2763
        %v2770 = vmul.f32 %v2616, %v2762
        %v2771 = vmul.f32 %v2616, %v2763
        %v2772 = vmul.f32 %v2620, %v2762
        %v2773 = vmul.f32 %v2620, %v2763
        %v2774 = vmul.f32 %v2624, %v2762
        %v2775 = vmul.f32 %v2624, %v2763
        %v2776 = vmul.f32 %v2628, %v2762
        %v2777 = vmul.f32 %v2628, %v2763
        %v2778 = vmul.f32 %v2632, %v2762
        %v2779 = vmul.f32 %v2632, %v2763
        %v2780 = vmul.f32 %v2636, %v2762
        %v2781 = vmul.f32 %v2636, %v2763
        %v2782 = vmul.f32 %v2640, %v2762
        %v2783 = vmul.f32 %v2640, %v2763
        %v2784 = vmul.f32 %v2644, %v2762
        %v2785 = vmul.f32 %v2644, %v2763
        %v2786 = vmul.f32 %v2648, %v2762
        %v2787 = vmul.f32 %v2648, %v2763
        %v2788 = vmul.f32 %v2652, %v2762
        %v2789 = vmul.f32 %v2652, %v2763
        %v2790 = vmul.f32 %v2656, %v2762
        %v2791 = vmul.f32 %v2656, %v2763
        %v2792 = vmul.f32 %v2660, %v2762
        %v2793 = vmul.f32 %v2660, %v2763
        %v2794 = vmul.f32 %v2664, %v2762
        %v2795 = vmul.f32 %v2664, %v2763
        %v2796 = vmul.f32 %v2668, %v2762
        %v2797 = vmul.f32 %v2668, %v2763
        %v2798 = vmul.f32 %v2672, %v2762
        %v2799 = vmul.f32 %v2672, %v2763
        %v2800 = vmul.f32 %v2676, %v2762
        %v2801 = vmul.f32 %v2676, %v2763
        %v2802 = vmul.f32 %v2680, %v2762
        %v2803 = vmul.f32 %v2680, %v2763
        %v2804 = vmul.f32 %v2684, %v2762
        %v2805 = vmul.f32 %v2684, %v2763
        %v2806 = vmul.f32 %v2688, %v2762
        %v2807 = vmul.f32 %v2688, %v2763
        %v2808 = vmul.f32 %v2692, %v2762
        %v2809 = vmul.f32 %v2692, %v2763
        %v2810 = vmul.f32 %v2696, %v2762
        %v2811 = vmul.f32 %v2696, %v2763
        %v2812 = vmul.f32 %v2700, %v2762
        %v2813 = vmul.f32 %v2700, %v2763
        %v2814 = vmul.f32 %v2704, %v2762
        %v2815 = vmul.f32 %v2704, %v2763
        %v2816 = vmul.f32 %v2708, %v2762
        %v2817 = vmul.f32 %v2708, %v2763
        %v2818 = vmul.f32 %v2712, %v2762
        %v2819 = vmul.f32 %v2712, %v2763
        %v2820 = vmul.f32 %v2716, %v2762
        %v2821 = vmul.f32 %v2716, %v2763
        %v2822 = vmul.f32 %v2720, %v2762
        %v2823 = vmul.f32 %v2720, %v2763
        %v2824 = vmul.f32 %v2724, %v2762
        %v2825 = vmul.f32 %v2724, %v2763
        %v2826 = vmul.f32 %v2728, %v2762
        %v2827 = vmul.f32 %v2728, %v2763
        %v2828 = vmul.f32 %v2732, %v2762
        %v2829 = vmul.f32 %v2732, %v2763
        %v2830 = vmul.f32 %v2736, %v2762
        %v2831 = vmul.f32 %v2736, %v2763
        %v2832 = vmul.f32 %v2740, %v2762
        %v2833 = vmul.f32 %v2740, %v2763
        %v2834 = vmul.f32 %v2744, %v2762
        %v2835 = vmul.f32 %v2744, %v2763
        %v2836 = vmul.f32 %v2748, %v2762
        %v2837 = vmul.f32 %v2748, %v2763
        %v2838 = vmul.f32 %v2752, %v2762
        %v2839 = vmul.f32 %v2752, %v2763
        %v2840 = vmul.f32 %v2756, %v2762
        %v2841 = vmul.f32 %v2756, %v2763
        %v2842 = vmul.f32 %v2760, %v2762
        %v2843 = vmul.f32 %v2760, %v2763
        %v2844 = vadd.f32 %v2522, %v2764
        %v2845 = vadd.f32 %v2523, %v2765
        %v2846 = vadd.f32 %v2524, %v2766
        %v2847 = vadd.f32 %v2525, %v2767
        %v2848 = vadd.f32 %v2526, %v2768
        %v2849 = vadd.f32 %v2527, %v2769
        %v2850 = vadd.f32 %v2528, %v2770
        %v2851 = vadd.f32 %v2529, %v2771
        %v2852 = vadd.f32 %v2530, %v2772
        %v2853 = vadd.f32 %v2531, %v2773
        %v2854 = vadd.f32 %v2532, %v2774
        %v2855 = vadd.f32 %v2533, %v2775
        %v2856 = vadd.f32 %v2534, %v2776
        %v2857 = vadd.f32 %v2535, %v2777
        %v2858 = vadd.f32 %v2536, %v2778
        %v2859 = vadd.f32 %v2537, %v2779
        %v2860 = vadd.f32 %v2538, %v2780
        %v2861 = vadd.f32 %v2539, %v2781
        %v2862 = vadd.f32 %v2540, %v2782
        %v2863 = vadd.f32 %v2541, %v2783
        %v2864 = vadd.f32 %v2542, %v2784
        %v2865 = vadd.f32 %v2543, %v2785
        %v2866 = vadd.f32 %v2544, %v2786
        %v2867 = vadd.f32 %v2545, %v2787
        %v2868 = vadd.f32 %v2546, %v2788
        %v2869 = vadd.f32 %v2547, %v2789
        %v2870 = vadd.f32 %v2548, %v2790
        %v2871 = vadd.f32 %v2549, %v2791
        %v2872 = vadd.f32 %v2550, %v2792
        %v2873 = vadd.f32 %v2551, %v2793
        %v2874 = vadd.f32 %v2552, %v2794
        %v2875 = vadd.f32 %v2553, %v2795
        %v2876 = vadd.f32 %v2554, %v2796
        %v2877 = vadd.f32 %v2555, %v2797
        %v2878 = vadd.f32 %v2556, %v2798
        %v2879 = vadd.f32 %v2557, %v2799
        %v2880 = vadd.f32 %v2558, %v2800
        %v2881 = vadd.f32 %v2559, %v2801
        %v2882 = vadd.f32 %v2560, %v2802
        %v2883 = vadd.f32 %v2561, %v2803
        %v2884 = vadd.f32 %v2562, %v2804
        %v2885 = vadd.f32 %v2563, %v2805
        %v2886 = vadd.f32 %v2564, %v2806
        %v2887 = vadd.f32 %v2565, %v2807
        %v2888 = vadd.f32 %v2566, %v2808
        %v2889 = vadd.f32 %v2567, %v2809
        %v2890 = vadd.f32 %v2568, %v2810
        %v2891 = vadd.f32 %v2569, %v2811
        %v2892 = vadd.f32 %v2570, %v2812
        %v2893 = vadd.f32 %v2571, %v2813
        %v2894 = vadd.f32 %v2572, %v2814
        %v2895 = vadd.f32 %v2573, %v2815
        %v2896 = vadd.f32 %v2574, %v2816
        %v2897 = vadd.f32 %v2575, %v2817
        %v2898 = vadd.f32 %v2576, %v2818
        %v2899 = vadd.f32 %v2577, %v2819
        %v2900 = vadd.f32 %v2578, %v2820
        %v2901 = vadd.f32 %v2579, %v2821
        %v2902 = vadd.f32 %v2580, %v2822
        %v2903 = vadd.f32 %v2581, %v2823
        %v2904 = vadd.f32 %v2582, %v2824
        %v2905 = vadd.f32 %v2583, %v2825
        %v2906 = vadd.f32 %v2584, %v2826
        %v2907 = vadd.f32 %v2585, %v2827
        %v2908 = vadd.f32 %v2586, %v2828
        %v2909 = vadd.f32 %v2587, %v2829
        %v2910 = vadd.f32 %v2588, %v2830
        %v2911 = vadd.f32 %v2589, %v2831
        %v2912 = vadd.f32 %v2590, %v2832
        %v2913 = vadd.f32 %v2591, %v2833
        %v2914 = vadd.f32 %v2592, %v2834
        %v2915 = vadd.f32 %v2593, %v2835
        %v2916 = vadd.f32 %v2594, %v2836
        %v2917 = vadd.f32 %v2595, %v2837
        %v2918 = vadd.f32 %v2596, %v2838
        %v2919 = vadd.f32 %v2597, %v2839
        %v2920 = vadd.f32 %v2598, %v2840
        %v2921 = vadd.f32 %v2599, %v2841
        %v2922 = vadd.f32 %v2600, %v2842
        %v2923 = vadd.f32 %v2601, %v2843
        %2924 = vset.pattern.permute.xlu0 3
        %2925 = vperm.xlu0 %2924, %v384
        %v2926 = vpop.permute.xlu0 %2925
        %2928 = vset.pattern.permute.xlu0 3
        %2929 = vperm.xlu0 %2928, %v385
        %v2930 = vpop.permute.xlu0 %2929
        %2932 = vset.pattern.permute.xlu0 3
        %2933 = vperm.xlu0 %2932, %v386
        %v2934 = vpop.permute.xlu0 %2933
        %2936 = vset.pattern.permute.xlu0 3
        %2937 = vperm.xlu0 %2936, %v387
        %v2938 = vpop.permute.xlu0 %2937
        %2940 = vset.pattern.permute.xlu0 3
        %2941 = vperm.xlu0 %2940, %v388
        %v2942 = vpop.permute.xlu0 %2941
        %2944 = vset.pattern.permute.xlu0 3
        %2945 = vperm.xlu0 %2944, %v389
        %v2946 = vpop.permute.xlu0 %2945
        %2948 = vset.pattern.permute.xlu0 3
        %2949 = vperm.xlu0 %2948, %v390
        %v2950 = vpop.permute.xlu0 %2949
        %2952 = vset.pattern.permute.xlu0 3
        %2953 = vperm.xlu0 %2952, %v391
        %v2954 = vpop.permute.xlu0 %2953
        %2956 = vset.pattern.permute.xlu0 3
        %2957 = vperm.xlu0 %2956, %v392
        %v2958 = vpop.permute.xlu0 %2957
        %2960 = vset.pattern.permute.xlu0 3
        %2961 = vperm.xlu0 %2960, %v393
        %v2962 = vpop.permute.xlu0 %2961
        %2964 = vset.pattern.permute.xlu0 3
        %2965 = vperm.xlu0 %2964, %v394
        %v2966 = vpop.permute.xlu0 %2965
        %2968 = vset.pattern.permute.xlu0 3
        %2969 = vperm.xlu0 %2968, %v395
        %v2970 = vpop.permute.xlu0 %2969
        %2972 = vset.pattern.permute.xlu0 3
        %2973 = vperm.xlu0 %2972, %v396
        %v2974 = vpop.permute.xlu0 %2973
        %2976 = vset.pattern.permute.xlu0 3
        %2977 = vperm.xlu0 %2976, %v397
        %v2978 = vpop.permute.xlu0 %2977
        %2980 = vset.pattern.permute.xlu0 3
        %2981 = vperm.xlu0 %2980, %v398
        %v2982 = vpop.permute.xlu0 %2981
        %2984 = vset.pattern.permute.xlu0 3
        %2985 = vperm.xlu0 %2984, %v399
        %v2986 = vpop.permute.xlu0 %2985
        %2988 = vset.pattern.permute.xlu0 3
        %2989 = vperm.xlu0 %2988, %v400
        %v2990 = vpop.permute.xlu0 %2989
        %2992 = vset.pattern.permute.xlu0 3
        %2993 = vperm.xlu0 %2992, %v401
        %v2994 = vpop.permute.xlu0 %2993
        %2996 = vset.pattern.permute.xlu0 3
        %2997 = vperm.xlu0 %2996, %v402
        %v2998 = vpop.permute.xlu0 %2997
        %3000 = vset.pattern.permute.xlu0 3
        %3001 = vperm.xlu0 %3000, %v403
        %v3002 = vpop.permute.xlu0 %3001
        %3004 = vset.pattern.permute.xlu0 3
        %3005 = vperm.xlu0 %3004, %v404
        %v3006 = vpop.permute.xlu0 %3005
        %3008 = vset.pattern.permute.xlu0 3
        %3009 = vperm.xlu0 %3008, %v405
        %v3010 = vpop.permute.xlu0 %3009
        %3012 = vset.pattern.permute.xlu0 3
        %3013 = vperm.xlu0 %3012, %v406
        %v3014 = vpop.permute.xlu0 %3013
        %3016 = vset.pattern.permute.xlu0 3
        %3017 = vperm.xlu0 %3016, %v407
        %v3018 = vpop.permute.xlu0 %3017
        %3020 = vset.pattern.permute.xlu0 3
        %3021 = vperm.xlu0 %3020, %v408
        %v3022 = vpop.permute.xlu0 %3021
        %3024 = vset.pattern.permute.xlu0 3
        %3025 = vperm.xlu0 %3024, %v409
        %v3026 = vpop.permute.xlu0 %3025
        %3028 = vset.pattern.permute.xlu0 3
        %3029 = vperm.xlu0 %3028, %v410
        %v3030 = vpop.permute.xlu0 %3029
        %3032 = vset.pattern.permute.xlu0 3
        %3033 = vperm.xlu0 %3032, %v411
        %v3034 = vpop.permute.xlu0 %3033
        %3036 = vset.pattern.permute.xlu0 3
        %3037 = vperm.xlu0 %3036, %v412
        %v3038 = vpop.permute.xlu0 %3037
        %3040 = vset.pattern.permute.xlu0 3
        %3041 = vperm.xlu0 %3040, %v413
        %v3042 = vpop.permute.xlu0 %3041
        %3044 = vset.pattern.permute.xlu0 3
        %3045 = vperm.xlu0 %3044, %v414
        %v3046 = vpop.permute.xlu0 %3045
        %3048 = vset.pattern.permute.xlu0 3
        %3049 = vperm.xlu0 %3048, %v415
        %v3050 = vpop.permute.xlu0 %3049
        %3052 = vset.pattern.permute.xlu0 3
        %3053 = vperm.xlu0 %3052, %v416
        %v3054 = vpop.permute.xlu0 %3053
        %3056 = vset.pattern.permute.xlu0 3
        %3057 = vperm.xlu0 %3056, %v417
        %v3058 = vpop.permute.xlu0 %3057
        %3060 = vset.pattern.permute.xlu0 3
        %3061 = vperm.xlu0 %3060, %v418
        %v3062 = vpop.permute.xlu0 %3061
        %3064 = vset.pattern.permute.xlu0 3
        %3065 = vperm.xlu0 %3064, %v419
        %v3066 = vpop.permute.xlu0 %3065
        %3068 = vset.pattern.permute.xlu0 3
        %3069 = vperm.xlu0 %3068, %v420
        %v3070 = vpop.permute.xlu0 %3069
        %3072 = vset.pattern.permute.xlu0 3
        %3073 = vperm.xlu0 %3072, %v421
        %v3074 = vpop.permute.xlu0 %3073
        %3076 = vset.pattern.permute.xlu0 3
        %3077 = vperm.xlu0 %3076, %v422
        %v3078 = vpop.permute.xlu0 %3077
        %3080 = vset.pattern.permute.xlu0 3
        %3081 = vperm.xlu0 %3080, %v423
        %v3082 = vpop.permute.xlu0 %3081
        %v3084 = vperm.slane %v1996, 3
        %v3085 = vperm.slane %v1997, 3
        %v3086 = vmul.f32 %v2926, %v3084
        %v3087 = vmul.f32 %v2926, %v3085
        %v3088 = vmul.f32 %v2930, %v3084
        %v3089 = vmul.f32 %v2930, %v3085
        %v3090 = vmul.f32 %v2934, %v3084
        %v3091 = vmul.f32 %v2934, %v3085
        %v3092 = vmul.f32 %v2938, %v3084
        %v3093 = vmul.f32 %v2938, %v3085
        %v3094 = vmul.f32 %v2942, %v3084
        %v3095 = vmul.f32 %v2942, %v3085
        %v3096 = vmul.f32 %v2946, %v3084
        %v3097 = vmul.f32 %v2946, %v3085
        %v3098 = vmul.f32 %v2950, %v3084
        %v3099 = vmul.f32 %v2950, %v3085
        %v3100 = vmul.f32 %v2954, %v3084
        %v3101 = vmul.f32 %v2954, %v3085
        %v3102 = vmul.f32 %v2958, %v3084
        %v3103 = vmul.f32 %v2958, %v3085
        %v3104 = vmul.f32 %v2962, %v3084
        %v3105 = vmul.f32 %v2962, %v3085
        %v3106 = vmul.f32 %v2966, %v3084
        %v3107 = vmul.f32 %v2966, %v3085
        %v3108 = vmul.f32 %v2970, %v3084
        %v3109 = vmul.f32 %v2970, %v3085
        %v3110 = vmul.f32 %v2974, %v3084
        %v3111 = vmul.f32 %v2974, %v3085
        %v3112 = vmul.f32 %v2978, %v3084
        %v3113 = vmul.f32 %v2978, %v3085
        %v3114 = vmul.f32 %v2982, %v3084
        %v3115 = vmul.f32 %v2982, %v3085
        %v3116 = vmul.f32 %v2986, %v3084
        %v3117 = vmul.f32 %v2986, %v3085
        %v3118 = vmul.f32 %v2990, %v3084
        %v3119 = vmul.f32 %v2990, %v3085
        %v3120 = vmul.f32 %v2994, %v3084
        %v3121 = vmul.f32 %v2994, %v3085
        %v3122 = vmul.f32 %v2998, %v3084
        %v3123 = vmul.f32 %v2998, %v3085
        %v3124 = vmul.f32 %v3002, %v3084
        %v3125 = vmul.f32 %v3002, %v3085
        %v3126 = vmul.f32 %v3006, %v3084
        %v3127 = vmul.f32 %v3006, %v3085
        %v3128 = vmul.f32 %v3010, %v3084
        %v3129 = vmul.f32 %v3010, %v3085
        %v3130 = vmul.f32 %v3014, %v3084
        %v3131 = vmul.f32 %v3014, %v3085
        %v3132 = vmul.f32 %v3018, %v3084
        %v3133 = vmul.f32 %v3018, %v3085
        %v3134 = vmul.f32 %v3022, %v3084
        %v3135 = vmul.f32 %v3022, %v3085
        %v3136 = vmul.f32 %v3026, %v3084
        %v3137 = vmul.f32 %v3026, %v3085
        %v3138 = vmul.f32 %v3030, %v3084
        %v3139 = vmul.f32 %v3030, %v3085
        %v3140 = vmul.f32 %v3034, %v3084
        %v3141 = vmul.f32 %v3034, %v3085
        %v3142 = vmul.f32 %v3038, %v3084
        %v3143 = vmul.f32 %v3038, %v3085
        %v3144 = vmul.f32 %v3042, %v3084
        %v3145 = vmul.f32 %v3042, %v3085
        %v3146 = vmul.f32 %v3046, %v3084
        %v3147 = vmul.f32 %v3046, %v3085
        %v3148 = vmul.f32 %v3050, %v3084
        %v3149 = vmul.f32 %v3050, %v3085
        %v3150 = vmul.f32 %v3054, %v3084
        %v3151 = vmul.f32 %v3054, %v3085
        %v3152 = vmul.f32 %v3058, %v3084
        %v3153 = vmul.f32 %v3058, %v3085
        %v3154 = vmul.f32 %v3062, %v3084
        %v3155 = vmul.f32 %v3062, %v3085
        %v3156 = vmul.f32 %v3066, %v3084
        %v3157 = vmul.f32 %v3066, %v3085
        %v3158 = vmul.f32 %v3070, %v3084
        %v3159 = vmul.f32 %v3070, %v3085
        %v3160 = vmul.f32 %v3074, %v3084
        %v3161 = vmul.f32 %v3074, %v3085
        %v3162 = vmul.f32 %v3078, %v3084
        %v3163 = vmul.f32 %v3078, %v3085
        %v3164 = vmul.f32 %v3082, %v3084
        %v3165 = vmul.f32 %v3082, %v3085
        %v3166 = vadd.f32 %v2844, %v3086
        %v3167 = vadd.f32 %v2845, %v3087
        %v3168 = vadd.f32 %v2846, %v3088
        %v3169 = vadd.f32 %v2847, %v3089
        %v3170 = vadd.f32 %v2848, %v3090
        %v3171 = vadd.f32 %v2849, %v3091
        %v3172 = vadd.f32 %v2850, %v3092
        %v3173 = vadd.f32 %v2851, %v3093
        %v3174 = vadd.f32 %v2852, %v3094
        %v3175 = vadd.f32 %v2853, %v3095
        %v3176 = vadd.f32 %v2854, %v3096
        %v3177 = vadd.f32 %v2855, %v3097
        %v3178 = vadd.f32 %v2856, %v3098
        %v3179 = vadd.f32 %v2857, %v3099
        %v3180 = vadd.f32 %v2858, %v3100
        %v3181 = vadd.f32 %v2859, %v3101
        %v3182 = vadd.f32 %v2860, %v3102
        %v3183 = vadd.f32 %v2861, %v3103
        %v3184 = vadd.f32 %v2862, %v3104
        %v3185 = vadd.f32 %v2863, %v3105
        %v3186 = vadd.f32 %v2864, %v3106
        %v3187 = vadd.f32 %v2865, %v3107
        %v3188 = vadd.f32 %v2866, %v3108
        %v3189 = vadd.f32 %v2867, %v3109
        %v3190 = vadd.f32 %v2868, %v3110
        %v3191 = vadd.f32 %v2869, %v3111
        %v3192 = vadd.f32 %v2870, %v3112
        %v3193 = vadd.f32 %v2871, %v3113
        %v3194 = vadd.f32 %v2872, %v3114
        %v3195 = vadd.f32 %v2873, %v3115
        %v3196 = vadd.f32 %v2874, %v3116
        %v3197 = vadd.f32 %v2875, %v3117
        %v3198 = vadd.f32 %v2876, %v3118
        %v3199 = vadd.f32 %v2877, %v3119
        %v3200 = vadd.f32 %v2878, %v3120
        %v3201 = vadd.f32 %v2879, %v3121
        %v3202 = vadd.f32 %v2880, %v3122
        %v3203 = vadd.f32 %v2881, %v3123
        %v3204 = vadd.f32 %v2882, %v3124
        %v3205 = vadd.f32 %v2883, %v3125
        %v3206 = vadd.f32 %v2884, %v3126
        %v3207 = vadd.f32 %v2885, %v3127
        %v3208 = vadd.f32 %v2886, %v3128
        %v3209 = vadd.f32 %v2887, %v3129
        %v3210 = vadd.f32 %v2888, %v3130
        %v3211 = vadd.f32 %v2889, %v3131
        %v3212 = vadd.f32 %v2890, %v3132
        %v3213 = vadd.f32 %v2891, %v3133
        %v3214 = vadd.f32 %v2892, %v3134
        %v3215 = vadd.f32 %v2893, %v3135
        %v3216 = vadd.f32 %v2894, %v3136
        %v3217 = vadd.f32 %v2895, %v3137
        %v3218 = vadd.f32 %v2896, %v3138
        %v3219 = vadd.f32 %v2897, %v3139
        %v3220 = vadd.f32 %v2898, %v3140
        %v3221 = vadd.f32 %v2899, %v3141
        %v3222 = vadd.f32 %v2900, %v3142
        %v3223 = vadd.f32 %v2901, %v3143
        %v3224 = vadd.f32 %v2902, %v3144
        %v3225 = vadd.f32 %v2903, %v3145
        %v3226 = vadd.f32 %v2904, %v3146
        %v3227 = vadd.f32 %v2905, %v3147
        %v3228 = vadd.f32 %v2906, %v3148
        %v3229 = vadd.f32 %v2907, %v3149
        %v3230 = vadd.f32 %v2908, %v3150
        %v3231 = vadd.f32 %v2909, %v3151
        %v3232 = vadd.f32 %v2910, %v3152
        %v3233 = vadd.f32 %v2911, %v3153
        %v3234 = vadd.f32 %v2912, %v3154
        %v3235 = vadd.f32 %v2913, %v3155
        %v3236 = vadd.f32 %v2914, %v3156
        %v3237 = vadd.f32 %v2915, %v3157
        %v3238 = vadd.f32 %v2916, %v3158
        %v3239 = vadd.f32 %v2917, %v3159
        %v3240 = vadd.f32 %v2918, %v3160
        %v3241 = vadd.f32 %v2919, %v3161
        %v3242 = vadd.f32 %v2920, %v3162
        %v3243 = vadd.f32 %v2921, %v3163
        %v3244 = vadd.f32 %v2922, %v3164
        %v3245 = vadd.f32 %v2923, %v3165
        %3246 = vset.pattern.permute.xlu0 4
        %3247 = vperm.xlu0 %3246, %v384
        %v3248 = vpop.permute.xlu0 %3247
        %3250 = vset.pattern.permute.xlu0 4
        %3251 = vperm.xlu0 %3250, %v385
        %v3252 = vpop.permute.xlu0 %3251
        %3254 = vset.pattern.permute.xlu0 4
        %3255 = vperm.xlu0 %3254, %v386
        %v3256 = vpop.permute.xlu0 %3255
        %3258 = vset.pattern.permute.xlu0 4
        %3259 = vperm.xlu0 %3258, %v387
        %v3260 = vpop.permute.xlu0 %3259
        %3262 = vset.pattern.permute.xlu0 4
        %3263 = vperm.xlu0 %3262, %v388
        %v3264 = vpop.permute.xlu0 %3263
        %3266 = vset.pattern.permute.xlu0 4
        %3267 = vperm.xlu0 %3266, %v389
        %v3268 = vpop.permute.xlu0 %3267
        %3270 = vset.pattern.permute.xlu0 4
        %3271 = vperm.xlu0 %3270, %v390
        %v3272 = vpop.permute.xlu0 %3271
        %3274 = vset.pattern.permute.xlu0 4
        %3275 = vperm.xlu0 %3274, %v391
        %v3276 = vpop.permute.xlu0 %3275
        %3278 = vset.pattern.permute.xlu0 4
        %3279 = vperm.xlu0 %3278, %v392
        %v3280 = vpop.permute.xlu0 %3279
        %3282 = vset.pattern.permute.xlu0 4
        %3283 = vperm.xlu0 %3282, %v393
        %v3284 = vpop.permute.xlu0 %3283
        %3286 = vset.pattern.permute.xlu0 4
        %3287 = vperm.xlu0 %3286, %v394
        %v3288 = vpop.permute.xlu0 %3287
        %3290 = vset.pattern.permute.xlu0 4
        %3291 = vperm.xlu0 %3290, %v395
        %v3292 = vpop.permute.xlu0 %3291
        %3294 = vset.pattern.permute.xlu0 4
        %3295 = vperm.xlu0 %3294, %v396
        %v3296 = vpop.permute.xlu0 %3295
        %3298 = vset.pattern.permute.xlu0 4
        %3299 = vperm.xlu0 %3298, %v397
        %v3300 = vpop.permute.xlu0 %3299
        %3302 = vset.pattern.permute.xlu0 4
        %3303 = vperm.xlu0 %3302, %v398
        %v3304 = vpop.permute.xlu0 %3303
        %3306 = vset.pattern.permute.xlu0 4
        %3307 = vperm.xlu0 %3306, %v399
        %v3308 = vpop.permute.xlu0 %3307
        %3310 = vset.pattern.permute.xlu0 4
        %3311 = vperm.xlu0 %3310, %v400
        %v3312 = vpop.permute.xlu0 %3311
        %3314 = vset.pattern.permute.xlu0 4
        %3315 = vperm.xlu0 %3314, %v401
        %v3316 = vpop.permute.xlu0 %3315
        %3318 = vset.pattern.permute.xlu0 4
        %3319 = vperm.xlu0 %3318, %v402
        %v3320 = vpop.permute.xlu0 %3319
        %3322 = vset.pattern.permute.xlu0 4
        %3323 = vperm.xlu0 %3322, %v403
        %v3324 = vpop.permute.xlu0 %3323
        %3326 = vset.pattern.permute.xlu0 4
        %3327 = vperm.xlu0 %3326, %v404
        %v3328 = vpop.permute.xlu0 %3327
        %3330 = vset.pattern.permute.xlu0 4
        %3331 = vperm.xlu0 %3330, %v405
        %v3332 = vpop.permute.xlu0 %3331
        %3334 = vset.pattern.permute.xlu0 4
        %3335 = vperm.xlu0 %3334, %v406
        %v3336 = vpop.permute.xlu0 %3335
        %3338 = vset.pattern.permute.xlu0 4
        %3339 = vperm.xlu0 %3338, %v407
        %v3340 = vpop.permute.xlu0 %3339
        %3342 = vset.pattern.permute.xlu0 4
        %3343 = vperm.xlu0 %3342, %v408
        %v3344 = vpop.permute.xlu0 %3343
        %3346 = vset.pattern.permute.xlu0 4
        %3347 = vperm.xlu0 %3346, %v409
        %v3348 = vpop.permute.xlu0 %3347
        %3350 = vset.pattern.permute.xlu0 4
        %3351 = vperm.xlu0 %3350, %v410
        %v3352 = vpop.permute.xlu0 %3351
        %3354 = vset.pattern.permute.xlu0 4
        %3355 = vperm.xlu0 %3354, %v411
        %v3356 = vpop.permute.xlu0 %3355
        %3358 = vset.pattern.permute.xlu0 4
        %3359 = vperm.xlu0 %3358, %v412
        %v3360 = vpop.permute.xlu0 %3359
        %3362 = vset.pattern.permute.xlu0 4
        %3363 = vperm.xlu0 %3362, %v413
        %v3364 = vpop.permute.xlu0 %3363
        %3366 = vset.pattern.permute.xlu0 4
        %3367 = vperm.xlu0 %3366, %v414
        %v3368 = vpop.permute.xlu0 %3367
        %3370 = vset.pattern.permute.xlu0 4
        %3371 = vperm.xlu0 %3370, %v415
        %v3372 = vpop.permute.xlu0 %3371
        %3374 = vset.pattern.permute.xlu0 4
        %3375 = vperm.xlu0 %3374, %v416
        %v3376 = vpop.permute.xlu0 %3375
        %3378 = vset.pattern.permute.xlu0 4
        %3379 = vperm.xlu0 %3378, %v417
        %v3380 = vpop.permute.xlu0 %3379
        %3382 = vset.pattern.permute.xlu0 4
        %3383 = vperm.xlu0 %3382, %v418
        %v3384 = vpop.permute.xlu0 %3383
        %3386 = vset.pattern.permute.xlu0 4
        %3387 = vperm.xlu0 %3386, %v419
        %v3388 = vpop.permute.xlu0 %3387
        %3390 = vset.pattern.permute.xlu0 4
        %3391 = vperm.xlu0 %3390, %v420
        %v3392 = vpop.permute.xlu0 %3391
        %3394 = vset.pattern.permute.xlu0 4
        %3395 = vperm.xlu0 %3394, %v421
        %v3396 = vpop.permute.xlu0 %3395
        %3398 = vset.pattern.permute.xlu0 4
        %3399 = vperm.xlu0 %3398, %v422
        %v3400 = vpop.permute.xlu0 %3399
        %3402 = vset.pattern.permute.xlu0 4
        %3403 = vperm.xlu0 %3402, %v423
        %v3404 = vpop.permute.xlu0 %3403
        %v3406 = vperm.slane %v1996, 4
        %v3407 = vperm.slane %v1997, 4
        %v3408 = vmul.f32 %v3248, %v3406
        %v3409 = vmul.f32 %v3248, %v3407
        %v3410 = vmul.f32 %v3252, %v3406
        %v3411 = vmul.f32 %v3252, %v3407
        %v3412 = vmul.f32 %v3256, %v3406
        %v3413 = vmul.f32 %v3256, %v3407
        %v3414 = vmul.f32 %v3260, %v3406
        %v3415 = vmul.f32 %v3260, %v3407
        %v3416 = vmul.f32 %v3264, %v3406
        %v3417 = vmul.f32 %v3264, %v3407
        %v3418 = vmul.f32 %v3268, %v3406
        %v3419 = vmul.f32 %v3268, %v3407
        %v3420 = vmul.f32 %v3272, %v3406
        %v3421 = vmul.f32 %v3272, %v3407
        %v3422 = vmul.f32 %v3276, %v3406
        %v3423 = vmul.f32 %v3276, %v3407
        %v3424 = vmul.f32 %v3280, %v3406
        %v3425 = vmul.f32 %v3280, %v3407
        %v3426 = vmul.f32 %v3284, %v3406
        %v3427 = vmul.f32 %v3284, %v3407
        %v3428 = vmul.f32 %v3288, %v3406
        %v3429 = vmul.f32 %v3288, %v3407
        %v3430 = vmul.f32 %v3292, %v3406
        %v3431 = vmul.f32 %v3292, %v3407
        %v3432 = vmul.f32 %v3296, %v3406
        %v3433 = vmul.f32 %v3296, %v3407
        %v3434 = vmul.f32 %v3300, %v3406
        %v3435 = vmul.f32 %v3300, %v3407
        %v3436 = vmul.f32 %v3304, %v3406
        %v3437 = vmul.f32 %v3304, %v3407
        %v3438 = vmul.f32 %v3308, %v3406
        %v3439 = vmul.f32 %v3308, %v3407
        %v3440 = vmul.f32 %v3312, %v3406
        %v3441 = vmul.f32 %v3312, %v3407
        %v3442 = vmul.f32 %v3316, %v3406
        %v3443 = vmul.f32 %v3316, %v3407
        %v3444 = vmul.f32 %v3320, %v3406
        %v3445 = vmul.f32 %v3320, %v3407
        %v3446 = vmul.f32 %v3324, %v3406
        %v3447 = vmul.f32 %v3324, %v3407
        %v3448 = vmul.f32 %v3328, %v3406
        %v3449 = vmul.f32 %v3328, %v3407
        %v3450 = vmul.f32 %v3332, %v3406
        %v3451 = vmul.f32 %v3332, %v3407
        %v3452 = vmul.f32 %v3336, %v3406
        %v3453 = vmul.f32 %v3336, %v3407
        %v3454 = vmul.f32 %v3340, %v3406
        %v3455 = vmul.f32 %v3340, %v3407
        %v3456 = vmul.f32 %v3344, %v3406
        %v3457 = vmul.f32 %v3344, %v3407
        %v3458 = vmul.f32 %v3348, %v3406
        %v3459 = vmul.f32 %v3348, %v3407
        %v3460 = vmul.f32 %v3352, %v3406
        %v3461 = vmul.f32 %v3352, %v3407
        %v3462 = vmul.f32 %v3356, %v3406
        %v3463 = vmul.f32 %v3356, %v3407
        %v3464 = vmul.f32 %v3360, %v3406
        %v3465 = vmul.f32 %v3360, %v3407
        %v3466 = vmul.f32 %v3364, %v3406
        %v3467 = vmul.f32 %v3364, %v3407
        %v3468 = vmul.f32 %v3368, %v3406
        %v3469 = vmul.f32 %v3368, %v3407
        %v3470 = vmul.f32 %v3372, %v3406
        %v3471 = vmul.f32 %v3372, %v3407
        %v3472 = vmul.f32 %v3376, %v3406
        %v3473 = vmul.f32 %v3376, %v3407
        %v3474 = vmul.f32 %v3380, %v3406
        %v3475 = vmul.f32 %v3380, %v3407
        %v3476 = vmul.f32 %v3384, %v3406
        %v3477 = vmul.f32 %v3384, %v3407
        %v3478 = vmul.f32 %v3388, %v3406
        %v3479 = vmul.f32 %v3388, %v3407
        %v3480 = vmul.f32 %v3392, %v3406
        %v3481 = vmul.f32 %v3392, %v3407
        %v3482 = vmul.f32 %v3396, %v3406
        %v3483 = vmul.f32 %v3396, %v3407
        %v3484 = vmul.f32 %v3400, %v3406
        %v3485 = vmul.f32 %v3400, %v3407
        %v3486 = vmul.f32 %v3404, %v3406
        %v3487 = vmul.f32 %v3404, %v3407
        %v3488 = vadd.f32 %v3166, %v3408
        %v3489 = vadd.f32 %v3167, %v3409
        %v3490 = vadd.f32 %v3168, %v3410
        %v3491 = vadd.f32 %v3169, %v3411
        %v3492 = vadd.f32 %v3170, %v3412
        %v3493 = vadd.f32 %v3171, %v3413
        %v3494 = vadd.f32 %v3172, %v3414
        %v3495 = vadd.f32 %v3173, %v3415
        %v3496 = vadd.f32 %v3174, %v3416
        %v3497 = vadd.f32 %v3175, %v3417
        %v3498 = vadd.f32 %v3176, %v3418
        %v3499 = vadd.f32 %v3177, %v3419
        %v3500 = vadd.f32 %v3178, %v3420
        %v3501 = vadd.f32 %v3179, %v3421
        %v3502 = vadd.f32 %v3180, %v3422
        %v3503 = vadd.f32 %v3181, %v3423
        %v3504 = vadd.f32 %v3182, %v3424
        %v3505 = vadd.f32 %v3183, %v3425
        %v3506 = vadd.f32 %v3184, %v3426
        %v3507 = vadd.f32 %v3185, %v3427
        %v3508 = vadd.f32 %v3186, %v3428
        %v3509 = vadd.f32 %v3187, %v3429
        %v3510 = vadd.f32 %v3188, %v3430
        %v3511 = vadd.f32 %v3189, %v3431
        %v3512 = vadd.f32 %v3190, %v3432
        %v3513 = vadd.f32 %v3191, %v3433
        %v3514 = vadd.f32 %v3192, %v3434
        %v3515 = vadd.f32 %v3193, %v3435
        %v3516 = vadd.f32 %v3194, %v3436
        %v3517 = vadd.f32 %v3195, %v3437
        %v3518 = vadd.f32 %v3196, %v3438
        %v3519 = vadd.f32 %v3197, %v3439
        %v3520 = vadd.f32 %v3198, %v3440
        %v3521 = vadd.f32 %v3199, %v3441
        %v3522 = vadd.f32 %v3200, %v3442
        %v3523 = vadd.f32 %v3201, %v3443
        %v3524 = vadd.f32 %v3202, %v3444
        %v3525 = vadd.f32 %v3203, %v3445
        %v3526 = vadd.f32 %v3204, %v3446
        %v3527 = vadd.f32 %v3205, %v3447
        %v3528 = vadd.f32 %v3206, %v3448
        %v3529 = vadd.f32 %v3207, %v3449
        %v3530 = vadd.f32 %v3208, %v3450
        %v3531 = vadd.f32 %v3209, %v3451
        %v3532 = vadd.f32 %v3210, %v3452
        %v3533 = vadd.f32 %v3211, %v3453
        %v3534 = vadd.f32 %v3212, %v3454
        %v3535 = vadd.f32 %v3213, %v3455
        %v3536 = vadd.f32 %v3214, %v3456
        %v3537 = vadd.f32 %v3215, %v3457
        %v3538 = vadd.f32 %v3216, %v3458
        %v3539 = vadd.f32 %v3217, %v3459
        %v3540 = vadd.f32 %v3218, %v3460
        %v3541 = vadd.f32 %v3219, %v3461
        %v3542 = vadd.f32 %v3220, %v3462
        %v3543 = vadd.f32 %v3221, %v3463
        %v3544 = vadd.f32 %v3222, %v3464
        %v3545 = vadd.f32 %v3223, %v3465
        %v3546 = vadd.f32 %v3224, %v3466
        %v3547 = vadd.f32 %v3225, %v3467
        %v3548 = vadd.f32 %v3226, %v3468
        %v3549 = vadd.f32 %v3227, %v3469
        %v3550 = vadd.f32 %v3228, %v3470
        %v3551 = vadd.f32 %v3229, %v3471
        %v3552 = vadd.f32 %v3230, %v3472
        %v3553 = vadd.f32 %v3231, %v3473
        %v3554 = vadd.f32 %v3232, %v3474
        %v3555 = vadd.f32 %v3233, %v3475
        %v3556 = vadd.f32 %v3234, %v3476
        %v3557 = vadd.f32 %v3235, %v3477
        %v3558 = vadd.f32 %v3236, %v3478
        %v3559 = vadd.f32 %v3237, %v3479
        %v3560 = vadd.f32 %v3238, %v3480
        %v3561 = vadd.f32 %v3239, %v3481
        %v3562 = vadd.f32 %v3240, %v3482
        %v3563 = vadd.f32 %v3241, %v3483
        %v3564 = vadd.f32 %v3242, %v3484
        %v3565 = vadd.f32 %v3243, %v3485
        %v3566 = vadd.f32 %v3244, %v3486
        %v3567 = vadd.f32 %v3245, %v3487
        %v3568 = vadd.f32 %v1916, %v3488
        %v3569 = vadd.f32 %v1917, %v3489
        %v3570 = vadd.f32 %v1918, %v3490
        %v3571 = vadd.f32 %v1919, %v3491
        %v3572 = vadd.f32 %v1920, %v3492
        %v3573 = vadd.f32 %v1921, %v3493
        %v3574 = vadd.f32 %v1922, %v3494
        %v3575 = vadd.f32 %v1923, %v3495
        %v3576 = vadd.f32 %v1924, %v3496
        %v3577 = vadd.f32 %v1925, %v3497
        %v3578 = vadd.f32 %v1926, %v3498
        %v3579 = vadd.f32 %v1927, %v3499
        %v3580 = vadd.f32 %v1928, %v3500
        %v3581 = vadd.f32 %v1929, %v3501
        %v3582 = vadd.f32 %v1930, %v3502
        %v3583 = vadd.f32 %v1931, %v3503
        %v3584 = vadd.f32 %v1932, %v3504
        %v3585 = vadd.f32 %v1933, %v3505
        %v3586 = vadd.f32 %v1934, %v3506
        %v3587 = vadd.f32 %v1935, %v3507
        %v3588 = vadd.f32 %v1936, %v3508
        %v3589 = vadd.f32 %v1937, %v3509
        %v3590 = vadd.f32 %v1938, %v3510
        %v3591 = vadd.f32 %v1939, %v3511
        %v3592 = vadd.f32 %v1940, %v3512
        %v3593 = vadd.f32 %v1941, %v3513
        %v3594 = vadd.f32 %v1942, %v3514
        %v3595 = vadd.f32 %v1943, %v3515
        %v3596 = vadd.f32 %v1944, %v3516
        %v3597 = vadd.f32 %v1945, %v3517
        %v3598 = vadd.f32 %v1946, %v3518
        %v3599 = vadd.f32 %v1947, %v3519
        %v3600 = vadd.f32 %v1948, %v3520
        %v3601 = vadd.f32 %v1949, %v3521
        %v3602 = vadd.f32 %v1950, %v3522
        %v3603 = vadd.f32 %v1951, %v3523
        %v3604 = vadd.f32 %v1952, %v3524
        %v3605 = vadd.f32 %v1953, %v3525
        %v3606 = vadd.f32 %v1954, %v3526
        %v3607 = vadd.f32 %v1955, %v3527
        %v3608 = vadd.f32 %v1956, %v3528
        %v3609 = vadd.f32 %v1957, %v3529
        %v3610 = vadd.f32 %v1958, %v3530
        %v3611 = vadd.f32 %v1959, %v3531
        %v3612 = vadd.f32 %v1960, %v3532
        %v3613 = vadd.f32 %v1961, %v3533
        %v3614 = vadd.f32 %v1962, %v3534
        %v3615 = vadd.f32 %v1963, %v3535
        %v3616 = vadd.f32 %v1964, %v3536
        %v3617 = vadd.f32 %v1965, %v3537
        %v3618 = vadd.f32 %v1966, %v3538
        %v3619 = vadd.f32 %v1967, %v3539
        %v3620 = vadd.f32 %v1968, %v3540
        %v3621 = vadd.f32 %v1969, %v3541
        %v3622 = vadd.f32 %v1970, %v3542
        %v3623 = vadd.f32 %v1971, %v3543
        %v3624 = vadd.f32 %v1972, %v3544
        %v3625 = vadd.f32 %v1973, %v3545
        %v3626 = vadd.f32 %v1974, %v3546
        %v3627 = vadd.f32 %v1975, %v3547
        %v3628 = vadd.f32 %v1976, %v3548
        %v3629 = vadd.f32 %v1977, %v3549
        %v3630 = vadd.f32 %v1978, %v3550
        %v3631 = vadd.f32 %v1979, %v3551
        %v3632 = vadd.f32 %v1980, %v3552
        %v3633 = vadd.f32 %v1981, %v3553
        %v3634 = vadd.f32 %v1982, %v3554
        %v3635 = vadd.f32 %v1983, %v3555
        %v3636 = vadd.f32 %v1984, %v3556
        %v3637 = vadd.f32 %v1985, %v3557
        %v3638 = vadd.f32 %v1986, %v3558
        %v3639 = vadd.f32 %v1987, %v3559
        %v3640 = vadd.f32 %v1988, %v3560
        %v3641 = vadd.f32 %v1989, %v3561
        %v3642 = vadd.f32 %v1990, %v3562
        %v3643 = vadd.f32 %v1991, %v3563
        %v3644 = vadd.f32 %v1992, %v3564
        %v3645 = vadd.f32 %v1993, %v3565
        %v3646 = vadd.f32 %v1994, %v3566
        %v3647 = vadd.f32 %v1995, %v3567
        %v3648 = vld [vmem:[%s4] sm:$0x3]
        %v3650 = vperm.slane %v3648, 0
        %v3651 = vperm.slane %v3648, 1
        %v3654 = vadd.f32 %v3568, %v3650
        %v3655 = vadd.f32 %v3569, %v3651
        %v3656 = vadd.f32 %v3570, %v3650
        %v3657 = vadd.f32 %v3571, %v3651
        %v3658 = vadd.f32 %v3572, %v3650
        %v3659 = vadd.f32 %v3573, %v3651
        %v3660 = vadd.f32 %v3574, %v3650
        %v3661 = vadd.f32 %v3575, %v3651
        %v3662 = vadd.f32 %v3576, %v3650
        %v3663 = vadd.f32 %v3577, %v3651
        %v3664 = vadd.f32 %v3578, %v3650
        %v3665 = vadd.f32 %v3579, %v3651
        %v3666 = vadd.f32 %v3580, %v3650
        %v3667 = vadd.f32 %v3581, %v3651
        %v3668 = vadd.f32 %v3582, %v3650
        %v3669 = vadd.f32 %v3583, %v3651
        %v3670 = vadd.f32 %v3584, %v3650
        %v3671 = vadd.f32 %v3585, %v3651
        %v3672 = vadd.f32 %v3586, %v3650
        %v3673 = vadd.f32 %v3587, %v3651
        %v3674 = vadd.f32 %v3588, %v3650
        %v3675 = vadd.f32 %v3589, %v3651
        %v3676 = vadd.f32 %v3590, %v3650
        %v3677 = vadd.f32 %v3591, %v3651
        %v3678 = vadd.f32 %v3592, %v3650
        %v3679 = vadd.f32 %v3593, %v3651
        %v3680 = vadd.f32 %v3594, %v3650
        %v3681 = vadd.f32 %v3595, %v3651
        %v3682 = vadd.f32 %v3596, %v3650
        %v3683 = vadd.f32 %v3597, %v3651
        %v3684 = vadd.f32 %v3598, %v3650
        %v3685 = vadd.f32 %v3599, %v3651
        %v3686 = vadd.f32 %v3600, %v3650
        %v3687 = vadd.f32 %v3601, %v3651
        %v3688 = vadd.f32 %v3602, %v3650
        %v3689 = vadd.f32 %v3603, %v3651
        %v3690 = vadd.f32 %v3604, %v3650
        %v3691 = vadd.f32 %v3605, %v3651
        %v3692 = vadd.f32 %v3606, %v3650
        %v3693 = vadd.f32 %v3607, %v3651
        %v3694 = vadd.f32 %v3608, %v3650
        %v3695 = vadd.f32 %v3609, %v3651
        %v3696 = vadd.f32 %v3610, %v3650
        %v3697 = vadd.f32 %v3611, %v3651
        %v3698 = vadd.f32 %v3612, %v3650
        %v3699 = vadd.f32 %v3613, %v3651
        %v3700 = vadd.f32 %v3614, %v3650
        %v3701 = vadd.f32 %v3615, %v3651
        %v3702 = vadd.f32 %v3616, %v3650
        %v3703 = vadd.f32 %v3617, %v3651
        %v3704 = vadd.f32 %v3618, %v3650
        %v3705 = vadd.f32 %v3619, %v3651
        %v3706 = vadd.f32 %v3620, %v3650
        %v3707 = vadd.f32 %v3621, %v3651
        %v3708 = vadd.f32 %v3622, %v3650
        %v3709 = vadd.f32 %v3623, %v3651
        %v3710 = vadd.f32 %v3624, %v3650
        %v3711 = vadd.f32 %v3625, %v3651
        %v3712 = vadd.f32 %v3626, %v3650
        %v3713 = vadd.f32 %v3627, %v3651
        %v3714 = vadd.f32 %v3628, %v3650
        %v3715 = vadd.f32 %v3629, %v3651
        %v3716 = vadd.f32 %v3630, %v3650
        %v3717 = vadd.f32 %v3631, %v3651
        %v3718 = vadd.f32 %v3632, %v3650
        %v3719 = vadd.f32 %v3633, %v3651
        %v3720 = vadd.f32 %v3634, %v3650
        %v3721 = vadd.f32 %v3635, %v3651
        %v3722 = vadd.f32 %v3636, %v3650
        %v3723 = vadd.f32 %v3637, %v3651
        %v3724 = vadd.f32 %v3638, %v3650
        %v3725 = vadd.f32 %v3639, %v3651
        %v3726 = vadd.f32 %v3640, %v3650
        %v3727 = vadd.f32 %v3641, %v3651
        %v3728 = vadd.f32 %v3642, %v3650
        %v3729 = vadd.f32 %v3643, %v3651
        %v3730 = vadd.f32 %v3644, %v3650
        %v3731 = vadd.f32 %v3645, %v3651
        %v3732 = vadd.f32 %v3646, %v3650
        %v3733 = vadd.f32 %v3647, %v3651
        %v3734 = vadd.f32 %v3654, %v3655
        %3735 = vadd.xlane.f32.xlu0 %v3734
        %v3736 = vpop.xlane.xlu0 %3735
        %v3737 = vadd.f32 %v3656, %v3657
        %3738 = vadd.xlane.f32.xlu0 %v3737
        %v3739 = vpop.xlane.xlu0 %3738
        %v3740 = vadd.f32 %v3658, %v3659
        %3741 = vadd.xlane.f32.xlu0 %v3740
        %v3742 = vpop.xlane.xlu0 %3741
        %v3743 = vadd.f32 %v3660, %v3661
        %3744 = vadd.xlane.f32.xlu0 %v3743
        %v3745 = vpop.xlane.xlu0 %3744
        %v3746 = vadd.f32 %v3662, %v3663
        %3747 = vadd.xlane.f32.xlu0 %v3746
        %v3748 = vpop.xlane.xlu0 %3747
        %v3749 = vadd.f32 %v3664, %v3665
        %3750 = vadd.xlane.f32.xlu0 %v3749
        %v3751 = vpop.xlane.xlu0 %3750
        %v3752 = vadd.f32 %v3666, %v3667
        %3753 = vadd.xlane.f32.xlu0 %v3752
        %v3754 = vpop.xlane.xlu0 %3753
        %v3755 = vadd.f32 %v3668, %v3669
        %3756 = vadd.xlane.f32.xlu0 %v3755
        %v3757 = vpop.xlane.xlu0 %3756
        %v3758 = vadd.f32 %v3670, %v3671
        %3759 = vadd.xlane.f32.xlu0 %v3758
        %v3760 = vpop.xlane.xlu0 %3759
        %v3761 = vadd.f32 %v3672, %v3673
        %3762 = vadd.xlane.f32.xlu0 %v3761
        %v3763 = vpop.xlane.xlu0 %3762
        %v3764 = vadd.f32 %v3674, %v3675
        %3765 = vadd.xlane.f32.xlu0 %v3764
        %v3766 = vpop.xlane.xlu0 %3765
        %v3767 = vadd.f32 %v3676, %v3677
        %3768 = vadd.xlane.f32.xlu0 %v3767
        %v3769 = vpop.xlane.xlu0 %3768
        %v3770 = vadd.f32 %v3678, %v3679
        %3771 = vadd.xlane.f32.xlu0 %v3770
        %v3772 = vpop.xlane.xlu0 %3771
        %v3773 = vadd.f32 %v3680, %v3681
        %3774 = vadd.xlane.f32.xlu0 %v3773
        %v3775 = vpop.xlane.xlu0 %3774
        %v3776 = vadd.f32 %v3682, %v3683
        %3777 = vadd.xlane.f32.xlu0 %v3776
        %v3778 = vpop.xlane.xlu0 %3777
        %v3779 = vadd.f32 %v3684, %v3685
        %3780 = vadd.xlane.f32.xlu0 %v3779
        %v3781 = vpop.xlane.xlu0 %3780
        %v3782 = vadd.f32 %v3686, %v3687
        %3783 = vadd.xlane.f32.xlu0 %v3782
        %v3784 = vpop.xlane.xlu0 %3783
        %v3785 = vadd.f32 %v3688, %v3689
        %3786 = vadd.xlane.f32.xlu0 %v3785
        %v3787 = vpop.xlane.xlu0 %3786
        %v3788 = vadd.f32 %v3690, %v3691
        %3789 = vadd.xlane.f32.xlu0 %v3788
        %v3790 = vpop.xlane.xlu0 %3789
        %v3791 = vadd.f32 %v3692, %v3693
        %3792 = vadd.xlane.f32.xlu0 %v3791
        %v3793 = vpop.xlane.xlu0 %3792
        %v3794 = vadd.f32 %v3694, %v3695
        %3795 = vadd.xlane.f32.xlu0 %v3794
        %v3796 = vpop.xlane.xlu0 %3795
        %v3797 = vadd.f32 %v3696, %v3697
        %3798 = vadd.xlane.f32.xlu0 %v3797
        %v3799 = vpop.xlane.xlu0 %3798
        %v3800 = vadd.f32 %v3698, %v3699
        %3801 = vadd.xlane.f32.xlu0 %v3800
        %v3802 = vpop.xlane.xlu0 %3801
        %v3803 = vadd.f32 %v3700, %v3701
        %3804 = vadd.xlane.f32.xlu0 %v3803
        %v3805 = vpop.xlane.xlu0 %3804
        %v3806 = vadd.f32 %v3702, %v3703
        %3807 = vadd.xlane.f32.xlu0 %v3806
        %v3808 = vpop.xlane.xlu0 %3807
        %v3809 = vadd.f32 %v3704, %v3705
        %3810 = vadd.xlane.f32.xlu0 %v3809
        %v3811 = vpop.xlane.xlu0 %3810
        %v3812 = vadd.f32 %v3706, %v3707
        %3813 = vadd.xlane.f32.xlu0 %v3812
        %v3814 = vpop.xlane.xlu0 %3813
        %v3815 = vadd.f32 %v3708, %v3709
        %3816 = vadd.xlane.f32.xlu0 %v3815
        %v3817 = vpop.xlane.xlu0 %3816
        %v3818 = vadd.f32 %v3710, %v3711
        %3819 = vadd.xlane.f32.xlu0 %v3818
        %v3820 = vpop.xlane.xlu0 %3819
        %v3821 = vadd.f32 %v3712, %v3713
        %3822 = vadd.xlane.f32.xlu0 %v3821
        %v3823 = vpop.xlane.xlu0 %3822
        %v3824 = vadd.f32 %v3714, %v3715
        %3825 = vadd.xlane.f32.xlu0 %v3824
        %v3826 = vpop.xlane.xlu0 %3825
        %v3827 = vadd.f32 %v3716, %v3717
        %3828 = vadd.xlane.f32.xlu0 %v3827
        %v3829 = vpop.xlane.xlu0 %3828
        %v3830 = vadd.f32 %v3718, %v3719
        %3831 = vadd.xlane.f32.xlu0 %v3830
        %v3832 = vpop.xlane.xlu0 %3831
        %v3833 = vadd.f32 %v3720, %v3721
        %3834 = vadd.xlane.f32.xlu0 %v3833
        %v3835 = vpop.xlane.xlu0 %3834
        %v3836 = vadd.f32 %v3722, %v3723
        %3837 = vadd.xlane.f32.xlu0 %v3836
        %v3838 = vpop.xlane.xlu0 %3837
        %v3839 = vadd.f32 %v3724, %v3725
        %3840 = vadd.xlane.f32.xlu0 %v3839
        %v3841 = vpop.xlane.xlu0 %3840
        %v3842 = vadd.f32 %v3726, %v3727
        %3843 = vadd.xlane.f32.xlu0 %v3842
        %v3844 = vpop.xlane.xlu0 %3843
        %v3845 = vadd.f32 %v3728, %v3729
        %3846 = vadd.xlane.f32.xlu0 %v3845
        %v3847 = vpop.xlane.xlu0 %3846
        %v3848 = vadd.f32 %v3730, %v3731
        %3849 = vadd.xlane.f32.xlu0 %v3848
        %v3850 = vpop.xlane.xlu0 %3849
        %v3851 = vadd.f32 %v3732, %v3733
        %3852 = vadd.xlane.f32.xlu0 %v3851
        %v3853 = vpop.xlane.xlu0 %3852
        %v3854 = vrcp.pop 256.0
        %v3855 = vmul.f32 256.0, %v3854
        %v3856 = vsub.f32 1.0, %v3855
        %v3857 = vmul.f32 %v3854, %v3856
        %v3858 = vadd.f32 %v3854, %v3857
        %vm3859 = vweird.f32 %v3854
        %v3860 = vsel %vm3859, %v3854, %v3858
        %v3861 = vmul.f32 %v3736, %v3860
        %v3862 = vmul.f32 %v3739, %v3860
        %v3863 = vmul.f32 %v3742, %v3860
        %v3864 = vmul.f32 %v3745, %v3860
        %v3865 = vmul.f32 %v3748, %v3860
        %v3866 = vmul.f32 %v3751, %v3860
        %v3867 = vmul.f32 %v3754, %v3860
        %v3868 = vmul.f32 %v3757, %v3860
        %v3869 = vmul.f32 %v3760, %v3860
        %v3870 = vmul.f32 %v3763, %v3860
        %v3871 = vmul.f32 %v3766, %v3860
        %v3872 = vmul.f32 %v3769, %v3860
        %v3873 = vmul.f32 %v3772, %v3860
        %v3874 = vmul.f32 %v3775, %v3860
        %v3875 = vmul.f32 %v3778, %v3860
        %v3876 = vmul.f32 %v3781, %v3860
        %v3877 = vmul.f32 %v3784, %v3860
        %v3878 = vmul.f32 %v3787, %v3860
        %v3879 = vmul.f32 %v3790, %v3860
        %v3880 = vmul.f32 %v3793, %v3860
        %v3881 = vmul.f32 %v3796, %v3860
        %v3882 = vmul.f32 %v3799, %v3860
        %v3883 = vmul.f32 %v3802, %v3860
        %v3884 = vmul.f32 %v3805, %v3860
        %v3885 = vmul.f32 %v3808, %v3860
        %v3886 = vmul.f32 %v3811, %v3860
        %v3887 = vmul.f32 %v3814, %v3860
        %v3888 = vmul.f32 %v3817, %v3860
        %v3889 = vmul.f32 %v3820, %v3860
        %v3890 = vmul.f32 %v3823, %v3860
        %v3891 = vmul.f32 %v3826, %v3860
        %v3892 = vmul.f32 %v3829, %v3860
        %v3893 = vmul.f32 %v3832, %v3860
        %v3894 = vmul.f32 %v3835, %v3860
        %v3895 = vmul.f32 %v3838, %v3860
        %v3896 = vmul.f32 %v3841, %v3860
        %v3897 = vmul.f32 %v3844, %v3860
        %v3898 = vmul.f32 %v3847, %v3860
        %v3899 = vmul.f32 %v3850, %v3860
        %v3900 = vmul.f32 %v3853, %v3860
        %v3901 = vsub.f32 %v3654, %v3861
        %v3902 = vsub.f32 %v3655, %v3861
        %v3903 = vsub.f32 %v3656, %v3862
        %v3904 = vsub.f32 %v3657, %v3862
        %v3905 = vsub.f32 %v3658, %v3863
        %v3906 = vsub.f32 %v3659, %v3863
        %v3907 = vsub.f32 %v3660, %v3864
        %v3908 = vsub.f32 %v3661, %v3864
        %v3909 = vsub.f32 %v3662, %v3865
        %v3910 = vsub.f32 %v3663, %v3865
        %v3911 = vsub.f32 %v3664, %v3866
        %v3912 = vsub.f32 %v3665, %v3866
        %v3913 = vsub.f32 %v3666, %v3867
        %v3914 = vsub.f32 %v3667, %v3867
        %v3915 = vsub.f32 %v3668, %v3868
        %v3916 = vsub.f32 %v3669, %v3868
        %v3917 = vsub.f32 %v3670, %v3869
        %v3918 = vsub.f32 %v3671, %v3869
        %v3919 = vsub.f32 %v3672, %v3870
        %v3920 = vsub.f32 %v3673, %v3870
        %v3921 = vsub.f32 %v3674, %v3871
        %v3922 = vsub.f32 %v3675, %v3871
        %v3923 = vsub.f32 %v3676, %v3872
        %v3924 = vsub.f32 %v3677, %v3872
        %v3925 = vsub.f32 %v3678, %v3873
        %v3926 = vsub.f32 %v3679, %v3873
        %v3927 = vsub.f32 %v3680, %v3874
        %v3928 = vsub.f32 %v3681, %v3874
        %v3929 = vsub.f32 %v3682, %v3875
        %v3930 = vsub.f32 %v3683, %v3875
        %v3931 = vsub.f32 %v3684, %v3876
        %v3932 = vsub.f32 %v3685, %v3876
        %v3933 = vsub.f32 %v3686, %v3877
        %v3934 = vsub.f32 %v3687, %v3877
        %v3935 = vsub.f32 %v3688, %v3878
        %v3936 = vsub.f32 %v3689, %v3878
        %v3937 = vsub.f32 %v3690, %v3879
        %v3938 = vsub.f32 %v3691, %v3879
        %v3939 = vsub.f32 %v3692, %v3880
        %v3940 = vsub.f32 %v3693, %v3880
        %v3941 = vsub.f32 %v3694, %v3881
        %v3942 = vsub.f32 %v3695, %v3881
        %v3943 = vsub.f32 %v3696, %v3882
        %v3944 = vsub.f32 %v3697, %v3882
        %v3945 = vsub.f32 %v3698, %v3883
        %v3946 = vsub.f32 %v3699, %v3883
        %v3947 = vsub.f32 %v3700, %v3884
        %v3948 = vsub.f32 %v3701, %v3884
        %v3949 = vsub.f32 %v3702, %v3885
        %v3950 = vsub.f32 %v3703, %v3885
        %v3951 = vsub.f32 %v3704, %v3886
        %v3952 = vsub.f32 %v3705, %v3886
        %v3953 = vsub.f32 %v3706, %v3887
        %v3954 = vsub.f32 %v3707, %v3887
        %v3955 = vsub.f32 %v3708, %v3888
        %v3956 = vsub.f32 %v3709, %v3888
        %v3957 = vsub.f32 %v3710, %v3889
        %v3958 = vsub.f32 %v3711, %v3889
        %v3959 = vsub.f32 %v3712, %v3890
        %v3960 = vsub.f32 %v3713, %v3890
        %v3961 = vsub.f32 %v3714, %v3891
        %v3962 = vsub.f32 %v3715, %v3891
        %v3963 = vsub.f32 %v3716, %v3892
        %v3964 = vsub.f32 %v3717, %v3892
        %v3965 = vsub.f32 %v3718, %v3893
        %v3966 = vsub.f32 %v3719, %v3893
        %v3967 = vsub.f32 %v3720, %v3894
        %v3968 = vsub.f32 %v3721, %v3894
        %v3969 = vsub.f32 %v3722, %v3895
        %v3970 = vsub.f32 %v3723, %v3895
        %v3971 = vsub.f32 %v3724, %v3896
        %v3972 = vsub.f32 %v3725, %v3896
        %v3973 = vsub.f32 %v3726, %v3897
        %v3974 = vsub.f32 %v3727, %v3897
        %v3975 = vsub.f32 %v3728, %v3898
        %v3976 = vsub.f32 %v3729, %v3898
        %v3977 = vsub.f32 %v3730, %v3899
        %v3978 = vsub.f32 %v3731, %v3899
        %v3979 = vsub.f32 %v3732, %v3900
        %v3980 = vsub.f32 %v3733, %v3900
        %v3981 = vmul.f32 %v3901, %v3901
        %v3982 = vmul.f32 %v3902, %v3902
        %v3983 = vmul.f32 %v3903, %v3903
        %v3984 = vmul.f32 %v3904, %v3904
        %v3985 = vmul.f32 %v3905, %v3905
        %v3986 = vmul.f32 %v3906, %v3906
        %v3987 = vmul.f32 %v3907, %v3907
        %v3988 = vmul.f32 %v3908, %v3908
        %v3989 = vmul.f32 %v3909, %v3909
        %v3990 = vmul.f32 %v3910, %v3910
        %v3991 = vmul.f32 %v3911, %v3911
        %v3992 = vmul.f32 %v3912, %v3912
        %v3993 = vmul.f32 %v3913, %v3913
        %v3994 = vmul.f32 %v3914, %v3914
        %v3995 = vmul.f32 %v3915, %v3915
        %v3996 = vmul.f32 %v3916, %v3916
        %v3997 = vmul.f32 %v3917, %v3917
        %v3998 = vmul.f32 %v3918, %v3918
        %v3999 = vmul.f32 %v3919, %v3919
        %v4000 = vmul.f32 %v3920, %v3920
        %v4001 = vmul.f32 %v3921, %v3921
        %v4002 = vmul.f32 %v3922, %v3922
        %v4003 = vmul.f32 %v3923, %v3923
        %v4004 = vmul.f32 %v3924, %v3924
        %v4005 = vmul.f32 %v3925, %v3925
        %v4006 = vmul.f32 %v3926, %v3926
        %v4007 = vmul.f32 %v3927, %v3927
        %v4008 = vmul.f32 %v3928, %v3928
        %v4009 = vmul.f32 %v3929, %v3929
        %v4010 = vmul.f32 %v3930, %v3930
        %v4011 = vmul.f32 %v3931, %v3931
        %v4012 = vmul.f32 %v3932, %v3932
        %v4013 = vmul.f32 %v3933, %v3933
        %v4014 = vmul.f32 %v3934, %v3934
        %v4015 = vmul.f32 %v3935, %v3935
        %v4016 = vmul.f32 %v3936, %v3936
        %v4017 = vmul.f32 %v3937, %v3937
        %v4018 = vmul.f32 %v3938, %v3938
        %v4019 = vmul.f32 %v3939, %v3939
        %v4020 = vmul.f32 %v3940, %v3940
        %v4021 = vmul.f32 %v3941, %v3941
        %v4022 = vmul.f32 %v3942, %v3942
        %v4023 = vmul.f32 %v3943, %v3943
        %v4024 = vmul.f32 %v3944, %v3944
        %v4025 = vmul.f32 %v3945, %v3945
        %v4026 = vmul.f32 %v3946, %v3946
        %v4027 = vmul.f32 %v3947, %v3947
        %v4028 = vmul.f32 %v3948, %v3948
        %v4029 = vmul.f32 %v3949, %v3949
        %v4030 = vmul.f32 %v3950, %v3950
        %v4031 = vmul.f32 %v3951, %v3951
        %v4032 = vmul.f32 %v3952, %v3952
        %v4033 = vmul.f32 %v3953, %v3953
        %v4034 = vmul.f32 %v3954, %v3954
        %v4035 = vmul.f32 %v3955, %v3955
        %v4036 = vmul.f32 %v3956, %v3956
        %v4037 = vmul.f32 %v3957, %v3957
        %v4038 = vmul.f32 %v3958, %v3958
        %v4039 = vmul.f32 %v3959, %v3959
        %v4040 = vmul.f32 %v3960, %v3960
        %v4041 = vmul.f32 %v3961, %v3961
        %v4042 = vmul.f32 %v3962, %v3962
        %v4043 = vmul.f32 %v3963, %v3963
        %v4044 = vmul.f32 %v3964, %v3964
        %v4045 = vmul.f32 %v3965, %v3965
        %v4046 = vmul.f32 %v3966, %v3966
        %v4047 = vmul.f32 %v3967, %v3967
        %v4048 = vmul.f32 %v3968, %v3968
        %v4049 = vmul.f32 %v3969, %v3969
        %v4050 = vmul.f32 %v3970, %v3970
        %v4051 = vmul.f32 %v3971, %v3971
        %v4052 = vmul.f32 %v3972, %v3972
        %v4053 = vmul.f32 %v3973, %v3973
        %v4054 = vmul.f32 %v3974, %v3974
        %v4055 = vmul.f32 %v3975, %v3975
        %v4056 = vmul.f32 %v3976, %v3976
        %v4057 = vmul.f32 %v3977, %v3977
        %v4058 = vmul.f32 %v3978, %v3978
        %v4059 = vmul.f32 %v3979, %v3979
        %v4060 = vmul.f32 %v3980, %v3980
        %v4061 = vadd.f32 %v3981, %v3982
        %4062 = vadd.xlane.f32.xlu0 %v4061
        %v4063 = vpop.xlane.xlu0 %4062
        %v4064 = vadd.f32 %v3983, %v3984
        %4065 = vadd.xlane.f32.xlu0 %v4064
        %v4066 = vpop.xlane.xlu0 %4065
        %v4067 = vadd.f32 %v3985, %v3986
        %4068 = vadd.xlane.f32.xlu0 %v4067
        %v4069 = vpop.xlane.xlu0 %4068
        %v4070 = vadd.f32 %v3987, %v3988
        %4071 = vadd.xlane.f32.xlu0 %v4070
        %v4072 = vpop.xlane.xlu0 %4071
        %v4073 = vadd.f32 %v3989, %v3990
        %4074 = vadd.xlane.f32.xlu0 %v4073
        %v4075 = vpop.xlane.xlu0 %4074
        %v4076 = vadd.f32 %v3991, %v3992
        %4077 = vadd.xlane.f32.xlu0 %v4076
        %v4078 = vpop.xlane.xlu0 %4077
        %v4079 = vadd.f32 %v3993, %v3994
        %4080 = vadd.xlane.f32.xlu0 %v4079
        %v4081 = vpop.xlane.xlu0 %4080
        %v4082 = vadd.f32 %v3995, %v3996
        %4083 = vadd.xlane.f32.xlu0 %v4082
        %v4084 = vpop.xlane.xlu0 %4083
        %v4085 = vadd.f32 %v3997, %v3998
        %4086 = vadd.xlane.f32.xlu0 %v4085
        %v4087 = vpop.xlane.xlu0 %4086
        %v4088 = vadd.f32 %v3999, %v4000
        %4089 = vadd.xlane.f32.xlu0 %v4088
        %v4090 = vpop.xlane.xlu0 %4089
        %v4091 = vadd.f32 %v4001, %v4002
        %4092 = vadd.xlane.f32.xlu0 %v4091
        %v4093 = vpop.xlane.xlu0 %4092
        %v4094 = vadd.f32 %v4003, %v4004
        %4095 = vadd.xlane.f32.xlu0 %v4094
        %v4096 = vpop.xlane.xlu0 %4095
        %v4097 = vadd.f32 %v4005, %v4006
        %4098 = vadd.xlane.f32.xlu0 %v4097
        %v4099 = vpop.xlane.xlu0 %4098
        %v4100 = vadd.f32 %v4007, %v4008
        %4101 = vadd.xlane.f32.xlu0 %v4100
        %v4102 = vpop.xlane.xlu0 %4101
        %v4103 = vadd.f32 %v4009, %v4010
        %4104 = vadd.xlane.f32.xlu0 %v4103
        %v4105 = vpop.xlane.xlu0 %4104
        %v4106 = vadd.f32 %v4011, %v4012
        %4107 = vadd.xlane.f32.xlu0 %v4106
        %v4108 = vpop.xlane.xlu0 %4107
        %v4109 = vadd.f32 %v4013, %v4014
        %4110 = vadd.xlane.f32.xlu0 %v4109
        %v4111 = vpop.xlane.xlu0 %4110
        %v4112 = vadd.f32 %v4015, %v4016
        %4113 = vadd.xlane.f32.xlu0 %v4112
        %v4114 = vpop.xlane.xlu0 %4113
        %v4115 = vadd.f32 %v4017, %v4018
        %4116 = vadd.xlane.f32.xlu0 %v4115
        %v4117 = vpop.xlane.xlu0 %4116
        %v4118 = vadd.f32 %v4019, %v4020
        %4119 = vadd.xlane.f32.xlu0 %v4118
        %v4120 = vpop.xlane.xlu0 %4119
        %v4121 = vadd.f32 %v4021, %v4022
        %4122 = vadd.xlane.f32.xlu0 %v4121
        %v4123 = vpop.xlane.xlu0 %4122
        %v4124 = vadd.f32 %v4023, %v4024
        %4125 = vadd.xlane.f32.xlu0 %v4124
        %v4126 = vpop.xlane.xlu0 %4125
        %v4127 = vadd.f32 %v4025, %v4026
        %4128 = vadd.xlane.f32.xlu0 %v4127
        %v4129 = vpop.xlane.xlu0 %4128
        %v4130 = vadd.f32 %v4027, %v4028
        %4131 = vadd.xlane.f32.xlu0 %v4130
        %v4132 = vpop.xlane.xlu0 %4131
        %v4133 = vadd.f32 %v4029, %v4030
        %4134 = vadd.xlane.f32.xlu0 %v4133
        %v4135 = vpop.xlane.xlu0 %4134
        %v4136 = vadd.f32 %v4031, %v4032
        %4137 = vadd.xlane.f32.xlu0 %v4136
        %v4138 = vpop.xlane.xlu0 %4137
        %v4139 = vadd.f32 %v4033, %v4034
        %4140 = vadd.xlane.f32.xlu0 %v4139
        %v4141 = vpop.xlane.xlu0 %4140
        %v4142 = vadd.f32 %v4035, %v4036
        %4143 = vadd.xlane.f32.xlu0 %v4142
        %v4144 = vpop.xlane.xlu0 %4143
        %v4145 = vadd.f32 %v4037, %v4038
        %4146 = vadd.xlane.f32.xlu0 %v4145
        %v4147 = vpop.xlane.xlu0 %4146
        %v4148 = vadd.f32 %v4039, %v4040
        %4149 = vadd.xlane.f32.xlu0 %v4148
        %v4150 = vpop.xlane.xlu0 %4149
        %v4151 = vadd.f32 %v4041, %v4042
        %4152 = vadd.xlane.f32.xlu0 %v4151
        %v4153 = vpop.xlane.xlu0 %4152
        %v4154 = vadd.f32 %v4043, %v4044
        %4155 = vadd.xlane.f32.xlu0 %v4154
        %v4156 = vpop.xlane.xlu0 %4155
        %v4157 = vadd.f32 %v4045, %v4046
        %4158 = vadd.xlane.f32.xlu0 %v4157
        %v4159 = vpop.xlane.xlu0 %4158
        %v4160 = vadd.f32 %v4047, %v4048
        %4161 = vadd.xlane.f32.xlu0 %v4160
        %v4162 = vpop.xlane.xlu0 %4161
        %v4163 = vadd.f32 %v4049, %v4050
        %4164 = vadd.xlane.f32.xlu0 %v4163
        %v4165 = vpop.xlane.xlu0 %4164
        %v4166 = vadd.f32 %v4051, %v4052
        %4167 = vadd.xlane.f32.xlu0 %v4166
        %v4168 = vpop.xlane.xlu0 %4167
        %v4169 = vadd.f32 %v4053, %v4054
        %4170 = vadd.xlane.f32.xlu0 %v4169
        %v4171 = vpop.xlane.xlu0 %4170
        %v4172 = vadd.f32 %v4055, %v4056
        %4173 = vadd.xlane.f32.xlu0 %v4172
        %v4174 = vpop.xlane.xlu0 %4173
        %v4175 = vadd.f32 %v4057, %v4058
        %4176 = vadd.xlane.f32.xlu0 %v4175
        %v4177 = vpop.xlane.xlu0 %4176
        %v4178 = vadd.f32 %v4059, %v4060
        %4179 = vadd.xlane.f32.xlu0 %v4178
        %v4180 = vpop.xlane.xlu0 %4179
        %v4181 = vrcp.pop 255.0
        %v4182 = vmul.f32 255.0, %v4181
        %v4183 = vsub.f32 1.0, %v4182
        %v4184 = vmul.f32 %v4181, %v4183
        %v4185 = vadd.f32 %v4181, %v4184
        %vm4186 = vweird.f32 %v4181
        %v4187 = vsel %vm4186, %v4181, %v4185
        %v4188 = vmul.f32 %v4063, %v4187
        %v4189 = vmul.f32 %v4066, %v4187
        %v4190 = vmul.f32 %v4069, %v4187
        %v4191 = vmul.f32 %v4072, %v4187
        %v4192 = vmul.f32 %v4075, %v4187
        %v4193 = vmul.f32 %v4078, %v4187
        %v4194 = vmul.f32 %v4081, %v4187
        %v4195 = vmul.f32 %v4084, %v4187
        %v4196 = vmul.f32 %v4087, %v4187
        %v4197 = vmul.f32 %v4090, %v4187
        %v4198 = vmul.f32 %v4093, %v4187
        %v4199 = vmul.f32 %v4096, %v4187
        %v4200 = vmul.f32 %v4099, %v4187
        %v4201 = vmul.f32 %v4102, %v4187
        %v4202 = vmul.f32 %v4105, %v4187
        %v4203 = vmul.f32 %v4108, %v4187
        %v4204 = vmul.f32 %v4111, %v4187
        %v4205 = vmul.f32 %v4114, %v4187
        %v4206 = vmul.f32 %v4117, %v4187
        %v4207 = vmul.f32 %v4120, %v4187
        %v4208 = vmul.f32 %v4123, %v4187
        %v4209 = vmul.f32 %v4126, %v4187
        %v4210 = vmul.f32 %v4129, %v4187
        %v4211 = vmul.f32 %v4132, %v4187
        %v4212 = vmul.f32 %v4135, %v4187
        %v4213 = vmul.f32 %v4138, %v4187
        %v4214 = vmul.f32 %v4141, %v4187
        %v4215 = vmul.f32 %v4144, %v4187
        %v4216 = vmul.f32 %v4147, %v4187
        %v4217 = vmul.f32 %v4150, %v4187
        %v4218 = vmul.f32 %v4153, %v4187
        %v4219 = vmul.f32 %v4156, %v4187
        %v4220 = vmul.f32 %v4159, %v4187
        %v4221 = vmul.f32 %v4162, %v4187
        %v4222 = vmul.f32 %v4165, %v4187
        %v4223 = vmul.f32 %v4168, %v4187
        %v4224 = vmul.f32 %v4171, %v4187
        %v4225 = vmul.f32 %v4174, %v4187
        %v4226 = vmul.f32 %v4177, %v4187
        %v4227 = vmul.f32 %v4180, %v4187
        %v4228 = vadd.f32 %v4188, 1e-05
        %v4229 = vadd.f32 %v4189, 1e-05
        %v4230 = vadd.f32 %v4190, 1e-05
        %v4231 = vadd.f32 %v4191, 1e-05
        %v4232 = vadd.f32 %v4192, 1e-05
        %v4233 = vadd.f32 %v4193, 1e-05
        %v4234 = vadd.f32 %v4194, 1e-05
        %v4235 = vadd.f32 %v4195, 1e-05
        %v4236 = vadd.f32 %v4196, 1e-05
        %v4237 = vadd.f32 %v4197, 1e-05
        %v4238 = vadd.f32 %v4198, 1e-05
        %v4239 = vadd.f32 %v4199, 1e-05
        %v4240 = vadd.f32 %v4200, 1e-05
        %v4241 = vadd.f32 %v4201, 1e-05
        %v4242 = vadd.f32 %v4202, 1e-05
        %v4243 = vadd.f32 %v4203, 1e-05
        %v4244 = vadd.f32 %v4204, 1e-05
        %v4245 = vadd.f32 %v4205, 1e-05
        %v4246 = vadd.f32 %v4206, 1e-05
        %v4247 = vadd.f32 %v4207, 1e-05
        %v4248 = vadd.f32 %v4208, 1e-05
        %v4249 = vadd.f32 %v4209, 1e-05
        %v4250 = vadd.f32 %v4210, 1e-05
        %v4251 = vadd.f32 %v4211, 1e-05
        %v4252 = vadd.f32 %v4212, 1e-05
        %v4253 = vadd.f32 %v4213, 1e-05
        %v4254 = vadd.f32 %v4214, 1e-05
        %v4255 = vadd.f32 %v4215, 1e-05
        %v4256 = vadd.f32 %v4216, 1e-05
        %v4257 = vadd.f32 %v4217, 1e-05
        %v4258 = vadd.f32 %v4218, 1e-05
        %v4259 = vadd.f32 %v4219, 1e-05
        %v4260 = vadd.f32 %v4220, 1e-05
        %v4261 = vadd.f32 %v4221, 1e-05
        %v4262 = vadd.f32 %v4222, 1e-05
        %v4263 = vadd.f32 %v4223, 1e-05
        %v4264 = vadd.f32 %v4224, 1e-05
        %v4265 = vadd.f32 %v4225, 1e-05
        %v4266 = vadd.f32 %v4226, 1e-05
        %v4267 = vadd.f32 %v4227, 1e-05
        %v4268 = vrsqrt.pop %v4228
        %v4269 = vmul.f32 %v4268, %v4228
        %v4270 = vmul.f32 %v4269, %v4268
        %v4271 = vmul.f32 0.5, %v4270
        %v4272 = vsub.f32 1.5, %v4271
        %v4273 = vmul.f32 %v4268, %v4272
        %vm4274 = vweird.f32 %v4228
        %vm4275 = vweird.f32 %v4268
        %vm4276 = vmor %vm4274, %vm4275
        %v4277 = vsel %vm4276, %v4268, %v4273
        %v4278 = vrsqrt.pop %v4229
        %v4279 = vmul.f32 %v4278, %v4229
        %v4280 = vmul.f32 %v4279, %v4278
        %v4281 = vmul.f32 0.5, %v4280
        %v4282 = vsub.f32 1.5, %v4281
        %v4283 = vmul.f32 %v4278, %v4282
        %vm4284 = vweird.f32 %v4229
        %vm4285 = vweird.f32 %v4278
        %vm4286 = vmor %vm4284, %vm4285
        %v4287 = vsel %vm4286, %v4278, %v4283
        %v4288 = vrsqrt.pop %v4230
        %v4289 = vmul.f32 %v4288, %v4230
        %v4290 = vmul.f32 %v4289, %v4288
        %v4291 = vmul.f32 0.5, %v4290
        %v4292 = vsub.f32 1.5, %v4291
        %v4293 = vmul.f32 %v4288, %v4292
        %vm4294 = vweird.f32 %v4230
        %vm4295 = vweird.f32 %v4288
        %vm4296 = vmor %vm4294, %vm4295
        %v4297 = vsel %vm4296, %v4288, %v4293
        %v4298 = vrsqrt.pop %v4231
        %v4299 = vmul.f32 %v4298, %v4231
        %v4300 = vmul.f32 %v4299, %v4298
        %v4301 = vmul.f32 0.5, %v4300
        %v4302 = vsub.f32 1.5, %v4301
        %v4303 = vmul.f32 %v4298, %v4302
        %vm4304 = vweird.f32 %v4231
        %vm4305 = vweird.f32 %v4298
        %vm4306 = vmor %vm4304, %vm4305
        %v4307 = vsel %vm4306, %v4298, %v4303
        %v4308 = vrsqrt.pop %v4232
        %v4309 = vmul.f32 %v4308, %v4232
        %v4310 = vmul.f32 %v4309, %v4308
        %v4311 = vmul.f32 0.5, %v4310
        %v4312 = vsub.f32 1.5, %v4311
        %v4313 = vmul.f32 %v4308, %v4312
        %vm4314 = vweird.f32 %v4232
        %vm4315 = vweird.f32 %v4308
        %vm4316 = vmor %vm4314, %vm4315
        %v4317 = vsel %vm4316, %v4308, %v4313
        %v4318 = vrsqrt.pop %v4233
        %v4319 = vmul.f32 %v4318, %v4233
        %v4320 = vmul.f32 %v4319, %v4318
        %v4321 = vmul.f32 0.5, %v4320
        %v4322 = vsub.f32 1.5, %v4321
        %v4323 = vmul.f32 %v4318, %v4322
        %vm4324 = vweird.f32 %v4233
        %vm4325 = vweird.f32 %v4318
        %vm4326 = vmor %vm4324, %vm4325
        %v4327 = vsel %vm4326, %v4318, %v4323
        %v4328 = vrsqrt.pop %v4234
        %v4329 = vmul.f32 %v4328, %v4234
        %v4330 = vmul.f32 %v4329, %v4328
        %v4331 = vmul.f32 0.5, %v4330
        %v4332 = vsub.f32 1.5, %v4331
        %v4333 = vmul.f32 %v4328, %v4332
        %vm4334 = vweird.f32 %v4234
        %vm4335 = vweird.f32 %v4328
        %vm4336 = vmor %vm4334, %vm4335
        %v4337 = vsel %vm4336, %v4328, %v4333
        %v4338 = vrsqrt.pop %v4235
        %v4339 = vmul.f32 %v4338, %v4235
        %v4340 = vmul.f32 %v4339, %v4338
        %v4341 = vmul.f32 0.5, %v4340
        %v4342 = vsub.f32 1.5, %v4341
        %v4343 = vmul.f32 %v4338, %v4342
        %vm4344 = vweird.f32 %v4235
        %vm4345 = vweird.f32 %v4338
        %vm4346 = vmor %vm4344, %vm4345
        %v4347 = vsel %vm4346, %v4338, %v4343
        %v4348 = vrsqrt.pop %v4236
        %v4349 = vmul.f32 %v4348, %v4236
        %v4350 = vmul.f32 %v4349, %v4348
        %v4351 = vmul.f32 0.5, %v4350
        %v4352 = vsub.f32 1.5, %v4351
        %v4353 = vmul.f32 %v4348, %v4352
        %vm4354 = vweird.f32 %v4236
        %vm4355 = vweird.f32 %v4348
        %vm4356 = vmor %vm4354, %vm4355
        %v4357 = vsel %vm4356, %v4348, %v4353
        %v4358 = vrsqrt.pop %v4237
        %v4359 = vmul.f32 %v4358, %v4237
        %v4360 = vmul.f32 %v4359, %v4358
        %v4361 = vmul.f32 0.5, %v4360
        %v4362 = vsub.f32 1.5, %v4361
        %v4363 = vmul.f32 %v4358, %v4362
        %vm4364 = vweird.f32 %v4237
        %vm4365 = vweird.f32 %v4358
        %vm4366 = vmor %vm4364, %vm4365
        %v4367 = vsel %vm4366, %v4358, %v4363
        %v4368 = vrsqrt.pop %v4238
        %v4369 = vmul.f32 %v4368, %v4238
        %v4370 = vmul.f32 %v4369, %v4368
        %v4371 = vmul.f32 0.5, %v4370
        %v4372 = vsub.f32 1.5, %v4371
        %v4373 = vmul.f32 %v4368, %v4372
        %vm4374 = vweird.f32 %v4238
        %vm4375 = vweird.f32 %v4368
        %vm4376 = vmor %vm4374, %vm4375
        %v4377 = vsel %vm4376, %v4368, %v4373
        %v4378 = vrsqrt.pop %v4239
        %v4379 = vmul.f32 %v4378, %v4239
        %v4380 = vmul.f32 %v4379, %v4378
        %v4381 = vmul.f32 0.5, %v4380
        %v4382 = vsub.f32 1.5, %v4381
        %v4383 = vmul.f32 %v4378, %v4382
        %vm4384 = vweird.f32 %v4239
        %vm4385 = vweird.f32 %v4378
        %vm4386 = vmor %vm4384, %vm4385
        %v4387 = vsel %vm4386, %v4378, %v4383
        %v4388 = vrsqrt.pop %v4240
        %v4389 = vmul.f32 %v4388, %v4240
        %v4390 = vmul.f32 %v4389, %v4388
        %v4391 = vmul.f32 0.5, %v4390
        %v4392 = vsub.f32 1.5, %v4391
        %v4393 = vmul.f32 %v4388, %v4392
        %vm4394 = vweird.f32 %v4240
        %vm4395 = vweird.f32 %v4388
        %vm4396 = vmor %vm4394, %vm4395
        %v4397 = vsel %vm4396, %v4388, %v4393
        %v4398 = vrsqrt.pop %v4241
        %v4399 = vmul.f32 %v4398, %v4241
        %v4400 = vmul.f32 %v4399, %v4398
        %v4401 = vmul.f32 0.5, %v4400
        %v4402 = vsub.f32 1.5, %v4401
        %v4403 = vmul.f32 %v4398, %v4402
        %vm4404 = vweird.f32 %v4241
        %vm4405 = vweird.f32 %v4398
        %vm4406 = vmor %vm4404, %vm4405
        %v4407 = vsel %vm4406, %v4398, %v4403
        %v4408 = vrsqrt.pop %v4242
        %v4409 = vmul.f32 %v4408, %v4242
        %v4410 = vmul.f32 %v4409, %v4408
        %v4411 = vmul.f32 0.5, %v4410
        %v4412 = vsub.f32 1.5, %v4411
        %v4413 = vmul.f32 %v4408, %v4412
        %vm4414 = vweird.f32 %v4242
        %vm4415 = vweird.f32 %v4408
        %vm4416 = vmor %vm4414, %vm4415
        %v4417 = vsel %vm4416, %v4408, %v4413
        %v4418 = vrsqrt.pop %v4243
        %v4419 = vmul.f32 %v4418, %v4243
        %v4420 = vmul.f32 %v4419, %v4418
        %v4421 = vmul.f32 0.5, %v4420
        %v4422 = vsub.f32 1.5, %v4421
        %v4423 = vmul.f32 %v4418, %v4422
        %vm4424 = vweird.f32 %v4243
        %vm4425 = vweird.f32 %v4418
        %vm4426 = vmor %vm4424, %vm4425
        %v4427 = vsel %vm4426, %v4418, %v4423
        %v4428 = vrsqrt.pop %v4244
        %v4429 = vmul.f32 %v4428, %v4244
        %v4430 = vmul.f32 %v4429, %v4428
        %v4431 = vmul.f32 0.5, %v4430
        %v4432 = vsub.f32 1.5, %v4431
        %v4433 = vmul.f32 %v4428, %v4432
        %vm4434 = vweird.f32 %v4244
        %vm4435 = vweird.f32 %v4428
        %vm4436 = vmor %vm4434, %vm4435
        %v4437 = vsel %vm4436, %v4428, %v4433
        %v4438 = vrsqrt.pop %v4245
        %v4439 = vmul.f32 %v4438, %v4245
        %v4440 = vmul.f32 %v4439, %v4438
        %v4441 = vmul.f32 0.5, %v4440
        %v4442 = vsub.f32 1.5, %v4441
        %v4443 = vmul.f32 %v4438, %v4442
        %vm4444 = vweird.f32 %v4245
        %vm4445 = vweird.f32 %v4438
        %vm4446 = vmor %vm4444, %vm4445
        %v4447 = vsel %vm4446, %v4438, %v4443
        %v4448 = vrsqrt.pop %v4246
        %v4449 = vmul.f32 %v4448, %v4246
        %v4450 = vmul.f32 %v4449, %v4448
        %v4451 = vmul.f32 0.5, %v4450
        %v4452 = vsub.f32 1.5, %v4451
        %v4453 = vmul.f32 %v4448, %v4452
        %vm4454 = vweird.f32 %v4246
        %vm4455 = vweird.f32 %v4448
        %vm4456 = vmor %vm4454, %vm4455
        %v4457 = vsel %vm4456, %v4448, %v4453
        %v4458 = vrsqrt.pop %v4247
        %v4459 = vmul.f32 %v4458, %v4247
        %v4460 = vmul.f32 %v4459, %v4458
        %v4461 = vmul.f32 0.5, %v4460
        %v4462 = vsub.f32 1.5, %v4461
        %v4463 = vmul.f32 %v4458, %v4462
        %vm4464 = vweird.f32 %v4247
        %vm4465 = vweird.f32 %v4458
        %vm4466 = vmor %vm4464, %vm4465
        %v4467 = vsel %vm4466, %v4458, %v4463
        %v4468 = vrsqrt.pop %v4248
        %v4469 = vmul.f32 %v4468, %v4248
        %v4470 = vmul.f32 %v4469, %v4468
        %v4471 = vmul.f32 0.5, %v4470
        %v4472 = vsub.f32 1.5, %v4471
        %v4473 = vmul.f32 %v4468, %v4472
        %vm4474 = vweird.f32 %v4248
        %vm4475 = vweird.f32 %v4468
        %vm4476 = vmor %vm4474, %vm4475
        %v4477 = vsel %vm4476, %v4468, %v4473
        %v4478 = vrsqrt.pop %v4249
        %v4479 = vmul.f32 %v4478, %v4249
        %v4480 = vmul.f32 %v4479, %v4478
        %v4481 = vmul.f32 0.5, %v4480
        %v4482 = vsub.f32 1.5, %v4481
        %v4483 = vmul.f32 %v4478, %v4482
        %vm4484 = vweird.f32 %v4249
        %vm4485 = vweird.f32 %v4478
        %vm4486 = vmor %vm4484, %vm4485
        %v4487 = vsel %vm4486, %v4478, %v4483
        %v4488 = vrsqrt.pop %v4250
        %v4489 = vmul.f32 %v4488, %v4250
        %v4490 = vmul.f32 %v4489, %v4488
        %v4491 = vmul.f32 0.5, %v4490
        %v4492 = vsub.f32 1.5, %v4491
        %v4493 = vmul.f32 %v4488, %v4492
        %vm4494 = vweird.f32 %v4250
        %vm4495 = vweird.f32 %v4488
        %vm4496 = vmor %vm4494, %vm4495
        %v4497 = vsel %vm4496, %v4488, %v4493
        %v4498 = vrsqrt.pop %v4251
        %v4499 = vmul.f32 %v4498, %v4251
        %v4500 = vmul.f32 %v4499, %v4498
        %v4501 = vmul.f32 0.5, %v4500
        %v4502 = vsub.f32 1.5, %v4501
        %v4503 = vmul.f32 %v4498, %v4502
        %vm4504 = vweird.f32 %v4251
        %vm4505 = vweird.f32 %v4498
        %vm4506 = vmor %vm4504, %vm4505
        %v4507 = vsel %vm4506, %v4498, %v4503
        %v4508 = vrsqrt.pop %v4252
        %v4509 = vmul.f32 %v4508, %v4252
        %v4510 = vmul.f32 %v4509, %v4508
        %v4511 = vmul.f32 0.5, %v4510
        %v4512 = vsub.f32 1.5, %v4511
        %v4513 = vmul.f32 %v4508, %v4512
        %vm4514 = vweird.f32 %v4252
        %vm4515 = vweird.f32 %v4508
        %vm4516 = vmor %vm4514, %vm4515
        %v4517 = vsel %vm4516, %v4508, %v4513
        %v4518 = vrsqrt.pop %v4253
        %v4519 = vmul.f32 %v4518, %v4253
        %v4520 = vmul.f32 %v4519, %v4518
        %v4521 = vmul.f32 0.5, %v4520
        %v4522 = vsub.f32 1.5, %v4521
        %v4523 = vmul.f32 %v4518, %v4522
        %vm4524 = vweird.f32 %v4253
        %vm4525 = vweird.f32 %v4518
        %vm4526 = vmor %vm4524, %vm4525
        %v4527 = vsel %vm4526, %v4518, %v4523
        %v4528 = vrsqrt.pop %v4254
        %v4529 = vmul.f32 %v4528, %v4254
        %v4530 = vmul.f32 %v4529, %v4528
        %v4531 = vmul.f32 0.5, %v4530
        %v4532 = vsub.f32 1.5, %v4531
        %v4533 = vmul.f32 %v4528, %v4532
        %vm4534 = vweird.f32 %v4254
        %vm4535 = vweird.f32 %v4528
        %vm4536 = vmor %vm4534, %vm4535
        %v4537 = vsel %vm4536, %v4528, %v4533
        %v4538 = vrsqrt.pop %v4255
        %v4539 = vmul.f32 %v4538, %v4255
        %v4540 = vmul.f32 %v4539, %v4538
        %v4541 = vmul.f32 0.5, %v4540
        %v4542 = vsub.f32 1.5, %v4541
        %v4543 = vmul.f32 %v4538, %v4542
        %vm4544 = vweird.f32 %v4255
        %vm4545 = vweird.f32 %v4538
        %vm4546 = vmor %vm4544, %vm4545
        %v4547 = vsel %vm4546, %v4538, %v4543
        %v4548 = vrsqrt.pop %v4256
        %v4549 = vmul.f32 %v4548, %v4256
        %v4550 = vmul.f32 %v4549, %v4548
        %v4551 = vmul.f32 0.5, %v4550
        %v4552 = vsub.f32 1.5, %v4551
        %v4553 = vmul.f32 %v4548, %v4552
        %vm4554 = vweird.f32 %v4256
        %vm4555 = vweird.f32 %v4548
        %vm4556 = vmor %vm4554, %vm4555
        %v4557 = vsel %vm4556, %v4548, %v4553
        %v4558 = vrsqrt.pop %v4257
        %v4559 = vmul.f32 %v4558, %v4257
        %v4560 = vmul.f32 %v4559, %v4558
        %v4561 = vmul.f32 0.5, %v4560
        %v4562 = vsub.f32 1.5, %v4561
        %v4563 = vmul.f32 %v4558, %v4562
        %vm4564 = vweird.f32 %v4257
        %vm4565 = vweird.f32 %v4558
        %vm4566 = vmor %vm4564, %vm4565
        %v4567 = vsel %vm4566, %v4558, %v4563
        %v4568 = vrsqrt.pop %v4258
        %v4569 = vmul.f32 %v4568, %v4258
        %v4570 = vmul.f32 %v4569, %v4568
        %v4571 = vmul.f32 0.5, %v4570
        %v4572 = vsub.f32 1.5, %v4571
        %v4573 = vmul.f32 %v4568, %v4572
        %vm4574 = vweird.f32 %v4258
        %vm4575 = vweird.f32 %v4568
        %vm4576 = vmor %vm4574, %vm4575
        %v4577 = vsel %vm4576, %v4568, %v4573
        %v4578 = vrsqrt.pop %v4259
        %v4579 = vmul.f32 %v4578, %v4259
        %v4580 = vmul.f32 %v4579, %v4578
        %v4581 = vmul.f32 0.5, %v4580
        %v4582 = vsub.f32 1.5, %v4581
        %v4583 = vmul.f32 %v4578, %v4582
        %vm4584 = vweird.f32 %v4259
        %vm4585 = vweird.f32 %v4578
        %vm4586 = vmor %vm4584, %vm4585
        %v4587 = vsel %vm4586, %v4578, %v4583
        %v4588 = vrsqrt.pop %v4260
        %v4589 = vmul.f32 %v4588, %v4260
        %v4590 = vmul.f32 %v4589, %v4588
        %v4591 = vmul.f32 0.5, %v4590
        %v4592 = vsub.f32 1.5, %v4591
        %v4593 = vmul.f32 %v4588, %v4592
        %vm4594 = vweird.f32 %v4260
        %vm4595 = vweird.f32 %v4588
        %vm4596 = vmor %vm4594, %vm4595
        %v4597 = vsel %vm4596, %v4588, %v4593
        %v4598 = vrsqrt.pop %v4261
        %v4599 = vmul.f32 %v4598, %v4261
        %v4600 = vmul.f32 %v4599, %v4598
        %v4601 = vmul.f32 0.5, %v4600
        %v4602 = vsub.f32 1.5, %v4601
        %v4603 = vmul.f32 %v4598, %v4602
        %vm4604 = vweird.f32 %v4261
        %vm4605 = vweird.f32 %v4598
        %vm4606 = vmor %vm4604, %vm4605
        %v4607 = vsel %vm4606, %v4598, %v4603
        %v4608 = vrsqrt.pop %v4262
        %v4609 = vmul.f32 %v4608, %v4262
        %v4610 = vmul.f32 %v4609, %v4608
        %v4611 = vmul.f32 0.5, %v4610
        %v4612 = vsub.f32 1.5, %v4611
        %v4613 = vmul.f32 %v4608, %v4612
        %vm4614 = vweird.f32 %v4262
        %vm4615 = vweird.f32 %v4608
        %vm4616 = vmor %vm4614, %vm4615
        %v4617 = vsel %vm4616, %v4608, %v4613
        %v4618 = vrsqrt.pop %v4263
        %v4619 = vmul.f32 %v4618, %v4263
        %v4620 = vmul.f32 %v4619, %v4618
        %v4621 = vmul.f32 0.5, %v4620
        %v4622 = vsub.f32 1.5, %v4621
        %v4623 = vmul.f32 %v4618, %v4622
        %vm4624 = vweird.f32 %v4263
        %vm4625 = vweird.f32 %v4618
        %vm4626 = vmor %vm4624, %vm4625
        %v4627 = vsel %vm4626, %v4618, %v4623
        %v4628 = vrsqrt.pop %v4264
        %v4629 = vmul.f32 %v4628, %v4264
        %v4630 = vmul.f32 %v4629, %v4628
        %v4631 = vmul.f32 0.5, %v4630
        %v4632 = vsub.f32 1.5, %v4631
        %v4633 = vmul.f32 %v4628, %v4632
        %vm4634 = vweird.f32 %v4264
        %vm4635 = vweird.f32 %v4628
        %vm4636 = vmor %vm4634, %vm4635
        %v4637 = vsel %vm4636, %v4628, %v4633
        %v4638 = vrsqrt.pop %v4265
        %v4639 = vmul.f32 %v4638, %v4265
        %v4640 = vmul.f32 %v4639, %v4638
        %v4641 = vmul.f32 0.5, %v4640
        %v4642 = vsub.f32 1.5, %v4641
        %v4643 = vmul.f32 %v4638, %v4642
        %vm4644 = vweird.f32 %v4265
        %vm4645 = vweird.f32 %v4638
        %vm4646 = vmor %vm4644, %vm4645
        %v4647 = vsel %vm4646, %v4638, %v4643
        %v4648 = vrsqrt.pop %v4266
        %v4649 = vmul.f32 %v4648, %v4266
        %v4650 = vmul.f32 %v4649, %v4648
        %v4651 = vmul.f32 0.5, %v4650
        %v4652 = vsub.f32 1.5, %v4651
        %v4653 = vmul.f32 %v4648, %v4652
        %vm4654 = vweird.f32 %v4266
        %vm4655 = vweird.f32 %v4648
        %vm4656 = vmor %vm4654, %vm4655
        %v4657 = vsel %vm4656, %v4648, %v4653
        %v4658 = vrsqrt.pop %v4267
        %v4659 = vmul.f32 %v4658, %v4267
        %v4660 = vmul.f32 %v4659, %v4658
        %v4661 = vmul.f32 0.5, %v4660
        %v4662 = vsub.f32 1.5, %v4661
        %v4663 = vmul.f32 %v4658, %v4662
        %vm4664 = vweird.f32 %v4267
        %vm4665 = vweird.f32 %v4658
        %vm4666 = vmor %vm4664, %vm4665
        %v4667 = vsel %vm4666, %v4658, %v4663
        %v4668 = vmul.f32 %v3901, %v4277
        %v4669 = vmul.f32 %v3902, %v4277
        %v4670 = vmul.f32 %v3903, %v4287
        %v4671 = vmul.f32 %v3904, %v4287
        %v4672 = vmul.f32 %v3905, %v4297
        %v4673 = vmul.f32 %v3906, %v4297
        %v4674 = vmul.f32 %v3907, %v4307
        %v4675 = vmul.f32 %v3908, %v4307
        %v4676 = vmul.f32 %v3909, %v4317
        %v4677 = vmul.f32 %v3910, %v4317
        %v4678 = vmul.f32 %v3911, %v4327
        %v4679 = vmul.f32 %v3912, %v4327
        %v4680 = vmul.f32 %v3913, %v4337
        %v4681 = vmul.f32 %v3914, %v4337
        %v4682 = vmul.f32 %v3915, %v4347
        %v4683 = vmul.f32 %v3916, %v4347
        %v4684 = vmul.f32 %v3917, %v4357
        %v4685 = vmul.f32 %v3918, %v4357
        %v4686 = vmul.f32 %v3919, %v4367
        %v4687 = vmul.f32 %v3920, %v4367
        %v4688 = vmul.f32 %v3921, %v4377
        %v4689 = vmul.f32 %v3922, %v4377
        %v4690 = vmul.f32 %v3923, %v4387
        %v4691 = vmul.f32 %v3924, %v4387
        %v4692 = vmul.f32 %v3925, %v4397
        %v4693 = vmul.f32 %v3926, %v4397
        %v4694 = vmul.f32 %v3927, %v4407
        %v4695 = vmul.f32 %v3928, %v4407
        %v4696 = vmul.f32 %v3929, %v4417
        %v4697 = vmul.f32 %v3930, %v4417
        %v4698 = vmul.f32 %v3931, %v4427
        %v4699 = vmul.f32 %v3932, %v4427
        %v4700 = vmul.f32 %v3933, %v4437
        %v4701 = vmul.f32 %v3934, %v4437
        %v4702 = vmul.f32 %v3935, %v4447
        %v4703 = vmul.f32 %v3936, %v4447
        %v4704 = vmul.f32 %v3937, %v4457
        %v4705 = vmul.f32 %v3938, %v4457
        %v4706 = vmul.f32 %v3939, %v4467
        %v4707 = vmul.f32 %v3940, %v4467
        %v4708 = vmul.f32 %v3941, %v4477
        %v4709 = vmul.f32 %v3942, %v4477
        %v4710 = vmul.f32 %v3943, %v4487
        %v4711 = vmul.f32 %v3944, %v4487
        %v4712 = vmul.f32 %v3945, %v4497
        %v4713 = vmul.f32 %v3946, %v4497
        %v4714 = vmul.f32 %v3947, %v4507
        %v4715 = vmul.f32 %v3948, %v4507
        %v4716 = vmul.f32 %v3949, %v4517
        %v4717 = vmul.f32 %v3950, %v4517
        %v4718 = vmul.f32 %v3951, %v4527
        %v4719 = vmul.f32 %v3952, %v4527
        %v4720 = vmul.f32 %v3953, %v4537
        %v4721 = vmul.f32 %v3954, %v4537
        %v4722 = vmul.f32 %v3955, %v4547
        %v4723 = vmul.f32 %v3956, %v4547
        %v4724 = vmul.f32 %v3957, %v4557
        %v4725 = vmul.f32 %v3958, %v4557
        %v4726 = vmul.f32 %v3959, %v4567
        %v4727 = vmul.f32 %v3960, %v4567
        %v4728 = vmul.f32 %v3961, %v4577
        %v4729 = vmul.f32 %v3962, %v4577
        %v4730 = vmul.f32 %v3963, %v4587
        %v4731 = vmul.f32 %v3964, %v4587
        %v4732 = vmul.f32 %v3965, %v4597
        %v4733 = vmul.f32 %v3966, %v4597
        %v4734 = vmul.f32 %v3967, %v4607
        %v4735 = vmul.f32 %v3968, %v4607
        %v4736 = vmul.f32 %v3969, %v4617
        %v4737 = vmul.f32 %v3970, %v4617
        %v4738 = vmul.f32 %v3971, %v4627
        %v4739 = vmul.f32 %v3972, %v4627
        %v4740 = vmul.f32 %v3973, %v4637
        %v4741 = vmul.f32 %v3974, %v4637
        %v4742 = vmul.f32 %v3975, %v4647
        %v4743 = vmul.f32 %v3976, %v4647
        %v4744 = vmul.f32 %v3977, %v4657
        %v4745 = vmul.f32 %v3978, %v4657
        %v4746 = vmul.f32 %v3979, %v4667
        %v4747 = vmul.f32 %v3980, %v4667
        %v4748 = vld [vmem:[%s5] sm:$0x3]
        %v4750 = vperm.slane %v4748, 0
        %v4751 = vperm.slane %v4748, 1
        %v4754 = vmul.f32 %v4668, %v4750
        %v4755 = vmul.f32 %v4669, %v4751
        %v4756 = vmul.f32 %v4670, %v4750
        %v4757 = vmul.f32 %v4671, %v4751
        %v4758 = vmul.f32 %v4672, %v4750
        %v4759 = vmul.f32 %v4673, %v4751
        %v4760 = vmul.f32 %v4674, %v4750
        %v4761 = vmul.f32 %v4675, %v4751
        %v4762 = vmul.f32 %v4676, %v4750
        %v4763 = vmul.f32 %v4677, %v4751
        %v4764 = vmul.f32 %v4678, %v4750
        %v4765 = vmul.f32 %v4679, %v4751
        %v4766 = vmul.f32 %v4680, %v4750
        %v4767 = vmul.f32 %v4681, %v4751
        %v4768 = vmul.f32 %v4682, %v4750
        %v4769 = vmul.f32 %v4683, %v4751
        %v4770 = vmul.f32 %v4684, %v4750
        %v4771 = vmul.f32 %v4685, %v4751
        %v4772 = vmul.f32 %v4686, %v4750
        %v4773 = vmul.f32 %v4687, %v4751
        %v4774 = vmul.f32 %v4688, %v4750
        %v4775 = vmul.f32 %v4689, %v4751
        %v4776 = vmul.f32 %v4690, %v4750
        %v4777 = vmul.f32 %v4691, %v4751
        %v4778 = vmul.f32 %v4692, %v4750
        %v4779 = vmul.f32 %v4693, %v4751
        %v4780 = vmul.f32 %v4694, %v4750
        %v4781 = vmul.f32 %v4695, %v4751
        %v4782 = vmul.f32 %v4696, %v4750
        %v4783 = vmul.f32 %v4697, %v4751
        %v4784 = vmul.f32 %v4698, %v4750
        %v4785 = vmul.f32 %v4699, %v4751
        %v4786 = vmul.f32 %v4700, %v4750
        %v4787 = vmul.f32 %v4701, %v4751
        %v4788 = vmul.f32 %v4702, %v4750
        %v4789 = vmul.f32 %v4703, %v4751
        %v4790 = vmul.f32 %v4704, %v4750
        %v4791 = vmul.f32 %v4705, %v4751
        %v4792 = vmul.f32 %v4706, %v4750
        %v4793 = vmul.f32 %v4707, %v4751
        %v4794 = vmul.f32 %v4708, %v4750
        %v4795 = vmul.f32 %v4709, %v4751
        %v4796 = vmul.f32 %v4710, %v4750
        %v4797 = vmul.f32 %v4711, %v4751
        %v4798 = vmul.f32 %v4712, %v4750
        %v4799 = vmul.f32 %v4713, %v4751
        %v4800 = vmul.f32 %v4714, %v4750
        %v4801 = vmul.f32 %v4715, %v4751
        %v4802 = vmul.f32 %v4716, %v4750
        %v4803 = vmul.f32 %v4717, %v4751
        %v4804 = vmul.f32 %v4718, %v4750
        %v4805 = vmul.f32 %v4719, %v4751
        %v4806 = vmul.f32 %v4720, %v4750
        %v4807 = vmul.f32 %v4721, %v4751
        %v4808 = vmul.f32 %v4722, %v4750
        %v4809 = vmul.f32 %v4723, %v4751
        %v4810 = vmul.f32 %v4724, %v4750
        %v4811 = vmul.f32 %v4725, %v4751
        %v4812 = vmul.f32 %v4726, %v4750
        %v4813 = vmul.f32 %v4727, %v4751
        %v4814 = vmul.f32 %v4728, %v4750
        %v4815 = vmul.f32 %v4729, %v4751
        %v4816 = vmul.f32 %v4730, %v4750
        %v4817 = vmul.f32 %v4731, %v4751
        %v4818 = vmul.f32 %v4732, %v4750
        %v4819 = vmul.f32 %v4733, %v4751
        %v4820 = vmul.f32 %v4734, %v4750
        %v4821 = vmul.f32 %v4735, %v4751
        %v4822 = vmul.f32 %v4736, %v4750
        %v4823 = vmul.f32 %v4737, %v4751
        %v4824 = vmul.f32 %v4738, %v4750
        %v4825 = vmul.f32 %v4739, %v4751
        %v4826 = vmul.f32 %v4740, %v4750
        %v4827 = vmul.f32 %v4741, %v4751
        %v4828 = vmul.f32 %v4742, %v4750
        %v4829 = vmul.f32 %v4743, %v4751
        %v4830 = vmul.f32 %v4744, %v4750
        %v4831 = vmul.f32 %v4745, %v4751
        %v4832 = vmul.f32 %v4746, %v4750
        %v4833 = vmul.f32 %v4747, %v4751
        %v4834 = vld [vmem:[%s6] sm:$0x3]
        %v4836 = vperm.slane %v4834, 0
        %v4837 = vperm.slane %v4834, 1
        %v4840 = vadd.f32 %v4754, %v4836
        %v4841 = vadd.f32 %v4755, %v4837
        %v4842 = vadd.f32 %v4756, %v4836
        %v4843 = vadd.f32 %v4757, %v4837
        %v4844 = vadd.f32 %v4758, %v4836
        %v4845 = vadd.f32 %v4759, %v4837
        %v4846 = vadd.f32 %v4760, %v4836
        %v4847 = vadd.f32 %v4761, %v4837
        %v4848 = vadd.f32 %v4762, %v4836
        %v4849 = vadd.f32 %v4763, %v4837
        %v4850 = vadd.f32 %v4764, %v4836
        %v4851 = vadd.f32 %v4765, %v4837
        %v4852 = vadd.f32 %v4766, %v4836
        %v4853 = vadd.f32 %v4767, %v4837
        %v4854 = vadd.f32 %v4768, %v4836
        %v4855 = vadd.f32 %v4769, %v4837
        %v4856 = vadd.f32 %v4770, %v4836
        %v4857 = vadd.f32 %v4771, %v4837
        %v4858 = vadd.f32 %v4772, %v4836
        %v4859 = vadd.f32 %v4773, %v4837
        %v4860 = vadd.f32 %v4774, %v4836
        %v4861 = vadd.f32 %v4775, %v4837
        %v4862 = vadd.f32 %v4776, %v4836
        %v4863 = vadd.f32 %v4777, %v4837
        %v4864 = vadd.f32 %v4778, %v4836
        %v4865 = vadd.f32 %v4779, %v4837
        %v4866 = vadd.f32 %v4780, %v4836
        %v4867 = vadd.f32 %v4781, %v4837
        %v4868 = vadd.f32 %v4782, %v4836
        %v4869 = vadd.f32 %v4783, %v4837
        %v4870 = vadd.f32 %v4784, %v4836
        %v4871 = vadd.f32 %v4785, %v4837
        %v4872 = vadd.f32 %v4786, %v4836
        %v4873 = vadd.f32 %v4787, %v4837
        %v4874 = vadd.f32 %v4788, %v4836
        %v4875 = vadd.f32 %v4789, %v4837
        %v4876 = vadd.f32 %v4790, %v4836
        %v4877 = vadd.f32 %v4791, %v4837
        %v4878 = vadd.f32 %v4792, %v4836
        %v4879 = vadd.f32 %v4793, %v4837
        %v4880 = vadd.f32 %v4794, %v4836
        %v4881 = vadd.f32 %v4795, %v4837
        %v4882 = vadd.f32 %v4796, %v4836
        %v4883 = vadd.f32 %v4797, %v4837
        %v4884 = vadd.f32 %v4798, %v4836
        %v4885 = vadd.f32 %v4799, %v4837
        %v4886 = vadd.f32 %v4800, %v4836
        %v4887 = vadd.f32 %v4801, %v4837
        %v4888 = vadd.f32 %v4802, %v4836
        %v4889 = vadd.f32 %v4803, %v4837
        %v4890 = vadd.f32 %v4804, %v4836
        %v4891 = vadd.f32 %v4805, %v4837
        %v4892 = vadd.f32 %v4806, %v4836
        %v4893 = vadd.f32 %v4807, %v4837
        %v4894 = vadd.f32 %v4808, %v4836
        %v4895 = vadd.f32 %v4809, %v4837
        %v4896 = vadd.f32 %v4810, %v4836
        %v4897 = vadd.f32 %v4811, %v4837
        %v4898 = vadd.f32 %v4812, %v4836
        %v4899 = vadd.f32 %v4813, %v4837
        %v4900 = vadd.f32 %v4814, %v4836
        %v4901 = vadd.f32 %v4815, %v4837
        %v4902 = vadd.f32 %v4816, %v4836
        %v4903 = vadd.f32 %v4817, %v4837
        %v4904 = vadd.f32 %v4818, %v4836
        %v4905 = vadd.f32 %v4819, %v4837
        %v4906 = vadd.f32 %v4820, %v4836
        %v4907 = vadd.f32 %v4821, %v4837
        %v4908 = vadd.f32 %v4822, %v4836
        %v4909 = vadd.f32 %v4823, %v4837
        %v4910 = vadd.f32 %v4824, %v4836
        %v4911 = vadd.f32 %v4825, %v4837
        %v4912 = vadd.f32 %v4826, %v4836
        %v4913 = vadd.f32 %v4827, %v4837
        %v4914 = vadd.f32 %v4828, %v4836
        %v4915 = vadd.f32 %v4829, %v4837
        %v4916 = vadd.f32 %v4830, %v4836
        %v4917 = vadd.f32 %v4831, %v4837
        %v4918 = vadd.f32 %v4832, %v4836
        %v4919 = vadd.f32 %v4833, %v4837
        %v4920 = vmax.f32 %v4840, 0.0
        %v4921 = vmax.f32 %v4841, 0.0
        %v4922 = vmax.f32 %v4842, 0.0
        %v4923 = vmax.f32 %v4843, 0.0
        %v4924 = vmax.f32 %v4844, 0.0
        %v4925 = vmax.f32 %v4845, 0.0
        %v4926 = vmax.f32 %v4846, 0.0
        %v4927 = vmax.f32 %v4847, 0.0
        %v4928 = vmax.f32 %v4848, 0.0
        %v4929 = vmax.f32 %v4849, 0.0
        %v4930 = vmax.f32 %v4850, 0.0
        %v4931 = vmax.f32 %v4851, 0.0
        %v4932 = vmax.f32 %v4852, 0.0
        %v4933 = vmax.f32 %v4853, 0.0
        %v4934 = vmax.f32 %v4854, 0.0
        %v4935 = vmax.f32 %v4855, 0.0
        %v4936 = vmax.f32 %v4856, 0.0
        %v4937 = vmax.f32 %v4857, 0.0
        %v4938 = vmax.f32 %v4858, 0.0
        %v4939 = vmax.f32 %v4859, 0.0
        %v4940 = vmax.f32 %v4860, 0.0
        %v4941 = vmax.f32 %v4861, 0.0
        %v4942 = vmax.f32 %v4862, 0.0
        %v4943 = vmax.f32 %v4863, 0.0
        %v4944 = vmax.f32 %v4864, 0.0
        %v4945 = vmax.f32 %v4865, 0.0
        %v4946 = vmax.f32 %v4866, 0.0
        %v4947 = vmax.f32 %v4867, 0.0
        %v4948 = vmax.f32 %v4868, 0.0
        %v4949 = vmax.f32 %v4869, 0.0
        %v4950 = vmax.f32 %v4870, 0.0
        %v4951 = vmax.f32 %v4871, 0.0
        %v4952 = vmax.f32 %v4872, 0.0
        %v4953 = vmax.f32 %v4873, 0.0
        %v4954 = vmax.f32 %v4874, 0.0
        %v4955 = vmax.f32 %v4875, 0.0
        %v4956 = vmax.f32 %v4876, 0.0
        %v4957 = vmax.f32 %v4877, 0.0
        %v4958 = vmax.f32 %v4878, 0.0
        %v4959 = vmax.f32 %v4879, 0.0
        %v4960 = vmax.f32 %v4880, 0.0
        %v4961 = vmax.f32 %v4881, 0.0
        %v4962 = vmax.f32 %v4882, 0.0
        %v4963 = vmax.f32 %v4883, 0.0
        %v4964 = vmax.f32 %v4884, 0.0
        %v4965 = vmax.f32 %v4885, 0.0
        %v4966 = vmax.f32 %v4886, 0.0
        %v4967 = vmax.f32 %v4887, 0.0
        %v4968 = vmax.f32 %v4888, 0.0
        %v4969 = vmax.f32 %v4889, 0.0
        %v4970 = vmax.f32 %v4890, 0.0
        %v4971 = vmax.f32 %v4891, 0.0
        %v4972 = vmax.f32 %v4892, 0.0
        %v4973 = vmax.f32 %v4893, 0.0
        %v4974 = vmax.f32 %v4894, 0.0
        %v4975 = vmax.f32 %v4895, 0.0
        %v4976 = vmax.f32 %v4896, 0.0
        %v4977 = vmax.f32 %v4897, 0.0
        %v4978 = vmax.f32 %v4898, 0.0
        %v4979 = vmax.f32 %v4899, 0.0
        %v4980 = vmax.f32 %v4900, 0.0
        %v4981 = vmax.f32 %v4901, 0.0
        %v4982 = vmax.f32 %v4902, 0.0
        %v4983 = vmax.f32 %v4903, 0.0
        %v4984 = vmax.f32 %v4904, 0.0
        %v4985 = vmax.f32 %v4905, 0.0
        %v4986 = vmax.f32 %v4906, 0.0
        %v4987 = vmax.f32 %v4907, 0.0
        %v4988 = vmax.f32 %v4908, 0.0
        %v4989 = vmax.f32 %v4909, 0.0
        %v4990 = vmax.f32 %v4910, 0.0
        %v4991 = vmax.f32 %v4911, 0.0
        %v4992 = vmax.f32 %v4912, 0.0
        %v4993 = vmax.f32 %v4913, 0.0
        %v4994 = vmax.f32 %v4914, 0.0
        %v4995 = vmax.f32 %v4915, 0.0
        %v4996 = vmax.f32 %v4916, 0.0
        %v4997 = vmax.f32 %v4917, 0.0
        %v4998 = vmax.f32 %v4918, 0.0
        %v4999 = vmax.f32 %v4919, 0.0
        %v5000 = vpack.c.bf16 %v4921, %v4920
        %v5001 = vpack.c.bf16 %v4923, %v4922
        %v5002 = vpack.c.bf16 %v4925, %v4924
        %v5003 = vpack.c.bf16 %v4927, %v4926
        %v5004 = vpack.c.bf16 %v4929, %v4928
        %v5005 = vpack.c.bf16 %v4931, %v4930
        %v5006 = vpack.c.bf16 %v4933, %v4932
        %v5007 = vpack.c.bf16 %v4935, %v4934
        %v5008 = vpack.c.bf16 %v4937, %v4936
        %v5009 = vpack.c.bf16 %v4939, %v4938
        %v5010 = vpack.c.bf16 %v4941, %v4940
        %v5011 = vpack.c.bf16 %v4943, %v4942
        %v5012 = vpack.c.bf16 %v4945, %v4944
        %v5013 = vpack.c.bf16 %v4947, %v4946
        %v5014 = vpack.c.bf16 %v4949, %v4948
        %v5015 = vpack.c.bf16 %v4951, %v4950
        %v5016 = vpack.c.bf16 %v4953, %v4952
        %v5017 = vpack.c.bf16 %v4955, %v4954
        %v5018 = vpack.c.bf16 %v4957, %v4956
        %v5019 = vpack.c.bf16 %v4959, %v4958
        %v5020 = vpack.c.bf16 %v4961, %v4960
        %v5021 = vpack.c.bf16 %v4963, %v4962
        %v5022 = vpack.c.bf16 %v4965, %v4964
        %v5023 = vpack.c.bf16 %v4967, %v4966
        %v5024 = vpack.c.bf16 %v4969, %v4968
        %v5025 = vpack.c.bf16 %v4971, %v4970
        %v5026 = vpack.c.bf16 %v4973, %v4972
        %v5027 = vpack.c.bf16 %v4975, %v4974
        %v5028 = vpack.c.bf16 %v4977, %v4976
        %v5029 = vpack.c.bf16 %v4979, %v4978
        %v5030 = vpack.c.bf16 %v4981, %v4980
        %v5031 = vpack.c.bf16 %v4983, %v4982
        %v5032 = vpack.c.bf16 %v4985, %v4984
        %v5033 = vpack.c.bf16 %v4987, %v4986
        %v5034 = vpack.c.bf16 %v4989, %v4988
        %v5035 = vpack.c.bf16 %v4991, %v4990
        %v5036 = vpack.c.bf16 %v4993, %v4992
        %v5037 = vpack.c.bf16 %v4995, %v4994
        %v5038 = vpack.c.bf16 %v4997, %v4996
        %v5039 = vpack.c.bf16 %v4999, %v4998
        %5040 = vst [vmem:[%s322] sm:$0xff] %v5000
        %5041 = vst [vmem:[%s322 + $0x8] sm:$0xff] %v5001
        %5042 = vst [vmem:[%s322 + $0x10] sm:$0xff] %v5002
        %5043 = vst [vmem:[%s322 + $0x18] sm:$0xff] %v5003
        %5044 = vst [vmem:[%s322 + $0x20] sm:$0xff] %v5004
        %5045 = vst [vmem:[%s322 + $0x28] sm:$0xff] %v5005
        %5046 = vst [vmem:[%s322 + $0x30] sm:$0xff] %v5006
        %5047 = vst [vmem:[%s322 + $0x38] sm:$0xff] %v5007
        %5048 = vst [vmem:[%s322 + $0x40] sm:$0xff] %v5008
        %5049 = vst [vmem:[%s322 + $0x48] sm:$0xff] %v5009
        %5050 = vst [vmem:[%s322 + $0x50] sm:$0xff] %v5010
        %5051 = vst [vmem:[%s322 + $0x58] sm:$0xff] %v5011
        %5052 = vst [vmem:[%s322 + $0x60] sm:$0xff] %v5012
        %5053 = vst [vmem:[%s322 + $0x68] sm:$0xff] %v5013
        %5054 = vst [vmem:[%s322 + $0x70] sm:$0xff] %v5014
        %5055 = vst [vmem:[%s322 + $0x78] sm:$0xff] %v5015
        %5056 = vst [vmem:[%s322 + $0x80] sm:$0xff] %v5016
        %5057 = vst [vmem:[%s322 + $0x88] sm:$0xff] %v5017
        %5058 = vst [vmem:[%s322 + $0x90] sm:$0xff] %v5018
        %5059 = vst [vmem:[%s322 + $0x98] sm:$0xff] %v5019
        %5060 = vst [vmem:[%s322 + $0xa0] sm:$0xff] %v5020
        %5061 = vst [vmem:[%s322 + $0xa8] sm:$0xff] %v5021
        %5062 = vst [vmem:[%s322 + $0xb0] sm:$0xff] %v5022
        %5063 = vst [vmem:[%s322 + $0xb8] sm:$0xff] %v5023
        %5064 = vst [vmem:[%s322 + $0xc0] sm:$0xff] %v5024
        %5065 = vst [vmem:[%s322 + $0xc8] sm:$0xff] %v5025
        %5066 = vst [vmem:[%s322 + $0xd0] sm:$0xff] %v5026
        %5067 = vst [vmem:[%s322 + $0xd8] sm:$0xff] %v5027
        %5068 = vst [vmem:[%s322 + $0xe0] sm:$0xff] %v5028
        %5069 = vst [vmem:[%s322 + $0xe8] sm:$0xff] %v5029
        %5070 = vst [vmem:[%s322 + $0xf0] sm:$0xff] %v5030
        %5071 = vst [vmem:[%s322 + $0xf8] sm:$0xff] %v5031
        %5072 = vst [vmem:[%s322 + $0x100] sm:$0xff] %v5032
        %5073 = vst [vmem:[%s322 + $0x108] sm:$0xff] %v5033
        %5074 = vst [vmem:[%s322 + $0x110] sm:$0xff] %v5034
        %5075 = vst [vmem:[%s322 + $0x118] sm:$0xff] %v5035
        %5076 = vst [vmem:[%s322 + $0x120] sm:$0xff] %v5036
        %5077 = vst [vmem:[%s322 + $0x128] sm:$0xff] %v5037
        %5078 = vst [vmem:[%s322 + $0x130] sm:$0xff] %v5038
        %5079 = vst [vmem:[%s322 + $0x138] sm:$0xff] %v5039
        %s5080 = sand.u32 %s204, 1
        %s5081 = scalar_lea.sflag [#allocation3], %s5080
        %s5082 = sand.u32 %s204, 1
        %s5083 = smul.addr %s5082, 320
        %s5084 = scalar_lea.vmem [#allocation2], %s5083
        // Predicated region
        $region49: #{tpu_custom_call.1} parent=47 // pred_check
          %p5085 = pneg %p214
        $region50: #{tpu_custom_call.1} parent=47 // pred_check_branch
          %5087 = sbr.rel (%p5085) target = $region52
        $region51: #{tpu_custom_call.1} parent=47 // pred_region
          %s5088 = smul.u32 40, %s26
          %5090 = vsyncadd %s5081, 0
          %s5091 = smul.addr %s5088, 2
          %s5092 = smul.addr %s25, 160
          %s5093 = sadd.s32 %s5091, %s5092
          %s5094 = smul.addr %s5093, 4
          %s5095 = scalar_lea.hbm %s7, %s5094
          %s5096 = sshll.u32 %s5084, 4
          %s5097 = int_to_ptr.vmem [resolvable:$true] %s5096
          %s5098 = sshll.u32 %s5095, 4
          %s5099 = int_to_ptr.hbm [resolvable:$true] %s5098
          %5104 = dma.vmem_to_hbm [thread:$0]  %s5097, 5120, %s5099, %s5081, 128, 128, 8
        $region52: #{tpu_custom_call.1} parent=47 // pred_fallthru
          _
      $region48: #{tpu_custom_call.1} parent=5 // pred_fallthru
        _
      %p5105 = scmp.le.s32.totalorder 2, %s16
      // Predicated region
      $region53: #{tpu_custom_call.1} parent=5 // pred_check
        %p5106 = pneg %p5105
      $region54: #{tpu_custom_call.1} parent=5 // pred_check_branch
        %5108 = sbr.rel (%p5106) target = $region56
      $region55: #{tpu_custom_call.1} parent=5 // pred_region
        %s5109 = ssub.s32 %s16, 2
        // Predicated region
        $region57: #{tpu_custom_call.1} parent=55 // pred_check
          %p5110 = pneg %p220
        $region58: #{tpu_custom_call.1} parent=55 // pred_check_branch
          %5112 = sbr.rel (%p5110) target = $region60
        $region59: #{tpu_custom_call.1} parent=55 // pred_region
          %s5113 = sand.u32 %s205, 1
          %s5114 = scalar_lea.sflag [#allocation3], %s5113
          %s5115 = sand.u32 %s205, 1
          %s5116 = smul.addr %s5115, 320
          %s5117 = scalar_lea.vmem [#allocation2], %s5116
          %5119 = dma.done %s5114, 5120
        $region60: #{tpu_custom_call.1} parent=55 // pred_fallthru
          _
      $region56: #{tpu_custom_call.1} parent=5 // pred_fallthru
        _
    $region6: #{tpu_custom_call.1} parent=1 // loop_footer
      %s20 = sadd.s32 1, %s16
    $region7: #{tpu_custom_call.1} parent=1 // loop_footer_branch
      %15 = sbr.rel target = $region3
    $region8: #{tpu_custom_call.1} parent=1 // loop_exit
      _
    %5120 = vsyncpa [#allocation3], 1
    %s5121 = scalar_lea.sflag [#allocation3], 1
    %5122 = vsyncpa %s5121, 1

</llo_original>
